<compile_context>
chip_gen: v6e
topology: v6e:2x2x1
jax: 0.10.0
libtpu: 0.0.40
codegen_flags: <defaults>
</compile_context>

<pallas_src>
import math

import numpy as np
import jax
import jax.numpy as jnp
from jax import lax
from jax.experimental import pallas as pl
from jax.experimental.pallas import tpu as pltpu

# ----------------------------------------------------------------------------
# Configuration (mirrors SCI_Point_Mask.__init__ and the `args` it consumes).
# ----------------------------------------------------------------------------
BATCH       = 2
INPUT_LEN   = 32            # L (divisible by 2**NUM_LEVELS)
INPUT_DIM   = 4             # C
NUM_CLASSES = 5
NUM_LEVELS  = 3
NUM_LAYERS  = 3             # EncoderTree.reOrder layer
POINT_PART  = 6             # self.point_part

ARG_KERNEL  = 5             # args.kernel
ARG_HIDDEN  = 2             # args.hidden_size
PAD         = (ARG_KERNEL - 1) // 2 + 1      # ReplicationPad1d amount
C           = INPUT_DIM
CH          = INPUT_DIM * ARG_HIDDEN         # hidden conv channels
BN_EPS      = 1e-5
BN_SCALE    = 1.0 / math.sqrt(1.0 + BN_EPS)  # eval BatchNorm1d (mean 0, var 1)

P     = POINT_PART
PP    = 8                                    # point partitions padded to sublane multiple
LC    = INPUT_LEN * INPUT_DIM                # 128: flattened (time, channel) width
NCC   = NUM_CLASSES * INPUT_DIM              # 20: real output width
OUT_W = 128                                  # lane-dense padded output width
ROWS  = BATCH * PP                           # 16 activation rows
MAXB  = (INPUT_LEN // 2 + 2) * CH            # 144: widest bias row


# ----------------------------------------------------------------------------
# EncoderTree.reOrder (layer == 3 branch), direct translation.
# ----------------------------------------------------------------------------
def reorder_index(N, layer=3):
    assert layer == 3, "only num_layers == 3 is implemented"
    n = list(range(1, N + 1))
    out = []
    for i in range(N):
        r = n[i] % 8
        if r == 0:   out.append(int(n[i] / 8))
        elif r == 1: out.append(int(n[i] / 8 + (7 * N + 7) / 8))
        elif r == 2: out.append(int(n[i] / 8 + (3 * N + 6) / 8))
        elif r == 3: out.append(int(n[i] / 8 + (5 * N + 5) / 8))
        elif r == 4: out.append(int(n[i] / 8 + (1 * N + 4) / 8))
        elif r == 5: out.append(int(n[i] / 8 + (6 * N + 3) / 8))
        elif r == 6: out.append(int(n[i] / 8 + (2 * N + 2) / 8))
        elif r == 7: out.append(int(n[i] / 8 + (4 * N + 1) / 8))
    return [i - 1 for i in out]


# ----------------------------------------------------------------------------
# Host-side layout / weight preprocessing (pure numpy, setup time only).
# ----------------------------------------------------------------------------
def build_sigmas(num_levels, length):
    """sigma[lvl] = time ordering of half-sequences at level lvl such that every
    level's even/odd Splitting is a pair of contiguous slices."""
    sig = list(range(length >> num_levels))
    out = [list(sig)]
    for _ in range(num_levels - 1):
        sig = [2 * v for v in sig] + [2 * v + 1 for v in sig]
        out.append(list(sig))
    return out[::-1]


def _branch_dense(w1, b1, w2, b2, half_len, sigma):
    """ReplicationPad1d(PAD)+Conv1d(C->CH,k=5) and Conv1d(CH->C,k=3) as dense
    linear maps on feature vectors flattened as (time in sigma order, channel)."""
    K = w1.shape[-1]
    L1 = half_len + 2 * PAD - K + 1          # = half_len + 2
    sinv = {t: i for i, t in enumerate(sigma)}
    M1 = np.zeros((L1 * CH, half_len * C), dtype=np.float32)
    v1 = np.zeros((L1 * CH,), dtype=np.float32)
    for t in range(L1):
        for o in range(CH):
            row = t * CH + o
            v1[row] = b1[o]
            for k in range(K):
                src = min(max(t + k - PAD, 0), half_len - 1)   # replication pad
                s_idx = sinv[src]
                for c in range(C):
                    M1[row, s_idx * C + c] += w1[o, c, k]
    M2 = np.zeros((half_len * C, L1 * CH), dtype=np.float32)
    v2 = np.zeros((half_len * C,), dtype=np.float32)
    for s_idx in range(half_len):
        t0 = sigma[s_idx]
        for c in range(C):
            row = s_idx * C + c
            v2[row] = b2[c]
            for k in range(3):
                for o in range(CH):
                    M2[row, (t0 + k) * CH + o] += w2[c, o, k]
    return M1, v1, M2, v2


# ----------------------------------------------------------------------------
# The single fused Pallas kernel (gridless: whole arrays live in VMEM).
# ----------------------------------------------------------------------------
def _sci_forward_kernel(x_ref, min_ref, macc_ref, perm_ref, bias_ref, wpt_ref, *rest):
    out_ref = rest[-1]
    wrefs = rest[:-1]
    assert len(wrefs) == 8 * NUM_LEVELS
    f32, bf16 = jnp.float32, jnp.bfloat16

    # natural (t,c) layout -> wavelet-packet layout via a 0/1 permutation matmul
    xp = jnp.dot(x_ref[...], perm_ref[...], preferred_element_type=f32)      # (B, LC)
    # all BATCH*PP masked copies as rows of one activation matrix
    z0 = (xp[:, None, :] * (1.0 - min_ref[...])).reshape(ROWS, LC)           # (16, 128)
    macc = macc_ref[...]                                                     # (16, 128)

    def branch(v, w1, b1r, w2, b2r, hw, fw):
        # ReplicationPad + Conv1d(k=5) + LeakyReLU + [Dropout=id] + Conv1d(k=3) + Tanh
        h = jnp.dot(v.astype(bf16), w1[...], preferred_element_type=f32)
        h = h + bias_ref[b1r:b1r + 1, :][:, :hw]
        h = jnp.where(h > 0, h, 0.01 * h)                    # LeakyReLU(0.01)
        t = jnp.dot(h.astype(bf16), w2[...], preferred_element_type=f32)
        t = t + bias_ref[b2r:b2r + 1, :][:, :fw]
        return jnp.tanh(t)

    out_acc = jnp.zeros((ROWS, OUT_W), f32)
    ze = z0[:, :LC // 2]          # even half (packet layout => contiguous)
    zo = z0[:, LC // 2:]          # odd half
    z_even = ze
    col = 0
    for lvl in range(NUM_LEVELS):
        half_len = INPUT_LEN >> (lvl + 1)
        F = half_len * C
        H1 = (half_len + 2) * CH
        w = wrefs[8 * lvl: 8 * lvl + 8]     # W1[phi,psi,U,P], W2[phi,psi,U,-P]
        bo = 8 * lvl
        phi  = branch(ze, w[0], bo + 0, w[4], bo + 4, H1, F)
        psi  = branch(zo, w[1], bo + 1, w[5], bo + 5, H1, F)
        d    = zo * jnp.exp(phi)
        cc   = ze * jnp.exp(psi)
        u    = branch(d,  w[2], bo + 2, w[6], bo + 6, H1, F)
        pneg = branch(cc, w[3], bo + 3, w[7], bo + 7, H1, F)   # == -P(cc) (sign folded)
        det  = d + pneg                                        # odd (detail) output
        # per-level masked accumulation + projection (reOrder folded into wpt rows)
        md = det * macc[:, col:col + F]
        out_acc = out_acc + jnp.dot(md.astype(bf16), wpt_ref[col:col + F, :],
                                    preferred_element_type=f32)
        col += F
        # BottleneckBlock(disable_conv=True): ReLU(BatchNorm1d) in eval mode.
        z_even = jnp.maximum((cc + u) * BN_SCALE, 0.0)
        if lvl + 1 < NUM_LEVELS:
            ze = z_even[:, :F // 2]
            zo = z_even[:, F // 2:]
    # approximation segment (last level's bottleneck output)
    Fa = (INPUT_LEN >> NUM_LEVELS) * C
    mda = z_even * macc[:, col:col + Fa]
    out_acc = out_acc + jnp.dot(mda.astype(bf16), wpt_ref[col:col + Fa, :],
                                preferred_element_type=f32)
    # reduce the point-partition rows per batch element (aligned 8-row groups)
    rows = [jnp.sum(out_acc[bb * PP:(bb + 1) * PP, :], axis=0, keepdims=True)
            for bb in range(BATCH)]
    out_ref[...] = jnp.concatenate(rows, axis=0)


# ----------------------------------------------------------------------------
# Build the fused forward: fold conv stacks / layout permutations / reOrder /
# projection into dense matrices, return (forward, prepare_masks).
# ----------------------------------------------------------------------------
def build_model(level_params, proj_w):
    sigmas = build_sigmas(NUM_LEVELS, INPUT_LEN)
    tau_time = np.array([2 * v for v in sigmas[0]] + [2 * v + 1 for v in sigmas[0]],
                        dtype=np.int64)
    # map internal tree-output positions -> torch EncoderTree output index j
    index = np.array(reorder_index(INPUT_LEN, NUM_LAYERS), dtype=np.int64)
    invidx = np.argsort(index)
    k_of_pos, off = [], 0
    for lvl in range(NUM_LEVELS):
        k_of_pos += [off + s for s in sigmas[lvl]]
        off += INPUT_LEN >> (lvl + 1)
    k_of_pos += [off + s for s in range(INPUT_LEN >> NUM_LEVELS)]
    j_of_pos = invidx[np.array(k_of_pos, dtype=np.int64)]

    # natural-flat -> packet-flat permutation matrix (applied in-kernel on x)
    perm = np.zeros((LC, LC), dtype=np.float32)
    for q in range(INPUT_LEN):
        for c in range(C):
            perm[int(tau_time[q]) * C + c, q * C + c] = 1.0

    # de-zeroed per-branch dense conv stacks; P-branch sign folded; biases packed
    weights = []
    biases = np.zeros((8 * NUM_LEVELS, MAXB), dtype=np.float32)
    for lvl in range(NUM_LEVELS):
        half_len = INPUT_LEN >> (lvl + 1)
        F = half_len * C
        H1 = (half_len + 2) * CH
        w1, b1, w2, b2 = [np.asarray(a, dtype=np.float32) for a in level_params[lvl]]
        W1s, W2s = [], []
        for i in range(4):                                    # phi, psi, U, P
            M1, v1, M2, v2 = _branch_dense(w1[i], b1[i], w2[i], b2[i],
                                           half_len, sigmas[lvl])
            sgn = -1.0 if i == 3 else 1.0                     # fold "d - P(cc)" minus
            W1s.append(np.ascontiguousarray(M1.T))            # (F, H1)
            W2s.append(np.ascontiguousarray(sgn * M2.T))      # (H1, F)
            biases[8 * lvl + i, :H1] = v1
            biases[8 * lvl + 4 + i, :F] = sgn * v2
        weights += W1s + W2s
    weights_j = [jnp.asarray(w, dtype=jnp.bfloat16) for w in weights]

    # projection Conv1d(L->NUM_CLASSES, k=1, bias=False), reOrder folded into rows,
    # columns padded to a lane-dense 128.
    pw = np.asarray(proj_w, dtype=np.float32)
    wpt = np.zeros((LC, OUT_W), dtype=np.float32)
    for pos in range(INPUT_LEN):
        j = int(j_of_pos[pos])
        for c in range(C):
            for n in range(NUM_CLASSES):
                wpt[pos * C + c, n * C + c] = pw[n, j]
    wpt_j = jnp.asarray(wpt, dtype=jnp.bfloat16)
    perm_j = jnp.asarray(perm)
    bias_j = jnp.asarray(biases)

    call = pl.pallas_call(
        _sci_forward_kernel,
        out_shape=jax.ShapeDtypeStruct((BATCH, OUT_W), jnp.float32),
        compiler_params=pltpu.CompilerParams(vmem_limit_bytes=16 * 1024 * 1024),
    )

    @jax.jit
    def forward(x, m_in, m_acc):
        # x: (B, L, C) natural layout; m_in/m_acc prepared by prepare_masks().
        out = call(x.reshape(BATCH, LC), m_in, m_acc,
                   perm_j, bias_j, wpt_j, *weights_j)
        return out[:, :NCC].reshape(BATCH, NUM_CLASSES, C)

    def prepare_masks(masks):
        """masks: (P, B, L, C) float 0/1 (1 at masked positions).  Returns the
        input masks in packet layout and the accumulation masks in internal tree
        layout, padded to PP=8 partitions (pad: fully-masked in, zero acc)."""
        m = np.asarray(masks, dtype=np.float32)
        m_in = np.ones((BATCH, PP, INPUT_LEN, C), dtype=np.float32)
        m_acc = np.zeros((BATCH, PP, INPUT_LEN, C), dtype=np.float32)
        m_in[:, :P] = np.transpose(m[:, :, tau_time, :], (1, 0, 2, 3))
        m_acc[:, :P] = np.transpose(m[:, :, j_of_pos, :], (1, 0, 2, 3))
        return (jnp.asarray(m_in.reshape(BATCH, PP, LC)),
                jnp.asarray(m_acc.reshape(ROWS, LC)))

    return forward, prepare_masks


# ----------------------------------------------------------------------------
# Deterministic point-mask partition (creatMaskEvenSplit1 semantics):
# per batch element, disjoint equal random slices; leftovers never masked.
# ----------------------------------------------------------------------------
def make_point_masks(key, nb, nl, nc, part):
    lc = nl * nc
    slice_num = lc // part
    masks = np.zeros((part, nb, lc), dtype=np.float32)
    for b in range(nb):
        perm = np.asarray(jax.random.permutation(jax.random.fold_in(key, b), lc))
        for i in range(part):
            idx = perm[i * slice_num:(i + 1) * slice_num]
            masks[i, b, idx] = 1.0
    return jnp.asarray(masks.reshape(part, nb, nl, nc))


# ----------------------------------------------------------------------------
# Pure-JAX reference (direct translation of the PyTorch module) for self-check.
# ----------------------------------------------------------------------------
def _rep_pad(x, pad):
    left = jnp.repeat(x[:, :, :1], pad, axis=2)
    right = jnp.repeat(x[:, :, -1:], pad, axis=2)
    return jnp.concatenate([left, x, right], axis=2)


def _conv1d(x, w, b):
    y = lax.conv_general_dilated(x, w, (1,), 'VALID',
                                 dimension_numbers=('NCH', 'OIH', 'NCH'),
                                 precision=lax.Precision.HIGHEST)
    return y + b[None, :, None]


def _branch_ref(x, w1, b1, w2, b2):
    h = _conv1d(_rep_pad(x, PAD), w1, b1)
    h = jnp.where(h > 0, h, 0.01 * h)
    return jnp.tanh(_conv1d(h, w2, b2))


def _level_ref(x, params):
    w1, b1, w2, b2 = params
    x_even = jnp.transpose(x[:, 0::2, :], (0, 2, 1))
    x_odd = jnp.transpose(x[:, 1::2, :], (0, 2, 1))
    phi = _branch_ref(x_even, w1[0], b1[0], w2[0], b2[0])
    psi = _branch_ref(x_odd, w1[1], b1[1], w2[1], b2[1])
    d = x_odd * jnp.exp(phi)
    cc = x_even * jnp.exp(psi)
    u = _branch_ref(d, w1[2], b1[2], w2[2], b2[2])
    p = _branch_ref(cc, w1[3], b1[3], w2[3], b2[3])
    even_upd = cc + u
    odd_upd = d - p
    even_next = jnp.transpose(jnp.maximum(even_upd * BN_SCALE, 0.0), (0, 2, 1))
    return even_next, odd_upd


def _tree_ref(x, level_params):
    det = []
    inp = x
    for params in level_params:
        inp, odd = _level_ref(inp, params)
        det.append(odd)
    det.append(jnp.transpose(inp, (0, 2, 1)))
    xcat = jnp.concatenate(det, axis=2)
    idx = jnp.asarray(reorder_index(xcat.shape[2], NUM_LAYERS), dtype=jnp.int32)
    return jnp.transpose(jnp.take(xcat, idx, axis=2), (0, 2, 1))


@jax.jit
def reference_forward(x, masks, level_params, proj_w):
    acc = jnp.zeros_like(x)
    for i in range(POINT_PART):
        mx = x * (1.0 - masks[i])
        to = _tree_ref(mx, level_params)
        acc = acc + to * masks[i]
    return jnp.einsum('nl,blc->bnc', proj_w, acc,
                      precision=lax.Precision.HIGHEST)


# ----------------------------------------------------------------------------
# Main
# ----------------------------------------------------------------------------
if __name__ == "__main__":
    root = jax.random.PRNGKey(0)
    k_x, k_m, k_p, k_lvl = jax.random.split(root, 4)

    x = jax.random.normal(k_x, (BATCH, INPUT_LEN, INPUT_DIM), jnp.float32)

    # One EncoderTree (self.blocks[0]) with NUM_LEVELS LevelIDCN layers; each
    # level has 4 branches (phi, psi, U, P), each branch two Conv1d layers
    # (torch weight layouts: (out, in, k)).
    level_params = []
    for lvl in range(NUM_LEVELS):
        kk = jax.random.fold_in(k_lvl, lvl)
        k1, k2, k3, k4 = jax.random.split(kk, 4)
        w1 = 0.2 * jax.random.normal(k1, (4, CH, INPUT_DIM, ARG_KERNEL), jnp.float32)
        b1 = 0.1 * jax.random.normal(k2, (4, CH), jnp.float32)
        w2 = 0.2 * jax.random.normal(k3, (4, INPUT_DIM, CH, 3), jnp.float32)
        b2 = 0.1 * jax.random.normal(k4, (4, INPUT_DIM), jnp.float32)
        level_params.append((w1, b1, w2, b2))
    level_params = tuple(level_params)

    # self.projection: Conv1d(INPUT_LEN, NUM_CLASSES, k=1, bias=False) weight.
    proj_w = jax.random.normal(k_p, (NUM_CLASSES, INPUT_LEN),
                               jnp.float32) / math.sqrt(INPUT_LEN)

    masks = make_point_masks(k_m, BATCH, INPUT_LEN, INPUT_DIM, POINT_PART)

    forward, prepare_masks = build_model(level_params, proj_w)
    m_in, m_acc = prepare_masks(masks)

    out = jax.block_until_ready(forward(x, m_in, m_acc))
    assert out.shape == (BATCH, NUM_CLASSES, INPUT_DIM)

    # Self-check against a pure-JAX (HIGHEST precision) translation of the
    # PyTorch forward.  Tolerance budget: the bf16 weight / dot-operand cast
    # (applied per the perf review) gives ~0.4% rounding per matmul, amplified
    # by the exp() lifting chain over 3 levels -> a few percent worst case on
    # the tree values; structural/permutation bugs would show up as O(1)
    # relative errors and are still caught comfortably.
    ref = jax.block_until_ready(reference_forward(x, masks, level_params, proj_w))
    err = float(jnp.max(jnp.abs(out - ref)))
    scale = float(jnp.max(jnp.abs(ref)))
    if not err <= 0.08 * (scale + 1.0):
        raise AssertionError(f"Pallas/JAX mismatch: max|diff|={err}, max|ref|={scale}")

    print("KERNEL_OK")
</pallas_src>

<mosaic_0001>
module attributes {stable_mosaic.version = 11 : i64} {
  func.func @_sci_forward_kernel(%arg0: memref<2x128xf32, #tpu.memory_space<vmem>>, %arg1: memref<2x8x128xf32, #tpu.memory_space<vmem>>, %arg2: memref<16x128xf32, #tpu.memory_space<vmem>>, %arg3: memref<128x128xf32, #tpu.memory_space<vmem>>, %arg4: memref<24x144xf32, #tpu.memory_space<vmem>>, %arg5: memref<128x128xbf16, #tpu.memory_space<vmem>>, %arg6: memref<64x144xbf16, #tpu.memory_space<vmem>>, %arg7: memref<64x144xbf16, #tpu.memory_space<vmem>>, %arg8: memref<64x144xbf16, #tpu.memory_space<vmem>>, %arg9: memref<64x144xbf16, #tpu.memory_space<vmem>>, %arg10: memref<144x64xbf16, #tpu.memory_space<vmem>>, %arg11: memref<144x64xbf16, #tpu.memory_space<vmem>>, %arg12: memref<144x64xbf16, #tpu.memory_space<vmem>>, %arg13: memref<144x64xbf16, #tpu.memory_space<vmem>>, %arg14: memref<32x80xbf16, #tpu.memory_space<vmem>>, %arg15: memref<32x80xbf16, #tpu.memory_space<vmem>>, %arg16: memref<32x80xbf16, #tpu.memory_space<vmem>>, %arg17: memref<32x80xbf16, #tpu.memory_space<vmem>>, %arg18: memref<80x32xbf16, #tpu.memory_space<vmem>>, %arg19: memref<80x32xbf16, #tpu.memory_space<vmem>>, %arg20: memref<80x32xbf16, #tpu.memory_space<vmem>>, %arg21: memref<80x32xbf16, #tpu.memory_space<vmem>>, %arg22: memref<16x48xbf16, #tpu.memory_space<vmem>>, %arg23: memref<16x48xbf16, #tpu.memory_space<vmem>>, %arg24: memref<16x48xbf16, #tpu.memory_space<vmem>>, %arg25: memref<16x48xbf16, #tpu.memory_space<vmem>>, %arg26: memref<48x16xbf16, #tpu.memory_space<vmem>>, %arg27: memref<48x16xbf16, #tpu.memory_space<vmem>>, %arg28: memref<48x16xbf16, #tpu.memory_space<vmem>>, %arg29: memref<48x16xbf16, #tpu.memory_space<vmem>>, %arg30: memref<2x128xf32, #tpu.memory_space<vmem>>) attributes {dimension_semantics = [], scalar_prefetch = 0 : i64, scratch_operands = 0 : i64, tpu.core_type = #tpu.core_type<tc>} {
    %c0 = arith.constant 0 : index
    %c0_0 = arith.constant 0 : index
    %0 = vector.load %arg0[%c0, %c0_0] : memref<2x128xf32, #tpu.memory_space<vmem>>, vector<2x128xf32>
    %c0_1 = arith.constant 0 : index
    %c0_2 = arith.constant 0 : index
    %1 = vector.load %arg3[%c0_1, %c0_2] : memref<128x128xf32, #tpu.memory_space<vmem>>, vector<128x128xf32>
    %cst = arith.constant dense<0.000000e+00> : vector<2x128xf32>
    %2 = tpu.matmul %0, %1, %cst {dimension_numbers = #tpu.dot_dimension_numbers<[1], [0], [0], [1], [0, 0, 1, 1], [], []>} : vector<2x128xf32>, vector<128x128xf32>, vector<2x128xf32> -> vector<2x128xf32>
    %3 = vector.shape_cast %2 : vector<2x128xf32> to vector<2x1x128xf32>
    %c0_3 = arith.constant 0 : index
    %c0_4 = arith.constant 0 : index
    %c0_5 = arith.constant 0 : index
    %4 = vector.load %arg1[%c0_3, %c0_4, %c0_5] : memref<2x8x128xf32, #tpu.memory_space<vmem>>, vector<2x8x128xf32>
    %cst_6 = arith.constant 1.000000e+00 : f32
    %5 = vector.broadcast %cst_6 : f32 to vector<2x8x128xf32>
    %6 = arith.subf %5, %4 : vector<2x8x128xf32>
    %7 = vector.broadcast %3 : vector<2x1x128xf32> to vector<2x8x128xf32>
    %8 = arith.mulf %7, %6 : vector<2x8x128xf32>
    %9 = vector.shape_cast %8 : vector<2x8x128xf32> to vector<16x128xf32>
    %c0_7 = arith.constant 0 : index
    %c0_8 = arith.constant 0 : index
    %10 = vector.load %arg2[%c0_7, %c0_8] : memref<16x128xf32, #tpu.memory_space<vmem>>, vector<16x128xf32>
    %cst_9 = arith.constant 0.000000e+00 : f32
    %11 = vector.broadcast %cst_9 : f32 to vector<16x128xf32>
    %12 = vector.extract_strided_slice %9 {offsets = [0, 0], sizes = [16, 64], strides = [1, 1]} : vector<16x128xf32> to vector<16x64xf32>
    %13 = vector.extract_strided_slice %9 {offsets = [0, 64], sizes = [16, 64], strides = [1, 1]} : vector<16x128xf32> to vector<16x64xf32>
    %14 = arith.truncf %12 : vector<16x64xf32> to vector<16x64xbf16>
    %c0_10 = arith.constant 0 : index
    %c0_11 = arith.constant 0 : index
    %15 = vector.load %arg6[%c0_10, %c0_11] : memref<64x144xbf16, #tpu.memory_space<vmem>>, vector<64x144xbf16>
    %cst_12 = arith.constant dense<0.000000e+00> : vector<16x144xf32>
    %16 = tpu.matmul %14, %15, %cst_12 {dimension_numbers = #tpu.dot_dimension_numbers<[1], [0], [0], [1], [0, 0, 1, 1], [], []>} : vector<16x64xbf16>, vector<64x144xbf16>, vector<16x144xf32> -> vector<16x144xf32>
    %c0_13 = arith.constant 0 : index
    %c0_14 = arith.constant 0 : index
    %17 = vector.load %arg4[%c0_13, %c0_14] : memref<24x144xf32, #tpu.memory_space<vmem>>, vector<1x144xf32>
    %18 = vector.broadcast %17 : vector<1x144xf32> to vector<16x144xf32>
    %19 = arith.addf %16, %18 : vector<16x144xf32>
    %cst_15 = arith.constant 0.000000e+00 : f32
    %20 = vector.broadcast %cst_15 : f32 to vector<16x144xf32>
    %21 = arith.cmpf ogt, %19, %20 : vector<16x144xf32>
    %cst_16 = arith.constant 0.00999999977 : f32
    %22 = vector.broadcast %cst_16 : f32 to vector<16x144xf32>
    %23 = arith.mulf %22, %19 : vector<16x144xf32>
    %24 = arith.select %21, %19, %23 : vector<16x144xi1>, vector<16x144xf32>
    %25 = arith.truncf %24 : vector<16x144xf32> to vector<16x144xbf16>
    %c0_17 = arith.constant 0 : index
    %c0_18 = arith.constant 0 : index
    %26 = vector.load %arg10[%c0_17, %c0_18] : memref<144x64xbf16, #tpu.memory_space<vmem>>, vector<144x64xbf16>
    %cst_19 = arith.constant dense<0.000000e+00> : vector<16x64xf32>
    %27 = tpu.matmul %25, %26, %cst_19 {dimension_numbers = #tpu.dot_dimension_numbers<[1], [0], [0], [1], [0, 0, 1, 1], [], []>} : vector<16x144xbf16>, vector<144x64xbf16>, vector<16x64xf32> -> vector<16x64xf32>
    %c4 = arith.constant 4 : index
    %c0_20 = arith.constant 0 : index
    %28 = vector.load %arg4[%c4, %c0_20] : memref<24x144xf32, #tpu.memory_space<vmem>>, vector<1x144xf32>
    %29 = vector.extract_strided_slice %28 {offsets = [0, 0], sizes = [1, 64], strides = [1, 1]} : vector<1x144xf32> to vector<1x64xf32>
    %30 = vector.broadcast %29 : vector<1x64xf32> to vector<16x64xf32>
    %31 = arith.addf %27, %30 : vector<16x64xf32>
    %32 = math.tanh %31 : vector<16x64xf32>
    %33 = arith.truncf %13 : vector<16x64xf32> to vector<16x64xbf16>
    %c0_21 = arith.constant 0 : index
    %c0_22 = arith.constant 0 : index
    %34 = vector.load %arg7[%c0_21, %c0_22] : memref<64x144xbf16, #tpu.memory_space<vmem>>, vector<64x144xbf16>
    %cst_23 = arith.constant dense<0.000000e+00> : vector<16x144xf32>
    %35 = tpu.matmul %33, %34, %cst_23 {dimension_numbers = #tpu.dot_dimension_numbers<[1], [0], [0], [1], [0, 0, 1, 1], [], []>} : vector<16x64xbf16>, vector<64x144xbf16>, vector<16x144xf32> -> vector<16x144xf32>
    %c1 = arith.constant 1 : index
    %c0_24 = arith.constant 0 : index
    %36 = vector.load %arg4[%c1, %c0_24] : memref<24x144xf32, #tpu.memory_space<vmem>>, vector<1x144xf32>
    %37 = vector.broadcast %36 : vector<1x144xf32> to vector<16x144xf32>
    %38 = arith.addf %35, %37 : vector<16x144xf32>
    %cst_25 = arith.constant 0.000000e+00 : f32
    %39 = vector.broadcast %cst_25 : f32 to vector<16x144xf32>
    %40 = arith.cmpf ogt, %38, %39 : vector<16x144xf32>
    %cst_26 = arith.constant 0.00999999977 : f32
    %41 = vector.broadcast %cst_26 : f32 to vector<16x144xf32>
    %42 = arith.mulf %41, %38 : vector<16x144xf32>
    %43 = arith.select %40, %38, %42 : vector<16x144xi1>, vector<16x144xf32>
    %44 = arith.truncf %43 : vector<16x144xf32> to vector<16x144xbf16>
    %c0_27 = arith.constant 0 : index
    %c0_28 = arith.constant 0 : index
    %45 = vector.load %arg11[%c0_27, %c0_28] : memref<144x64xbf16, #tpu.memory_space<vmem>>, vector<144x64xbf16>
    %cst_29 = arith.constant dense<0.000000e+00> : vector<16x64xf32>
    %46 = tpu.matmul %44, %45, %cst_29 {dimension_numbers = #tpu.dot_dimension_numbers<[1], [0], [0], [1], [0, 0, 1, 1], [], []>} : vector<16x144xbf16>, vector<144x64xbf16>, vector<16x64xf32> -> vector<16x64xf32>
    %c5 = arith.constant 5 : index
    %c0_30 = arith.constant 0 : index
    %47 = vector.load %arg4[%c5, %c0_30] : memref<24x144xf32, #tpu.memory_space<vmem>>, vector<1x144xf32>
    %48 = vector.extract_strided_slice %47 {offsets = [0, 0], sizes = [1, 64], strides = [1, 1]} : vector<1x144xf32> to vector<1x64xf32>
    %49 = vector.broadcast %48 : vector<1x64xf32> to vector<16x64xf32>
    %50 = arith.addf %46, %49 : vector<16x64xf32>
    %51 = math.tanh %50 : vector<16x64xf32>
    %52 = math.exp %32 : vector<16x64xf32>
    %53 = arith.mulf %13, %52 : vector<16x64xf32>
    %54 = math.exp %51 : vector<16x64xf32>
    %55 = arith.mulf %12, %54 : vector<16x64xf32>
    %56 = arith.truncf %53 : vector<16x64xf32> to vector<16x64xbf16>
    %c0_31 = arith.constant 0 : index
    %c0_32 = arith.constant 0 : index
    %57 = vector.load %arg8[%c0_31, %c0_32] : memref<64x144xbf16, #tpu.memory_space<vmem>>, vector<64x144xbf16>
    %cst_33 = arith.constant dense<0.000000e+00> : vector<16x144xf32>
    %58 = tpu.matmul %56, %57, %cst_33 {dimension_numbers = #tpu.dot_dimension_numbers<[1], [0], [0], [1], [0, 0, 1, 1], [], []>} : vector<16x64xbf16>, vector<64x144xbf16>, vector<16x144xf32> -> vector<16x144xf32>
    %c2 = arith.constant 2 : index
    %c0_34 = arith.constant 0 : index
    %59 = vector.load %arg4[%c2, %c0_34] : memref<24x144xf32, #tpu.memory_space<vmem>>, vector<1x144xf32>
    %60 = vector.broadcast %59 : vector<1x144xf32> to vector<16x144xf32>
    %61 = arith.addf %58, %60 : vector<16x144xf32>
    %cst_35 = arith.constant 0.000000e+00 : f32
    %62 = vector.broadcast %cst_35 : f32 to vector<16x144xf32>
    %63 = arith.cmpf ogt, %61, %62 : vector<16x144xf32>
    %cst_36 = arith.constant 0.00999999977 : f32
    %64 = vector.broadcast %cst_36 : f32 to vector<16x144xf32>
    %65 = arith.mulf %64, %61 : vector<16x144xf32>
    %66 = arith.select %63, %61, %65 : vector<16x144xi1>, vector<16x144xf32>
    %67 = arith.truncf %66 : vector<16x144xf32> to vector<16x144xbf16>
    %c0_37 = arith.constant 0 : index
    %c0_38 = arith.constant 0 : index
    %68 = vector.load %arg12[%c0_37, %c0_38] : memref<144x64xbf16, #tpu.memory_space<vmem>>, vector<144x64xbf16>
    %cst_39 = arith.constant dense<0.000000e+00> : vector<16x64xf32>
    %69 = tpu.matmul %67, %68, %cst_39 {dimension_numbers = #tpu.dot_dimension_numbers<[1], [0], [0], [1], [0, 0, 1, 1], [], []>} : vector<16x144xbf16>, vector<144x64xbf16>, vector<16x64xf32> -> vector<16x64xf32>
    %c6 = arith.constant 6 : index
    %c0_40 = arith.constant 0 : index
    %70 = vector.load %arg4[%c6, %c0_40] : memref<24x144xf32, #tpu.memory_space<vmem>>, vector<1x144xf32>
    %71 = vector.extract_strided_slice %70 {offsets = [0, 0], sizes = [1, 64], strides = [1, 1]} : vector<1x144xf32> to vector<1x64xf32>
    %72 = vector.broadcast %71 : vector<1x64xf32> to vector<16x64xf32>
    %73 = arith.addf %69, %72 : vector<16x64xf32>
    %74 = math.tanh %73 : vector<16x64xf32>
    %75 = arith.truncf %55 : vector<16x64xf32> to vector<16x64xbf16>
    %c0_41 = arith.constant 0 : index
    %c0_42 = arith.constant 0 : index
    %76 = vector.load %arg9[%c0_41, %c0_42] : memref<64x144xbf16, #tpu.memory_space<vmem>>, vector<64x144xbf16>
    %cst_43 = arith.constant dense<0.000000e+00> : vector<16x144xf32>
    %77 = tpu.matmul %75, %76, %cst_43 {dimension_numbers = #tpu.dot_dimension_numbers<[1], [0], [0], [1], [0, 0, 1, 1], [], []>} : vector<16x64xbf16>, vector<64x144xbf16>, vector<16x144xf32> -> vector<16x144xf32>
    %c3 = arith.constant 3 : index
    %c0_44 = arith.constant 0 : index
    %78 = vector.load %arg4[%c3, %c0_44] : memref<24x144xf32, #tpu.memory_space<vmem>>, vector<1x144xf32>
    %79 = vector.broadcast %78 : vector<1x144xf32> to vector<16x144xf32>
    %80 = arith.addf %77, %79 : vector<16x144xf32>
    %cst_45 = arith.constant 0.000000e+00 : f32
    %81 = vector.broadcast %cst_45 : f32 to vector<16x144xf32>
    %82 = arith.cmpf ogt, %80, %81 : vector<16x144xf32>
    %cst_46 = arith.constant 0.00999999977 : f32
    %83 = vector.broadcast %cst_46 : f32 to vector<16x144xf32>
    %84 = arith.mulf %83, %80 : vector<16x144xf32>
    %85 = arith.select %82, %80, %84 : vector<16x144xi1>, vector<16x144xf32>
    %86 = arith.truncf %85 : vector<16x144xf32> to vector<16x144xbf16>
    %c0_47 = arith.constant 0 : index
    %c0_48 = arith.constant 0 : index
    %87 = vector.load %arg13[%c0_47, %c0_48] : memref<144x64xbf16, #tpu.memory_space<vmem>>, vector<144x64xbf16>
    %cst_49 = arith.constant dense<0.000000e+00> : vector<16x64xf32>
    %88 = tpu.matmul %86, %87, %cst_49 {dimension_numbers = #tpu.dot_dimension_numbers<[1], [0], [0], [1], [0, 0, 1, 1], [], []>} : vector<16x144xbf16>, vector<144x64xbf16>, vector<16x64xf32> -> vector<16x64xf32>
    %c7 = arith.constant 7 : index
    %c0_50 = arith.constant 0 : index
    %89 = vector.load %arg4[%c7, %c0_50] : memref<24x144xf32, #tpu.memory_space<vmem>>, vector<1x144xf32>
    %90 = vector.extract_strided_slice %89 {offsets = [0, 0], sizes = [1, 64], strides = [1, 1]} : vector<1x144xf32> to vector<1x64xf32>
    %91 = vector.broadcast %90 : vector<1x64xf32> to vector<16x64xf32>
    %92 = arith.addf %88, %91 : vector<16x64xf32>
    %93 = math.tanh %92 : vector<16x64xf32>
    %94 = arith.addf %53, %93 : vector<16x64xf32>
    %95 = vector.extract_strided_slice %10 {offsets = [0, 0], sizes = [16, 64], strides = [1, 1]} : vector<16x128xf32> to vector<16x64xf32>
    %96 = arith.mulf %94, %95 : vector<16x64xf32>
    %97 = arith.truncf %96 : vector<16x64xf32> to vector<16x64xbf16>
    %c0_51 = arith.constant 0 : index
    %c0_52 = arith.constant 0 : index
    %98 = vector.load %arg5[%c0_51, %c0_52] : memref<128x128xbf16, #tpu.memory_space<vmem>>, vector<64x128xbf16>
    %cst_53 = arith.constant dense<0.000000e+00> : vector<16x128xf32>
    %99 = tpu.matmul %97, %98, %cst_53 {dimension_numbers = #tpu.dot_dimension_numbers<[1], [0], [0], [1], [0, 0, 1, 1], [], []>} : vector<16x64xbf16>, vector<64x128xbf16>, vector<16x128xf32> -> vector<16x128xf32>
    %100 = arith.addf %11, %99 : vector<16x128xf32>
    %101 = arith.addf %55, %74 : vector<16x64xf32>
    %cst_54 = arith.constant 0.999994993 : f32
    %102 = vector.broadcast %cst_54 : f32 to vector<16x64xf32>
    %103 = arith.mulf %101, %102 : vector<16x64xf32>
    %cst_55 = arith.constant 0.000000e+00 : f32
    %104 = vector.broadcast %cst_55 : f32 to vector<16x64xf32>
    %105 = arith.maximumf %103, %104 : vector<16x64xf32>
    %106 = vector.extract_strided_slice %105 {offsets = [0, 0], sizes = [16, 32], strides = [1, 1]} : vector<16x64xf32> to vector<16x32xf32>
    %107 = vector.extract_strided_slice %105 {offsets = [0, 32], sizes = [16, 32], strides = [1, 1]} : vector<16x64xf32> to vector<16x32xf32>
    %108 = arith.truncf %106 : vector<16x32xf32> to vector<16x32xbf16>
    %c0_56 = arith.constant 0 : index
    %c0_57 = arith.constant 0 : index
    %109 = vector.load %arg14[%c0_56, %c0_57] : memref<32x80xbf16, #tpu.memory_space<vmem>>, vector<32x80xbf16>
    %cst_58 = arith.constant dense<0.000000e+00> : vector<16x80xf32>
    %110 = tpu.matmul %108, %109, %cst_58 {dimension_numbers = #tpu.dot_dimension_numbers<[1], [0], [0], [1], [0, 0, 1, 1], [], []>} : vector<16x32xbf16>, vector<32x80xbf16>, vector<16x80xf32> -> vector<16x80xf32>
    %c8 = arith.constant 8 : index
    %c0_59 = arith.constant 0 : index
    %111 = vector.load %arg4[%c8, %c0_59] : memref<24x144xf32, #tpu.memory_space<vmem>>, vector<1x144xf32>
    %112 = vector.extract_strided_slice %111 {offsets = [0, 0], sizes = [1, 80], strides = [1, 1]} : vector<1x144xf32> to vector<1x80xf32>
    %113 = vector.broadcast %112 : vector<1x80xf32> to vector<16x80xf32>
    %114 = arith.addf %110, %113 : vector<16x80xf32>
    %cst_60 = arith.constant 0.000000e+00 : f32
    %115 = vector.broadcast %cst_60 : f32 to vector<16x80xf32>
    %116 = arith.cmpf ogt, %114, %115 : vector<16x80xf32>
    %cst_61 = arith.constant 0.00999999977 : f32
    %117 = vector.broadcast %cst_61 : f32 to vector<16x80xf32>
    %118 = arith.mulf %117, %114 : vector<16x80xf32>
    %119 = arith.select %116, %114, %118 : vector<16x80xi1>, vector<16x80xf32>
    %120 = arith.truncf %119 : vector<16x80xf32> to vector<16x80xbf16>
    %c0_62 = arith.constant 0 : index
    %c0_63 = arith.constant 0 : index
    %121 = vector.load %arg18[%c0_62, %c0_63] : memref<80x32xbf16, #tpu.memory_space<vmem>>, vector<80x32xbf16>
    %cst_64 = arith.constant dense<0.000000e+00> : vector<16x32xf32>
    %122 = tpu.matmul %120, %121, %cst_64 {dimension_numbers = #tpu.dot_dimension_numbers<[1], [0], [0], [1], [0, 0, 1, 1], [], []>} : vector<16x80xbf16>, vector<80x32xbf16>, vector<16x32xf32> -> vector<16x32xf32>
    %c12 = arith.constant 12 : index
    %c0_65 = arith.constant 0 : index
    %123 = vector.load %arg4[%c12, %c0_65] : memref<24x144xf32, #tpu.memory_space<vmem>>, vector<1x144xf32>
    %124 = vector.extract_strided_slice %123 {offsets = [0, 0], sizes = [1, 32], strides = [1, 1]} : vector<1x144xf32> to vector<1x32xf32>
    %125 = vector.broadcast %124 : vector<1x32xf32> to vector<16x32xf32>
    %126 = arith.addf %122, %125 : vector<16x32xf32>
    %127 = math.tanh %126 : vector<16x32xf32>
    %128 = arith.truncf %107 : vector<16x32xf32> to vector<16x32xbf16>
    %c0_66 = arith.constant 0 : index
    %c0_67 = arith.constant 0 : index
    %129 = vector.load %arg15[%c0_66, %c0_67] : memref<32x80xbf16, #tpu.memory_space<vmem>>, vector<32x80xbf16>
    %cst_68 = arith.constant dense<0.000000e+00> : vector<16x80xf32>
    %130 = tpu.matmul %128, %129, %cst_68 {dimension_numbers = #tpu.dot_dimension_numbers<[1], [0], [0], [1], [0, 0, 1, 1], [], []>} : vector<16x32xbf16>, vector<32x80xbf16>, vector<16x80xf32> -> vector<16x80xf32>
    %c9 = arith.constant 9 : index
    %c0_69 = arith.constant 0 : index
    %131 = vector.load %arg4[%c9, %c0_69] : memref<24x144xf32, #tpu.memory_space<vmem>>, vector<1x144xf32>
    %132 = vector.extract_strided_slice %131 {offsets = [0, 0], sizes = [1, 80], strides = [1, 1]} : vector<1x144xf32> to vector<1x80xf32>
    %133 = vector.broadcast %132 : vector<1x80xf32> to vector<16x80xf32>
    %134 = arith.addf %130, %133 : vector<16x80xf32>
    %cst_70 = arith.constant 0.000000e+00 : f32
    %135 = vector.broadcast %cst_70 : f32 to vector<16x80xf32>
    %136 = arith.cmpf ogt, %134, %135 : vector<16x80xf32>
    %cst_71 = arith.constant 0.00999999977 : f32
    %137 = vector.broadcast %cst_71 : f32 to vector<16x80xf32>
    %138 = arith.mulf %137, %134 : vector<16x80xf32>
    %139 = arith.select %136, %134, %138 : vector<16x80xi1>, vector<16x80xf32>
    %140 = arith.truncf %139 : vector<16x80xf32> to vector<16x80xbf16>
    %c0_72 = arith.constant 0 : index
    %c0_73 = arith.constant 0 : index
    %141 = vector.load %arg19[%c0_72, %c0_73] : memref<80x32xbf16, #tpu.memory_space<vmem>>, vector<80x32xbf16>
    %cst_74 = arith.constant dense<0.000000e+00> : vector<16x32xf32>
    %142 = tpu.matmul %140, %141, %cst_74 {dimension_numbers = #tpu.dot_dimension_numbers<[1], [0], [0], [1], [0, 0, 1, 1], [], []>} : vector<16x80xbf16>, vector<80x32xbf16>, vector<16x32xf32> -> vector<16x32xf32>
    %c13 = arith.constant 13 : index
    %c0_75 = arith.constant 0 : index
    %143 = vector.load %arg4[%c13, %c0_75] : memref<24x144xf32, #tpu.memory_space<vmem>>, vector<1x144xf32>
    %144 = vector.extract_strided_slice %143 {offsets = [0, 0], sizes = [1, 32], strides = [1, 1]} : vector<1x144xf32> to vector<1x32xf32>
    %145 = vector.broadcast %144 : vector<1x32xf32> to vector<16x32xf32>
    %146 = arith.addf %142, %145 : vector<16x32xf32>
    %147 = math.tanh %146 : vector<16x32xf32>
    %148 = math.exp %127 : vector<16x32xf32>
    %149 = arith.mulf %107, %148 : vector<16x32xf32>
    %150 = math.exp %147 : vector<16x32xf32>
    %151 = arith.mulf %106, %150 : vector<16x32xf32>
    %152 = arith.truncf %149 : vector<16x32xf32> to vector<16x32xbf16>
    %c0_76 = arith.constant 0 : index
    %c0_77 = arith.constant 0 : index
    %153 = vector.load %arg16[%c0_76, %c0_77] : memref<32x80xbf16, #tpu.memory_space<vmem>>, vector<32x80xbf16>
    %cst_78 = arith.constant dense<0.000000e+00> : vector<16x80xf32>
    %154 = tpu.matmul %152, %153, %cst_78 {dimension_numbers = #tpu.dot_dimension_numbers<[1], [0], [0], [1], [0, 0, 1, 1], [], []>} : vector<16x32xbf16>, vector<32x80xbf16>, vector<16x80xf32> -> vector<16x80xf32>
    %c10 = arith.constant 10 : index
    %c0_79 = arith.constant 0 : index
    %155 = vector.load %arg4[%c10, %c0_79] : memref<24x144xf32, #tpu.memory_space<vmem>>, vector<1x144xf32>
    %156 = vector.extract_strided_slice %155 {offsets = [0, 0], sizes = [1, 80], strides = [1, 1]} : vector<1x144xf32> to vector<1x80xf32>
    %157 = vector.broadcast %156 : vector<1x80xf32> to vector<16x80xf32>
    %158 = arith.addf %154, %157 : vector<16x80xf32>
    %cst_80 = arith.constant 0.000000e+00 : f32
    %159 = vector.broadcast %cst_80 : f32 to vector<16x80xf32>
    %160 = arith.cmpf ogt, %158, %159 : vector<16x80xf32>
    %cst_81 = arith.constant 0.00999999977 : f32
    %161 = vector.broadcast %cst_81 : f32 to vector<16x80xf32>
    %162 = arith.mulf %161, %158 : vector<16x80xf32>
    %163 = arith.select %160, %158, %162 : vector<16x80xi1>, vector<16x80xf32>
    %164 = arith.truncf %163 : vector<16x80xf32> to vector<16x80xbf16>
    %c0_82 = arith.constant 0 : index
    %c0_83 = arith.constant 0 : index
    %165 = vector.load %arg20[%c0_82, %c0_83] : memref<80x32xbf16, #tpu.memory_space<vmem>>, vector<80x32xbf16>
    %cst_84 = arith.constant dense<0.000000e+00> : vector<16x32xf32>
    %166 = tpu.matmul %164, %165, %cst_84 {dimension_numbers = #tpu.dot_dimension_numbers<[1], [0], [0], [1], [0, 0, 1, 1], [], []>} : vector<16x80xbf16>, vector<80x32xbf16>, vector<16x32xf32> -> vector<16x32xf32>
    %c14 = arith.constant 14 : index
    %c0_85 = arith.constant 0 : index
    %167 = vector.load %arg4[%c14, %c0_85] : memref<24x144xf32, #tpu.memory_space<vmem>>, vector<1x144xf32>
    %168 = vector.extract_strided_slice %167 {offsets = [0, 0], sizes = [1, 32], strides = [1, 1]} : vector<1x144xf32> to vector<1x32xf32>
    %169 = vector.broadcast %168 : vector<1x32xf32> to vector<16x32xf32>
    %170 = arith.addf %166, %169 : vector<16x32xf32>
    %171 = math.tanh %170 : vector<16x32xf32>
    %172 = arith.truncf %151 : vector<16x32xf32> to vector<16x32xbf16>
    %c0_86 = arith.constant 0 : index
    %c0_87 = arith.constant 0 : index
    %173 = vector.load %arg17[%c0_86, %c0_87] : memref<32x80xbf16, #tpu.memory_space<vmem>>, vector<32x80xbf16>
    %cst_88 = arith.constant dense<0.000000e+00> : vector<16x80xf32>
    %174 = tpu.matmul %172, %173, %cst_88 {dimension_numbers = #tpu.dot_dimension_numbers<[1], [0], [0], [1], [0, 0, 1, 1], [], []>} : vector<16x32xbf16>, vector<32x80xbf16>, vector<16x80xf32> -> vector<16x80xf32>
    %c11 = arith.constant 11 : index
    %c0_89 = arith.constant 0 : index
    %175 = vector.load %arg4[%c11, %c0_89] : memref<24x144xf32, #tpu.memory_space<vmem>>, vector<1x144xf32>
    %176 = vector.extract_strided_slice %175 {offsets = [0, 0], sizes = [1, 80], strides = [1, 1]} : vector<1x144xf32> to vector<1x80xf32>
    %177 = vector.broadcast %176 : vector<1x80xf32> to vector<16x80xf32>
    %178 = arith.addf %174, %177 : vector<16x80xf32>
    %cst_90 = arith.constant 0.000000e+00 : f32
    %179 = vector.broadcast %cst_90 : f32 to vector<16x80xf32>
    %180 = arith.cmpf ogt, %178, %179 : vector<16x80xf32>
    %cst_91 = arith.constant 0.00999999977 : f32
    %181 = vector.broadcast %cst_91 : f32 to vector<16x80xf32>
    %182 = arith.mulf %181, %178 : vector<16x80xf32>
    %183 = arith.select %180, %178, %182 : vector<16x80xi1>, vector<16x80xf32>
    %184 = arith.truncf %183 : vector<16x80xf32> to vector<16x80xbf16>
    %c0_92 = arith.constant 0 : index
    %c0_93 = arith.constant 0 : index
    %185 = vector.load %arg21[%c0_92, %c0_93] : memref<80x32xbf16, #tpu.memory_space<vmem>>, vector<80x32xbf16>
    %cst_94 = arith.constant dense<0.000000e+00> : vector<16x32xf32>
    %186 = tpu.matmul %184, %185, %cst_94 {dimension_numbers = #tpu.dot_dimension_numbers<[1], [0], [0], [1], [0, 0, 1, 1], [], []>} : vector<16x80xbf16>, vector<80x32xbf16>, vector<16x32xf32> -> vector<16x32xf32>
    %c15 = arith.constant 15 : index
    %c0_95 = arith.constant 0 : index
    %187 = vector.load %arg4[%c15, %c0_95] : memref<24x144xf32, #tpu.memory_space<vmem>>, vector<1x144xf32>
    %188 = vector.extract_strided_slice %187 {offsets = [0, 0], sizes = [1, 32], strides = [1, 1]} : vector<1x144xf32> to vector<1x32xf32>
    %189 = vector.broadcast %188 : vector<1x32xf32> to vector<16x32xf32>
    %190 = arith.addf %186, %189 : vector<16x32xf32>
    %191 = math.tanh %190 : vector<16x32xf32>
    %192 = arith.addf %149, %191 : vector<16x32xf32>
    %193 = vector.extract_strided_slice %10 {offsets = [0, 64], sizes = [16, 32], strides = [1, 1]} : vector<16x128xf32> to vector<16x32xf32>
    %194 = arith.mulf %192, %193 : vector<16x32xf32>
    %195 = arith.truncf %194 : vector<16x32xf32> to vector<16x32xbf16>
    %c64 = arith.constant 64 : index
    %c0_96 = arith.constant 0 : index
    %196 = vector.load %arg5[%c64, %c0_96] : memref<128x128xbf16, #tpu.memory_space<vmem>>, vector<32x128xbf16>
    %cst_97 = arith.constant dense<0.000000e+00> : vector<16x128xf32>
    %197 = tpu.matmul %195, %196, %cst_97 {dimension_numbers = #tpu.dot_dimension_numbers<[1], [0], [0], [1], [0, 0, 1, 1], [], []>} : vector<16x32xbf16>, vector<32x128xbf16>, vector<16x128xf32> -> vector<16x128xf32>
    %198 = arith.addf %100, %197 : vector<16x128xf32>
    %199 = arith.addf %151, %171 : vector<16x32xf32>
    %cst_98 = arith.constant 0.999994993 : f32
    %200 = vector.broadcast %cst_98 : f32 to vector<16x32xf32>
    %201 = arith.mulf %199, %200 : vector<16x32xf32>
    %cst_99 = arith.constant 0.000000e+00 : f32
    %202 = vector.broadcast %cst_99 : f32 to vector<16x32xf32>
    %203 = arith.maximumf %201, %202 : vector<16x32xf32>
    %204 = vector.extract_strided_slice %203 {offsets = [0, 0], sizes = [16, 16], strides = [1, 1]} : vector<16x32xf32> to vector<16x16xf32>
    %205 = vector.extract_strided_slice %203 {offsets = [0, 16], sizes = [16, 16], strides = [1, 1]} : vector<16x32xf32> to vector<16x16xf32>
    %206 = arith.truncf %204 : vector<16x16xf32> to vector<16x16xbf16>
    %c0_100 = arith.constant 0 : index
    %c0_101 = arith.constant 0 : index
    %207 = vector.load %arg22[%c0_100, %c0_101] : memref<16x48xbf16, #tpu.memory_space<vmem>>, vector<16x48xbf16>
    %cst_102 = arith.constant dense<0.000000e+00> : vector<16x48xf32>
    %208 = tpu.matmul %206, %207, %cst_102 {dimension_numbers = #tpu.dot_dimension_numbers<[1], [0], [0], [1], [0, 0, 1, 1], [], []>} : vector<16x16xbf16>, vector<16x48xbf16>, vector<16x48xf32> -> vector<16x48xf32>
    %c16 = arith.constant 16 : index
    %c0_103 = arith.constant 0 : index
    %209 = vector.load %arg4[%c16, %c0_103] : memref<24x144xf32, #tpu.memory_space<vmem>>, vector<1x144xf32>
    %210 = vector.extract_strided_slice %209 {offsets = [0, 0], sizes = [1, 48], strides = [1, 1]} : vector<1x144xf32> to vector<1x48xf32>
    %211 = vector.broadcast %210 : vector<1x48xf32> to vector<16x48xf32>
    %212 = arith.addf %208, %211 : vector<16x48xf32>
    %cst_104 = arith.constant 0.000000e+00 : f32
    %213 = vector.broadcast %cst_104 : f32 to vector<16x48xf32>
    %214 = arith.cmpf ogt, %212, %213 : vector<16x48xf32>
    %cst_105 = arith.constant 0.00999999977 : f32
    %215 = vector.broadcast %cst_105 : f32 to vector<16x48xf32>
    %216 = arith.mulf %215, %212 : vector<16x48xf32>
    %217 = arith.select %214, %212, %216 : vector<16x48xi1>, vector<16x48xf32>
    %218 = arith.truncf %217 : vector<16x48xf32> to vector<16x48xbf16>
    %c0_106 = arith.constant 0 : index
    %c0_107 = arith.constant 0 : index
    %219 = vector.load %arg26[%c0_106, %c0_107] : memref<48x16xbf16, #tpu.memory_space<vmem>>, vector<48x16xbf16>
    %cst_108 = arith.constant dense<0.000000e+00> : vector<16x16xf32>
    %220 = tpu.matmul %218, %219, %cst_108 {dimension_numbers = #tpu.dot_dimension_numbers<[1], [0], [0], [1], [0, 0, 1, 1], [], []>} : vector<16x48xbf16>, vector<48x16xbf16>, vector<16x16xf32> -> vector<16x16xf32>
    %c20 = arith.constant 20 : index
    %c0_109 = arith.constant 0 : index
    %221 = vector.load %arg4[%c20, %c0_109] : memref<24x144xf32, #tpu.memory_space<vmem>>, vector<1x144xf32>
    %222 = vector.extract_strided_slice %221 {offsets = [0, 0], sizes = [1, 16], strides = [1, 1]} : vector<1x144xf32> to vector<1x16xf32>
    %223 = vector.broadcast %222 : vector<1x16xf32> to vector<16x16xf32>
    %224 = arith.addf %220, %223 : vector<16x16xf32>
    %225 = math.tanh %224 : vector<16x16xf32>
    %226 = arith.truncf %205 : vector<16x16xf32> to vector<16x16xbf16>
    %c0_110 = arith.constant 0 : index
    %c0_111 = arith.constant 0 : index
    %227 = vector.load %arg23[%c0_110, %c0_111] : memref<16x48xbf16, #tpu.memory_space<vmem>>, vector<16x48xbf16>
    %cst_112 = arith.constant dense<0.000000e+00> : vector<16x48xf32>
    %228 = tpu.matmul %226, %227, %cst_112 {dimension_numbers = #tpu.dot_dimension_numbers<[1], [0], [0], [1], [0, 0, 1, 1], [], []>} : vector<16x16xbf16>, vector<16x48xbf16>, vector<16x48xf32> -> vector<16x48xf32>
    %c17 = arith.constant 17 : index
    %c0_113 = arith.constant 0 : index
    %229 = vector.load %arg4[%c17, %c0_113] : memref<24x144xf32, #tpu.memory_space<vmem>>, vector<1x144xf32>
    %230 = vector.extract_strided_slice %229 {offsets = [0, 0], sizes = [1, 48], strides = [1, 1]} : vector<1x144xf32> to vector<1x48xf32>
    %231 = vector.broadcast %230 : vector<1x48xf32> to vector<16x48xf32>
    %232 = arith.addf %228, %231 : vector<16x48xf32>
    %cst_114 = arith.constant 0.000000e+00 : f32
    %233 = vector.broadcast %cst_114 : f32 to vector<16x48xf32>
    %234 = arith.cmpf ogt, %232, %233 : vector<16x48xf32>
    %cst_115 = arith.constant 0.00999999977 : f32
    %235 = vector.broadcast %cst_115 : f32 to vector<16x48xf32>
    %236 = arith.mulf %235, %232 : vector<16x48xf32>
    %237 = arith.select %234, %232, %236 : vector<16x48xi1>, vector<16x48xf32>
    %238 = arith.truncf %237 : vector<16x48xf32> to vector<16x48xbf16>
    %c0_116 = arith.constant 0 : index
    %c0_117 = arith.constant 0 : index
    %239 = vector.load %arg27[%c0_116, %c0_117] : memref<48x16xbf16, #tpu.memory_space<vmem>>, vector<48x16xbf16>
    %cst_118 = arith.constant dense<0.000000e+00> : vector<16x16xf32>
    %240 = tpu.matmul %238, %239, %cst_118 {dimension_numbers = #tpu.dot_dimension_numbers<[1], [0], [0], [1], [0, 0, 1, 1], [], []>} : vector<16x48xbf16>, vector<48x16xbf16>, vector<16x16xf32> -> vector<16x16xf32>
    %c21 = arith.constant 21 : index
    %c0_119 = arith.constant 0 : index
    %241 = vector.load %arg4[%c21, %c0_119] : memref<24x144xf32, #tpu.memory_space<vmem>>, vector<1x144xf32>
    %242 = vector.extract_strided_slice %241 {offsets = [0, 0], sizes = [1, 16], strides = [1, 1]} : vector<1x144xf32> to vector<1x16xf32>
    %243 = vector.broadcast %242 : vector<1x16xf32> to vector<16x16xf32>
    %244 = arith.addf %240, %243 : vector<16x16xf32>
    %245 = math.tanh %244 : vector<16x16xf32>
    %246 = math.exp %225 : vector<16x16xf32>
    %247 = arith.mulf %205, %246 : vector<16x16xf32>
    %248 = math.exp %245 : vector<16x16xf32>
    %249 = arith.mulf %204, %248 : vector<16x16xf32>
    %250 = arith.truncf %247 : vector<16x16xf32> to vector<16x16xbf16>
    %c0_120 = arith.constant 0 : index
    %c0_121 = arith.constant 0 : index
    %251 = vector.load %arg24[%c0_120, %c0_121] : memref<16x48xbf16, #tpu.memory_space<vmem>>, vector<16x48xbf16>
    %cst_122 = arith.constant dense<0.000000e+00> : vector<16x48xf32>
    %252 = tpu.matmul %250, %251, %cst_122 {dimension_numbers = #tpu.dot_dimension_numbers<[1], [0], [0], [1], [0, 0, 1, 1], [], []>} : vector<16x16xbf16>, vector<16x48xbf16>, vector<16x48xf32> -> vector<16x48xf32>
    %c18 = arith.constant 18 : index
    %c0_123 = arith.constant 0 : index
    %253 = vector.load %arg4[%c18, %c0_123] : memref<24x144xf32, #tpu.memory_space<vmem>>, vector<1x144xf32>
    %254 = vector.extract_strided_slice %253 {offsets = [0, 0], sizes = [1, 48], strides = [1, 1]} : vector<1x144xf32> to vector<1x48xf32>
    %255 = vector.broadcast %254 : vector<1x48xf32> to vector<16x48xf32>
    %256 = arith.addf %252, %255 : vector<16x48xf32>
    %cst_124 = arith.constant 0.000000e+00 : f32
    %257 = vector.broadcast %cst_124 : f32 to vector<16x48xf32>
    %258 = arith.cmpf ogt, %256, %257 : vector<16x48xf32>
    %cst_125 = arith.constant 0.00999999977 : f32
    %259 = vector.broadcast %cst_125 : f32 to vector<16x48xf32>
    %260 = arith.mulf %259, %256 : vector<16x48xf32>
    %261 = arith.select %258, %256, %260 : vector<16x48xi1>, vector<16x48xf32>
    %262 = arith.truncf %261 : vector<16x48xf32> to vector<16x48xbf16>
    %c0_126 = arith.constant 0 : index
    %c0_127 = arith.constant 0 : index
    %263 = vector.load %arg28[%c0_126, %c0_127] : memref<48x16xbf16, #tpu.memory_space<vmem>>, vector<48x16xbf16>
    %cst_128 = arith.constant dense<0.000000e+00> : vector<16x16xf32>
    %264 = tpu.matmul %262, %263, %cst_128 {dimension_numbers = #tpu.dot_dimension_numbers<[1], [0], [0], [1], [0, 0, 1, 1], [], []>} : vector<16x48xbf16>, vector<48x16xbf16>, vector<16x16xf32> -> vector<16x16xf32>
    %c22 = arith.constant 22 : index
    %c0_129 = arith.constant 0 : index
    %265 = vector.load %arg4[%c22, %c0_129] : memref<24x144xf32, #tpu.memory_space<vmem>>, vector<1x144xf32>
    %266 = vector.extract_strided_slice %265 {offsets = [0, 0], sizes = [1, 16], strides = [1, 1]} : vector<1x144xf32> to vector<1x16xf32>
    %267 = vector.broadcast %266 : vector<1x16xf32> to vector<16x16xf32>
    %268 = arith.addf %264, %267 : vector<16x16xf32>
    %269 = math.tanh %268 : vector<16x16xf32>
    %270 = arith.truncf %249 : vector<16x16xf32> to vector<16x16xbf16>
    %c0_130 = arith.constant 0 : index
    %c0_131 = arith.constant 0 : index
    %271 = vector.load %arg25[%c0_130, %c0_131] : memref<16x48xbf16, #tpu.memory_space<vmem>>, vector<16x48xbf16>
    %cst_132 = arith.constant dense<0.000000e+00> : vector<16x48xf32>
    %272 = tpu.matmul %270, %271, %cst_132 {dimension_numbers = #tpu.dot_dimension_numbers<[1], [0], [0], [1], [0, 0, 1, 1], [], []>} : vector<16x16xbf16>, vector<16x48xbf16>, vector<16x48xf32> -> vector<16x48xf32>
    %c19 = arith.constant 19 : index
    %c0_133 = arith.constant 0 : index
    %273 = vector.load %arg4[%c19, %c0_133] : memref<24x144xf32, #tpu.memory_space<vmem>>, vector<1x144xf32>
    %274 = vector.extract_strided_slice %273 {offsets = [0, 0], sizes = [1, 48], strides = [1, 1]} : vector<1x144xf32> to vector<1x48xf32>
    %275 = vector.broadcast %274 : vector<1x48xf32> to vector<16x48xf32>
    %276 = arith.addf %272, %275 : vector<16x48xf32>
    %cst_134 = arith.constant 0.000000e+00 : f32
    %277 = vector.broadcast %cst_134 : f32 to vector<16x48xf32>
    %278 = arith.cmpf ogt, %276, %277 : vector<16x48xf32>
    %cst_135 = arith.constant 0.00999999977 : f32
    %279 = vector.broadcast %cst_135 : f32 to vector<16x48xf32>
    %280 = arith.mulf %279, %276 : vector<16x48xf32>
    %281 = arith.select %278, %276, %280 : vector<16x48xi1>, vector<16x48xf32>
    %282 = arith.truncf %281 : vector<16x48xf32> to vector<16x48xbf16>
    %c0_136 = arith.constant 0 : index
    %c0_137 = arith.constant 0 : index
    %283 = vector.load %arg29[%c0_136, %c0_137] : memref<48x16xbf16, #tpu.memory_space<vmem>>, vector<48x16xbf16>
    %cst_138 = arith.constant dense<0.000000e+00> : vector<16x16xf32>
    %284 = tpu.matmul %282, %283, %cst_138 {dimension_numbers = #tpu.dot_dimension_numbers<[1], [0], [0], [1], [0, 0, 1, 1], [], []>} : vector<16x48xbf16>, vector<48x16xbf16>, vector<16x16xf32> -> vector<16x16xf32>
    %c23 = arith.constant 23 : index
    %c0_139 = arith.constant 0 : index
    %285 = vector.load %arg4[%c23, %c0_139] : memref<24x144xf32, #tpu.memory_space<vmem>>, vector<1x144xf32>
    %286 = vector.extract_strided_slice %285 {offsets = [0, 0], sizes = [1, 16], strides = [1, 1]} : vector<1x144xf32> to vector<1x16xf32>
    %287 = vector.broadcast %286 : vector<1x16xf32> to vector<16x16xf32>
    %288 = arith.addf %284, %287 : vector<16x16xf32>
    %289 = math.tanh %288 : vector<16x16xf32>
    %290 = arith.addf %247, %289 : vector<16x16xf32>
    %291 = vector.extract_strided_slice %10 {offsets = [0, 96], sizes = [16, 16], strides = [1, 1]} : vector<16x128xf32> to vector<16x16xf32>
    %292 = arith.mulf %290, %291 : vector<16x16xf32>
    %293 = arith.truncf %292 : vector<16x16xf32> to vector<16x16xbf16>
    %c96 = arith.constant 96 : index
    %c0_140 = arith.constant 0 : index
    %294 = vector.load %arg5[%c96, %c0_140] : memref<128x128xbf16, #tpu.memory_space<vmem>>, vector<16x128xbf16>
    %cst_141 = arith.constant dense<0.000000e+00> : vector<16x128xf32>
    %295 = tpu.matmul %293, %294, %cst_141 {dimension_numbers = #tpu.dot_dimension_numbers<[1], [0], [0], [1], [0, 0, 1, 1], [], []>} : vector<16x16xbf16>, vector<16x128xbf16>, vector<16x128xf32> -> vector<16x128xf32>
    %296 = arith.addf %198, %295 : vector<16x128xf32>
    %297 = arith.addf %249, %269 : vector<16x16xf32>
    %cst_142 = arith.constant 0.999994993 : f32
    %298 = vector.broadcast %cst_142 : f32 to vector<16x16xf32>
    %299 = arith.mulf %297, %298 : vector<16x16xf32>
    %cst_143 = arith.constant 0.000000e+00 : f32
    %300 = vector.broadcast %cst_143 : f32 to vector<16x16xf32>
    %301 = arith.maximumf %299, %300 : vector<16x16xf32>
    %302 = vector.extract_strided_slice %10 {offsets = [0, 112], sizes = [16, 16], strides = [1, 1]} : vector<16x128xf32> to vector<16x16xf32>
    %303 = arith.mulf %301, %302 : vector<16x16xf32>
    %304 = arith.truncf %303 : vector<16x16xf32> to vector<16x16xbf16>
    %c112 = arith.constant 112 : index
    %c0_144 = arith.constant 0 : index
    %305 = vector.load %arg5[%c112, %c0_144] : memref<128x128xbf16, #tpu.memory_space<vmem>>, vector<16x128xbf16>
    %cst_145 = arith.constant dense<0.000000e+00> : vector<16x128xf32>
    %306 = tpu.matmul %304, %305, %cst_145 {dimension_numbers = #tpu.dot_dimension_numbers<[1], [0], [0], [1], [0, 0, 1, 1], [], []>} : vector<16x16xbf16>, vector<16x128xbf16>, vector<16x128xf32> -> vector<16x128xf32>
    %307 = arith.addf %296, %306 : vector<16x128xf32>
    %308 = vector.extract_strided_slice %307 {offsets = [0, 0], sizes = [8, 128], strides = [1, 1]} : vector<16x128xf32> to vector<8x128xf32>
    %cst_146 = arith.constant dense<0.000000e+00> : vector<128xf32>
    %309 = vector.multi_reduction <add>, %308, %cst_146 [0] : vector<8x128xf32> to vector<128xf32>
    %310 = vector.shape_cast %309 : vector<128xf32> to vector<1x128xf32>
    %311 = vector.extract_strided_slice %307 {offsets = [8, 0], sizes = [8, 128], strides = [1, 1]} : vector<16x128xf32> to vector<8x128xf32>
    %cst_147 = arith.constant dense<0.000000e+00> : vector<128xf32>
    %312 = vector.multi_reduction <add>, %311, %cst_147 [0] : vector<8x128xf32> to vector<128xf32>
    %313 = vector.shape_cast %312 : vector<128xf32> to vector<1x128xf32>
    %314 = tpu.concatenate %310, %313 in 0 : vector<1x128xf32>, vector<1x128xf32> -> vector<2x128xf32>
    %c0_148 = arith.constant 0 : index
    %c0_149 = arith.constant 0 : index
    %315 = vector.load %arg30[%c0_148, %c0_149] : memref<2x128xf32, #tpu.memory_space<vmem>>, vector<2x128xf32>
    tpu.vector_store %arg30[%c0_148, %c0_149], %314 {strides = array<i32>} : memref<2x128xf32, #tpu.memory_space<vmem>>, vector<2x128xf32>,
    return
  }
}

</mosaic_0001>

<llo_original>
// kernel: forward.1
$region0: #{forward.1}
  #allocation0 [shape = 'u32[]', space=smem, size = 0x4, offset = 0x4, fixed_abs, tag = 'smem constant byte address 0x4 - core index']
  #allocation1 [shape = 'u32[144,128]{1,0:T(1,128)}', space=vmem, size = 0x12000, scoped, tag = 'internal scratch']
  %s0 = inlined_call_operand.smem [shape: u32[31], index: -1, kind: input, shape index: {}]
  %s1 = sld [smem:[%s0]]
  %s2 = scalar_lea.smem %s0, 1
  %s3 = sld [smem:[%s2]]
  %s4 = scalar_lea.smem %s0, 2
  %s5 = sld [smem:[%s4]]
  %s6 = scalar_lea.smem %s0, 3
  %s7 = sld [smem:[%s6]]
  %s8 = scalar_lea.smem %s0, 4
  %s9 = sld [smem:[%s8]]
  %s10 = scalar_lea.smem %s0, 5
  %s11 = sld [smem:[%s10]]
  %s12 = scalar_lea.smem %s0, 6
  %s13 = sld [smem:[%s12]]
  %s14 = scalar_lea.smem %s0, 7
  %s15 = sld [smem:[%s14]]
  %s16 = scalar_lea.smem %s0, 8
  %s17 = sld [smem:[%s16]]
  %s18 = scalar_lea.smem %s0, 9
  %s19 = sld [smem:[%s18]]
  %s20 = scalar_lea.smem %s0, 10
  %s21 = sld [smem:[%s20]]
  %s22 = scalar_lea.smem %s0, 11
  %s23 = sld [smem:[%s22]]
  %s24 = scalar_lea.smem %s0, 12
  %s25 = sld [smem:[%s24]]
  %s26 = scalar_lea.smem %s0, 13
  %s27 = sld [smem:[%s26]]
  %s28 = scalar_lea.smem %s0, 14
  %s29 = sld [smem:[%s28]]
  %s30 = scalar_lea.smem %s0, 15
  %s31 = sld [smem:[%s30]]
  %s32 = scalar_lea.smem %s0, 16
  %s33 = sld [smem:[%s32]]
  %s34 = scalar_lea.smem %s0, 17
  %s35 = sld [smem:[%s34]]
  %s36 = scalar_lea.smem %s0, 18
  %s37 = sld [smem:[%s36]]
  %s38 = scalar_lea.smem %s0, 19
  %s39 = sld [smem:[%s38]]
  %s40 = scalar_lea.smem %s0, 20
  %s41 = sld [smem:[%s40]]
  %s42 = scalar_lea.smem %s0, 21
  %s43 = sld [smem:[%s42]]
  %s44 = scalar_lea.smem %s0, 22
  %s45 = sld [smem:[%s44]]
  %s46 = scalar_lea.smem %s0, 23
  %s47 = sld [smem:[%s46]]
  %s48 = scalar_lea.smem %s0, 24
  %s49 = sld [smem:[%s48]]
  %s50 = scalar_lea.smem %s0, 25
  %s51 = sld [smem:[%s50]]
  %s52 = scalar_lea.smem %s0, 26
  %s53 = sld [smem:[%s52]]
  %s54 = scalar_lea.smem %s0, 27
  %s55 = sld [smem:[%s54]]
  %s56 = scalar_lea.smem %s0, 28
  %s57 = sld [smem:[%s56]]
  %s58 = scalar_lea.smem %s0, 29
  %s59 = sld [smem:[%s58]]
  %s60 = scalar_lea.smem %s0, 30
  %s61 = sld [smem:[%s60]]
  %s62 = sld [smem:[#allocation0]]
  $region234: #{forward.1} parent=0
    _
  %s64 = ssub.s32 1, %s62
  %s65 = scalar_select 0, %s64, %s62
  $region1: #{forward.1} parent=0
    #allocation2 [shape = 'u8[8192]{0}', space=vmem, size = 0x2000, scoped, tag = 'input window, operand 1, single buffered']
    #allocation3 [shape = 's32[1]{0}', space=sflag, size = 0x4, scoped, tag = 'scoped memory for forward.1']
    #allocation4 [shape = 'u8[8192]{0}', space=vmem, size = 0x2000, scoped, tag = 'input window, operand 2, single buffered']
    #allocation5 [shape = 's32[1]{0}', space=sflag, size = 0x4, scoped, tag = 'scoped memory for forward.1']
    #allocation6 [shape = 'u8[24576]{0}', space=vmem, size = 0x6000, scoped, tag = 'input window, operand 4, single buffered']
    #allocation7 [shape = 'u8[32768]{0}', space=vmem, size = 0x8000, scoped, tag = 'input window, operand 5, single buffered']
    #allocation8 [shape = 's32[1]{0}', space=sflag, size = 0x4, scoped, tag = 'scoped memory for forward.1']
    #allocation9 [shape = 'u8[32768]{0}', space=vmem, size = 0x8000, scoped, tag = 'input window, operand 6, single buffered']
    #allocation10 [shape = 'u8[32768]{0}', space=vmem, size = 0x8000, scoped, tag = 'input window, operand 7, single buffered']
    #allocation11 [shape = 's32[1]{0}', space=sflag, size = 0x4, scoped, tag = 'scoped memory for forward.1']
    #allocation12 [shape = 'u8[32768]{0}', space=vmem, size = 0x8000, scoped, tag = 'input window, operand 8, single buffered']
    #allocation13 [shape = 'u8[32768]{0}', space=vmem, size = 0x8000, scoped, tag = 'input window, operand 9, single buffered']
    #allocation14 [shape = 's32[1]{0}', space=sflag, size = 0x4, scoped, tag = 'scoped memory for forward.1']
    #allocation15 [shape = 'u8[36864]{0}', space=vmem, size = 0x9000, scoped, tag = 'input window, operand 10, single buffered']
    #allocation16 [shape = 'u8[36864]{0}', space=vmem, size = 0x9000, scoped, tag = 'input window, operand 11, single buffered']
    #allocation17 [shape = 's32[1]{0}', space=sflag, size = 0x4, scoped, tag = 'scoped memory for forward.1']
    #allocation18 [shape = 'u8[36864]{0}', space=vmem, size = 0x9000, scoped, tag = 'input window, operand 12, single buffered']
    #allocation19 [shape = 'u8[36864]{0}', space=vmem, size = 0x9000, scoped, tag = 'input window, operand 13, single buffered']
    #allocation20 [shape = 's32[1]{0}', space=sflag, size = 0x4, scoped, tag = 'scoped memory for forward.1']
    #allocation21 [shape = 'u8[8192]{0}', space=vmem, size = 0x2000, scoped, tag = 'input window, operand 14, single buffered']
    #allocation22 [shape = 'u8[8192]{0}', space=vmem, size = 0x2000, scoped, tag = 'input window, operand 15, single buffered']
    #allocation23 [shape = 's32[1]{0}', space=sflag, size = 0x4, scoped, tag = 'scoped memory for forward.1']
    #allocation24 [shape = 'u8[8192]{0}', space=vmem, size = 0x2000, scoped, tag = 'input window, operand 16, single buffered']
    #allocation25 [shape = 'u8[8192]{0}', space=vmem, size = 0x2000, scoped, tag = 'input window, operand 17, single buffered']
    #allocation26 [shape = 's32[1]{0}', space=sflag, size = 0x4, scoped, tag = 'scoped memory for forward.1']
    #allocation27 [shape = 'u8[20480]{0}', space=vmem, size = 0x5000, scoped, tag = 'input window, operand 18, single buffered']
    #allocation28 [shape = 'u8[20480]{0}', space=vmem, size = 0x5000, scoped, tag = 'input window, operand 19, single buffered']
    #allocation29 [shape = 's32[1]{0}', space=sflag, size = 0x4, scoped, tag = 'scoped memory for forward.1']
    #allocation30 [shape = 'u8[20480]{0}', space=vmem, size = 0x5000, scoped, tag = 'input window, operand 20, single buffered']
    #allocation31 [shape = 'u8[4096]{0}', space=vmem, size = 0x1000, scoped, tag = 'input window, operand 22, single buffered']
    #allocation32 [shape = 's32[1]{0}', space=sflag, size = 0x4, scoped, tag = 'scoped memory for forward.1']
    #allocation33 [shape = 'u8[4096]{0}', space=vmem, size = 0x1000, scoped, tag = 'input window, operand 23, single buffered']
    #allocation34 [shape = 'u8[4096]{0}', space=vmem, size = 0x1000, scoped, tag = 'input window, operand 24, single buffered']
    #allocation35 [shape = 's32[1]{0}', space=sflag, size = 0x4, scoped, tag = 'scoped memory for forward.1']
    #allocation36 [shape = 'u8[12288]{0}', space=vmem, size = 0x3000, scoped, tag = 'input window, operand 26, single buffered']
    #allocation37 [shape = 'u8[12288]{0}', space=vmem, size = 0x3000, scoped, tag = 'input window, operand 27, single buffered']
    #allocation38 [shape = 's32[1]{0}', space=sflag, size = 0x4, scoped, tag = 'scoped memory for forward.1']
    #allocation39 [shape = 'u8[12288]{0}', space=vmem, size = 0x3000, scoped, tag = 'input window, operand 28, single buffered']
    #allocation40 [shape = 'u8[12288]{0}', space=vmem, size = 0x3000, scoped, tag = 'input window, operand 29, single buffered']
    #allocation41 [shape = 's32[1]{0}', space=sflag, size = 0x4, scoped, tag = 'scoped memory for forward.1']
    %66 = vsyncpa [#allocation3], 0
    %67 = vsyncpa [#allocation5], 0
    %68 = vsyncpa [#allocation8], 0
    %69 = vsyncpa [#allocation11], 0
    %70 = vsyncpa [#allocation14], 0
    %71 = vsyncpa [#allocation17], 0
    %72 = vsyncpa [#allocation20], 0
    %73 = vsyncpa [#allocation23], 0
    %74 = vsyncpa [#allocation26], 0
    %75 = vsyncpa [#allocation29], 0
    %76 = vsyncpa [#allocation32], 0
    %77 = vsyncpa [#allocation35], 0
    %78 = vsyncpa [#allocation38], 0
    %79 = vsyncpa [#allocation41], 0
    // Predicated region
    $region2: #{forward.1} parent=1 // pred_check
      _
    $region3: #{forward.1} parent=1 // pred_check_branch
      %81 = sbr.rel (0) target = $region5
    $region4: #{forward.1} parent=1 // pred_region
      _
    $region5: #{forward.1} parent=1 // pred_fallthru
      _
    // Predicated region
    $region6: #{forward.1} parent=1 // pred_check
      _
    $region7: #{forward.1} parent=1 // pred_check_branch
      %83 = sbr.rel (0) target = $region9
    $region8: #{forward.1} parent=1 // pred_region
      %s85 = ssub.s32 256, 256
      %86 = vsyncadd [#allocation3], %s85
      %s87 = sshll.u32 [#allocation2], 4
      %s88 = int_to_ptr.vmem [resolvable:$true] %s87
      %93 = dma.hbm_to_vmem [thread:$0]  %s3, 256, %s88, [#allocation3], 128, 128, 8
    $region9: #{forward.1} parent=1 // pred_fallthru
      _
    // Predicated region
    $region10: #{forward.1} parent=1 // pred_check
      _
    $region11: #{forward.1} parent=1 // pred_check_branch
      %95 = sbr.rel (0) target = $region13
    $region12: #{forward.1} parent=1 // pred_region
      %s97 = ssub.s32 256, 256
      %98 = vsyncadd [#allocation5], %s97
      %s99 = sshll.u32 [#allocation4], 4
      %s100 = int_to_ptr.vmem [resolvable:$true] %s99
      %105 = dma.hbm_to_vmem [thread:$0]  %s5, 256, %s100, [#allocation5], 128, 128, 8
    $region13: #{forward.1} parent=1 // pred_fallthru
      _
    // Predicated region
    $region14: #{forward.1} parent=1 // pred_check
      _
    $region15: #{forward.1} parent=1 // pred_check_branch
      %107 = sbr.rel (0) target = $region17
    $region16: #{forward.1} parent=1 // pred_region
      _
    $region17: #{forward.1} parent=1 // pred_fallthru
      _
    // Predicated region
    $region18: #{forward.1} parent=1 // pred_check
      _
    $region19: #{forward.1} parent=1 // pred_check_branch
      %109 = sbr.rel (0) target = $region21
    $region20: #{forward.1} parent=1 // pred_region
      %s111 = ssub.s32 768, 768
      %112 = vsyncadd [#allocation5], %s111
      %s113 = sshll.u32 [#allocation6], 4
      %s114 = int_to_ptr.vmem [resolvable:$true] %s113
      %119 = dma.hbm_to_vmem [thread:$0]  %s9, 768, %s114, [#allocation5], 256, 256, 16
    $region21: #{forward.1} parent=1 // pred_fallthru
      _
    // Predicated region
    $region22: #{forward.1} parent=1 // pred_check
      _
    $region23: #{forward.1} parent=1 // pred_check_branch
      %121 = sbr.rel (0) target = $region25
    $region24: #{forward.1} parent=1 // pred_region
      %s123 = ssub.s32 1024, 1024
      %124 = vsyncadd [#allocation8], %s123
      %s125 = sshll.u32 [#allocation7], 4
      %s126 = int_to_ptr.vmem [resolvable:$true] %s125
      %131 = dma.hbm_to_vmem [thread:$0]  %s11, 1024, %s126, [#allocation8], 64, 64, 4
    $region25: #{forward.1} parent=1 // pred_fallthru
      _
    // Predicated region
    $region26: #{forward.1} parent=1 // pred_check
      _
    $region27: #{forward.1} parent=1 // pred_check_branch
      %133 = sbr.rel (0) target = $region29
    $region28: #{forward.1} parent=1 // pred_region
      %s135 = ssub.s32 1024, 1024
      %136 = vsyncadd [#allocation8], %s135
      %s137 = sshll.u32 [#allocation9], 4
      %s138 = int_to_ptr.vmem [resolvable:$true] %s137
      %143 = dma.hbm_to_vmem [thread:$0]  %s13, 1024, %s138, [#allocation8], 128, 128, 8
    $region29: #{forward.1} parent=1 // pred_fallthru
      _
    // Predicated region
    $region30: #{forward.1} parent=1 // pred_check
      _
    $region31: #{forward.1} parent=1 // pred_check_branch
      %145 = sbr.rel (0) target = $region33
    $region32: #{forward.1} parent=1 // pred_region
      %s147 = ssub.s32 1024, 1024
      %148 = vsyncadd [#allocation11], %s147
      %s149 = sshll.u32 [#allocation10], 4
      %s150 = int_to_ptr.vmem [resolvable:$true] %s149
      %155 = dma.hbm_to_vmem [thread:$0]  %s15, 1024, %s150, [#allocation11], 128, 128, 8
    $region33: #{forward.1} parent=1 // pred_fallthru
      _
    // Predicated region
    $region34: #{forward.1} parent=1 // pred_check
      _
    $region35: #{forward.1} parent=1 // pred_check_branch
      %157 = sbr.rel (0) target = $region37
    $region36: #{forward.1} parent=1 // pred_region
      %s159 = ssub.s32 1024, 1024
      %160 = vsyncadd [#allocation11], %s159
      %s161 = sshll.u32 [#allocation12], 4
      %s162 = int_to_ptr.vmem [resolvable:$true] %s161
      %167 = dma.hbm_to_vmem [thread:$0]  %s17, 1024, %s162, [#allocation11], 128, 128, 8
    $region37: #{forward.1} parent=1 // pred_fallthru
      _
    // Predicated region
    $region38: #{forward.1} parent=1 // pred_check
      _
    $region39: #{forward.1} parent=1 // pred_check_branch
      %169 = sbr.rel (0) target = $region41
    $region40: #{forward.1} parent=1 // pred_region
      %s171 = ssub.s32 1024, 1024
      %172 = vsyncadd [#allocation14], %s171
      %s173 = sshll.u32 [#allocation13], 4
      %s174 = int_to_ptr.vmem [resolvable:$true] %s173
      %179 = dma.hbm_to_vmem [thread:$0]  %s19, 1024, %s174, [#allocation14], 128, 128, 8
    $region41: #{forward.1} parent=1 // pred_fallthru
      _
    // Predicated region
    $region42: #{forward.1} parent=1 // pred_check
      _
    $region43: #{forward.1} parent=1 // pred_check_branch
      %181 = sbr.rel (0) target = $region45
    $region44: #{forward.1} parent=1 // pred_region
      %s183 = ssub.s32 1152, 1152
      %184 = vsyncadd [#allocation14], %s183
      %s185 = sshll.u32 [#allocation15], 4
      %s186 = int_to_ptr.vmem [resolvable:$true] %s185
      %191 = dma.hbm_to_vmem [thread:$0]  %s21, 1152, %s186, [#allocation14], 64, 64, 4
    $region45: #{forward.1} parent=1 // pred_fallthru
      _
    // Predicated region
    $region46: #{forward.1} parent=1 // pred_check
      _
    $region47: #{forward.1} parent=1 // pred_check_branch
      %193 = sbr.rel (0) target = $region49
    $region48: #{forward.1} parent=1 // pred_region
      %s195 = ssub.s32 1152, 1152
      %196 = vsyncadd [#allocation17], %s195
      %s197 = sshll.u32 [#allocation16], 4
      %s198 = int_to_ptr.vmem [resolvable:$true] %s197
      %203 = dma.hbm_to_vmem [thread:$0]  %s23, 1152, %s198, [#allocation17], 64, 64, 4
    $region49: #{forward.1} parent=1 // pred_fallthru
      _
    // Predicated region
    $region50: #{forward.1} parent=1 // pred_check
      _
    $region51: #{forward.1} parent=1 // pred_check_branch
      %205 = sbr.rel (0) target = $region53
    $region52: #{forward.1} parent=1 // pred_region
      %s207 = ssub.s32 1152, 1152
      %208 = vsyncadd [#allocation17], %s207
      %s209 = sshll.u32 [#allocation18], 4
      %s210 = int_to_ptr.vmem [resolvable:$true] %s209
      %215 = dma.hbm_to_vmem [thread:$0]  %s25, 1152, %s210, [#allocation17], 64, 64, 4
    $region53: #{forward.1} parent=1 // pred_fallthru
      _
    // Predicated region
    $region54: #{forward.1} parent=1 // pred_check
      _
    $region55: #{forward.1} parent=1 // pred_check_branch
      %217 = sbr.rel (0) target = $region57
    $region56: #{forward.1} parent=1 // pred_region
      %s219 = ssub.s32 1152, 1152
      %220 = vsyncadd [#allocation20], %s219
      %s221 = sshll.u32 [#allocation19], 4
      %s222 = int_to_ptr.vmem [resolvable:$true] %s221
      %227 = dma.hbm_to_vmem [thread:$0]  %s27, 1152, %s222, [#allocation20], 64, 64, 4
    $region57: #{forward.1} parent=1 // pred_fallthru
      _
    // Predicated region
    $region58: #{forward.1} parent=1 // pred_check
      _
    $region59: #{forward.1} parent=1 // pred_check_branch
      %229 = sbr.rel (0) target = $region61
    $region60: #{forward.1} parent=1 // pred_region
      %s231 = ssub.s32 256, 256
      %232 = vsyncadd [#allocation20], %s231
      %s233 = sshll.u32 [#allocation21], 4
      %s234 = int_to_ptr.vmem [resolvable:$true] %s233
      %239 = dma.hbm_to_vmem [thread:$0]  %s29, 256, %s234, [#allocation20], 64, 64, 4
    $region61: #{forward.1} parent=1 // pred_fallthru
      _
    // Predicated region
    $region62: #{forward.1} parent=1 // pred_check
      _
    $region63: #{forward.1} parent=1 // pred_check_branch
      %241 = sbr.rel (0) target = $region65
    $region64: #{forward.1} parent=1 // pred_region
      %s243 = ssub.s32 256, 256
      %244 = vsyncadd [#allocation23], %s243
      %s245 = sshll.u32 [#allocation22], 4
      %s246 = int_to_ptr.vmem [resolvable:$true] %s245
      %251 = dma.hbm_to_vmem [thread:$0]  %s31, 256, %s246, [#allocation23], 64, 64, 4
    $region65: #{forward.1} parent=1 // pred_fallthru
      _
    // Predicated region
    $region66: #{forward.1} parent=1 // pred_check
      _
    $region67: #{forward.1} parent=1 // pred_check_branch
      %253 = sbr.rel (0) target = $region69
    $region68: #{forward.1} parent=1 // pred_region
      %s255 = ssub.s32 256, 256
      %256 = vsyncadd [#allocation23], %s255
      %s257 = sshll.u32 [#allocation24], 4
      %s258 = int_to_ptr.vmem [resolvable:$true] %s257
      %263 = dma.hbm_to_vmem [thread:$0]  %s33, 256, %s258, [#allocation23], 64, 64, 4
    $region69: #{forward.1} parent=1 // pred_fallthru
      _
    // Predicated region
    $region70: #{forward.1} parent=1 // pred_check
      _
    $region71: #{forward.1} parent=1 // pred_check_branch
      %265 = sbr.rel (0) target = $region73
    $region72: #{forward.1} parent=1 // pred_region
      %s267 = ssub.s32 256, 256
      %268 = vsyncadd [#allocation26], %s267
      %s269 = sshll.u32 [#allocation25], 4
      %s270 = int_to_ptr.vmem [resolvable:$true] %s269
      %275 = dma.hbm_to_vmem [thread:$0]  %s35, 256, %s270, [#allocation26], 64, 64, 4
    $region73: #{forward.1} parent=1 // pred_fallthru
      _
    // Predicated region
    $region74: #{forward.1} parent=1 // pred_check
      _
    $region75: #{forward.1} parent=1 // pred_check_branch
      %277 = sbr.rel (0) target = $region77
    $region76: #{forward.1} parent=1 // pred_region
      %s279 = ssub.s32 640, 640
      %280 = vsyncadd [#allocation26], %s279
      %s281 = sshll.u32 [#allocation27], 4
      %s282 = int_to_ptr.vmem [resolvable:$true] %s281
      %287 = dma.hbm_to_vmem [thread:$0]  %s37, 640, %s282, [#allocation26], 64, 64, 4
    $region77: #{forward.1} parent=1 // pred_fallthru
      _
    // Predicated region
    $region78: #{forward.1} parent=1 // pred_check
      _
    $region79: #{forward.1} parent=1 // pred_check_branch
      %289 = sbr.rel (0) target = $region81
    $region80: #{forward.1} parent=1 // pred_region
      %s291 = ssub.s32 640, 640
      %292 = vsyncadd [#allocation29], %s291
      %s293 = sshll.u32 [#allocation28], 4
      %s294 = int_to_ptr.vmem [resolvable:$true] %s293
      %299 = dma.hbm_to_vmem [thread:$0]  %s39, 640, %s294, [#allocation29], 64, 64, 4
    $region81: #{forward.1} parent=1 // pred_fallthru
      _
    // Predicated region
    $region82: #{forward.1} parent=1 // pred_check
      _
    $region83: #{forward.1} parent=1 // pred_check_branch
      %301 = sbr.rel (0) target = $region85
    $region84: #{forward.1} parent=1 // pred_region
      %s303 = ssub.s32 640, 640
      %304 = vsyncadd [#allocation29], %s303
      %s305 = sshll.u32 [#allocation30], 4
      %s306 = int_to_ptr.vmem [resolvable:$true] %s305
      %311 = dma.hbm_to_vmem [thread:$0]  %s41, 640, %s306, [#allocation29], 64, 64, 4
    $region85: #{forward.1} parent=1 // pred_fallthru
      _
    // Predicated region
    $region86: #{forward.1} parent=1 // pred_check
      _
    $region87: #{forward.1} parent=1 // pred_check_branch
      %313 = sbr.rel (0) target = $region89
    $region88: #{forward.1} parent=1 // pred_region
      _
    $region89: #{forward.1} parent=1 // pred_fallthru
      _
    // Predicated region
    $region90: #{forward.1} parent=1 // pred_check
      _
    $region91: #{forward.1} parent=1 // pred_check_branch
      %315 = sbr.rel (0) target = $region93
    $region92: #{forward.1} parent=1 // pred_region
      %s317 = ssub.s32 128, 128
      %318 = vsyncadd [#allocation32], %s317
      %s319 = sshll.u32 [#allocation31], 4
      %s320 = int_to_ptr.vmem [resolvable:$true] %s319
      %325 = dma.hbm_to_vmem [thread:$0]  %s45, 128, %s320, [#allocation32], 64, 64, 4
    $region93: #{forward.1} parent=1 // pred_fallthru
      _
    // Predicated region
    $region94: #{forward.1} parent=1 // pred_check
      _
    $region95: #{forward.1} parent=1 // pred_check_branch
      %327 = sbr.rel (0) target = $region97
    $region96: #{forward.1} parent=1 // pred_region
      %s329 = ssub.s32 128, 128
      %330 = vsyncadd [#allocation32], %s329
      %s331 = sshll.u32 [#allocation33], 4
      %s332 = int_to_ptr.vmem [resolvable:$true] %s331
      %337 = dma.hbm_to_vmem [thread:$0]  %s47, 128, %s332, [#allocation32], 64, 64, 4
    $region97: #{forward.1} parent=1 // pred_fallthru
      _
    // Predicated region
    $region98: #{forward.1} parent=1 // pred_check
      _
    $region99: #{forward.1} parent=1 // pred_check_branch
      %339 = sbr.rel (0) target = $region101
    $region100: #{forward.1} parent=1 // pred_region
      %s341 = ssub.s32 128, 128
      %342 = vsyncadd [#allocation35], %s341
      %s343 = sshll.u32 [#allocation34], 4
      %s344 = int_to_ptr.vmem [resolvable:$true] %s343
      %349 = dma.hbm_to_vmem [thread:$0]  %s49, 128, %s344, [#allocation35], 64, 64, 4
    $region101: #{forward.1} parent=1 // pred_fallthru
      _
    // Predicated region
    $region102: #{forward.1} parent=1 // pred_check
      _
    $region103: #{forward.1} parent=1 // pred_check_branch
      %351 = sbr.rel (0) target = $region105
    $region104: #{forward.1} parent=1 // pred_region
      _
    $region105: #{forward.1} parent=1 // pred_fallthru
      _
    // Predicated region
    $region106: #{forward.1} parent=1 // pred_check
      _
    $region107: #{forward.1} parent=1 // pred_check_branch
      %353 = sbr.rel (0) target = $region109
    $region108: #{forward.1} parent=1 // pred_region
      %s355 = ssub.s32 384, 384
      %356 = vsyncadd [#allocation35], %s355
      %s357 = sshll.u32 [#allocation36], 4
      %s358 = int_to_ptr.vmem [resolvable:$true] %s357
      %363 = dma.hbm_to_vmem [thread:$0]  %s53, 384, %s358, [#allocation35], 64, 64, 4
    $region109: #{forward.1} parent=1 // pred_fallthru
      _
    // Predicated region
    $region110: #{forward.1} parent=1 // pred_check
      _
    $region111: #{forward.1} parent=1 // pred_check_branch
      %365 = sbr.rel (0) target = $region113
    $region112: #{forward.1} parent=1 // pred_region
      %s367 = ssub.s32 384, 384
      %368 = vsyncadd [#allocation38], %s367
      %s369 = sshll.u32 [#allocation37], 4
      %s370 = int_to_ptr.vmem [resolvable:$true] %s369
      %375 = dma.hbm_to_vmem [thread:$0]  %s55, 384, %s370, [#allocation38], 64, 64, 4
    $region113: #{forward.1} parent=1 // pred_fallthru
      _
    // Predicated region
    $region114: #{forward.1} parent=1 // pred_check
      _
    $region115: #{forward.1} parent=1 // pred_check_branch
      %377 = sbr.rel (0) target = $region117
    $region116: #{forward.1} parent=1 // pred_region
      %s379 = ssub.s32 384, 384
      %380 = vsyncadd [#allocation38], %s379
      %s381 = sshll.u32 [#allocation39], 4
      %s382 = int_to_ptr.vmem [resolvable:$true] %s381
      %387 = dma.hbm_to_vmem [thread:$0]  %s57, 384, %s382, [#allocation38], 64, 64, 4
    $region117: #{forward.1} parent=1 // pred_fallthru
      _
    // Predicated region
    $region118: #{forward.1} parent=1 // pred_check
      _
    $region119: #{forward.1} parent=1 // pred_check_branch
      %389 = sbr.rel (0) target = $region121
    $region120: #{forward.1} parent=1 // pred_region
      %s391 = ssub.s32 384, 384
      %392 = vsyncadd [#allocation41], %s391
      %s393 = sshll.u32 [#allocation40], 4
      %s394 = int_to_ptr.vmem [resolvable:$true] %s393
      %399 = dma.hbm_to_vmem [thread:$0]  %s59, 384, %s394, [#allocation41], 64, 64, 4
    $region121: #{forward.1} parent=1 // pred_fallthru
      _
    // Predicated region
    $region122: #{forward.1} parent=1 // pred_check
      _
    $region123: #{forward.1} parent=1 // pred_check_branch
      %401 = sbr.rel (0) target = $region125
    $region124: #{forward.1} parent=1 // pred_region
      %402 = dma.done [#allocation3], 256
    $region125: #{forward.1} parent=1 // pred_fallthru
      _
    // Predicated region
    $region126: #{forward.1} parent=1 // pred_check
      _
    $region127: #{forward.1} parent=1 // pred_check_branch
      %404 = sbr.rel (0) target = $region129
    $region128: #{forward.1} parent=1 // pred_region
      %405 = dma.done [#allocation5], 256
    $region129: #{forward.1} parent=1 // pred_fallthru
      _
    // Predicated region
    $region130: #{forward.1} parent=1 // pred_check
      _
    $region131: #{forward.1} parent=1 // pred_check_branch
      %407 = sbr.rel (0) target = $region133
    $region132: #{forward.1} parent=1 // pred_region
      %408 = dma.done [#allocation5], 768
    $region133: #{forward.1} parent=1 // pred_fallthru
      _
    // Predicated region
    $region134: #{forward.1} parent=1 // pred_check
      _
    $region135: #{forward.1} parent=1 // pred_check_branch
      %410 = sbr.rel (0) target = $region137
    $region136: #{forward.1} parent=1 // pred_region
      %411 = dma.done [#allocation8], 1024
    $region137: #{forward.1} parent=1 // pred_fallthru
      _
    // Predicated region
    $region138: #{forward.1} parent=1 // pred_check
      _
    $region139: #{forward.1} parent=1 // pred_check_branch
      %413 = sbr.rel (0) target = $region141
    $region140: #{forward.1} parent=1 // pred_region
      %414 = dma.done [#allocation8], 1024
    $region141: #{forward.1} parent=1 // pred_fallthru
      _
    // Predicated region
    $region142: #{forward.1} parent=1 // pred_check
      _
    $region143: #{forward.1} parent=1 // pred_check_branch
      %416 = sbr.rel (0) target = $region145
    $region144: #{forward.1} parent=1 // pred_region
      %417 = dma.done [#allocation11], 1024
    $region145: #{forward.1} parent=1 // pred_fallthru
      _
    // Predicated region
    $region146: #{forward.1} parent=1 // pred_check
      _
    $region147: #{forward.1} parent=1 // pred_check_branch
      %419 = sbr.rel (0) target = $region149
    $region148: #{forward.1} parent=1 // pred_region
      %420 = dma.done [#allocation11], 1024
    $region149: #{forward.1} parent=1 // pred_fallthru
      _
    // Predicated region
    $region150: #{forward.1} parent=1 // pred_check
      _
    $region151: #{forward.1} parent=1 // pred_check_branch
      %422 = sbr.rel (0) target = $region153
    $region152: #{forward.1} parent=1 // pred_region
      %423 = dma.done [#allocation14], 1024
    $region153: #{forward.1} parent=1 // pred_fallthru
      _
    // Predicated region
    $region154: #{forward.1} parent=1 // pred_check
      _
    $region155: #{forward.1} parent=1 // pred_check_branch
      %425 = sbr.rel (0) target = $region157
    $region156: #{forward.1} parent=1 // pred_region
      %426 = dma.done [#allocation14], 1152
    $region157: #{forward.1} parent=1 // pred_fallthru
      _
    // Predicated region
    $region158: #{forward.1} parent=1 // pred_check
      _
    $region159: #{forward.1} parent=1 // pred_check_branch
      %428 = sbr.rel (0) target = $region161
    $region160: #{forward.1} parent=1 // pred_region
      %429 = dma.done [#allocation17], 1152
    $region161: #{forward.1} parent=1 // pred_fallthru
      _
    // Predicated region
    $region162: #{forward.1} parent=1 // pred_check
      _
    $region163: #{forward.1} parent=1 // pred_check_branch
      %431 = sbr.rel (0) target = $region165
    $region164: #{forward.1} parent=1 // pred_region
      %432 = dma.done [#allocation17], 1152
    $region165: #{forward.1} parent=1 // pred_fallthru
      _
    // Predicated region
    $region166: #{forward.1} parent=1 // pred_check
      _
    $region167: #{forward.1} parent=1 // pred_check_branch
      %434 = sbr.rel (0) target = $region169
    $region168: #{forward.1} parent=1 // pred_region
      %435 = dma.done [#allocation20], 1152
    $region169: #{forward.1} parent=1 // pred_fallthru
      _
    // Predicated region
    $region170: #{forward.1} parent=1 // pred_check
      _
    $region171: #{forward.1} parent=1 // pred_check_branch
      %437 = sbr.rel (0) target = $region173
    $region172: #{forward.1} parent=1 // pred_region
      %438 = dma.done [#allocation20], 256
    $region173: #{forward.1} parent=1 // pred_fallthru
      _
    // Predicated region
    $region174: #{forward.1} parent=1 // pred_check
      _
    $region175: #{forward.1} parent=1 // pred_check_branch
      %440 = sbr.rel (0) target = $region177
    $region176: #{forward.1} parent=1 // pred_region
      %441 = dma.done [#allocation23], 256
    $region177: #{forward.1} parent=1 // pred_fallthru
      _
    // Predicated region
    $region178: #{forward.1} parent=1 // pred_check
      _
    $region179: #{forward.1} parent=1 // pred_check_branch
      %443 = sbr.rel (0) target = $region181
    $region180: #{forward.1} parent=1 // pred_region
      %444 = dma.done [#allocation23], 256
    $region181: #{forward.1} parent=1 // pred_fallthru
      _
    // Predicated region
    $region182: #{forward.1} parent=1 // pred_check
      _
    $region183: #{forward.1} parent=1 // pred_check_branch
      %446 = sbr.rel (0) target = $region185
    $region184: #{forward.1} parent=1 // pred_region
      %447 = dma.done [#allocation26], 256
    $region185: #{forward.1} parent=1 // pred_fallthru
      _
    // Predicated region
    $region186: #{forward.1} parent=1 // pred_check
      _
    $region187: #{forward.1} parent=1 // pred_check_branch
      %449 = sbr.rel (0) target = $region189
    $region188: #{forward.1} parent=1 // pred_region
      %450 = dma.done [#allocation26], 640
    $region189: #{forward.1} parent=1 // pred_fallthru
      _
    // Predicated region
    $region190: #{forward.1} parent=1 // pred_check
      _
    $region191: #{forward.1} parent=1 // pred_check_branch
      %452 = sbr.rel (0) target = $region193
    $region192: #{forward.1} parent=1 // pred_region
      %453 = dma.done [#allocation29], 640
    $region193: #{forward.1} parent=1 // pred_fallthru
      _
    // Predicated region
    $region194: #{forward.1} parent=1 // pred_check
      _
    $region195: #{forward.1} parent=1 // pred_check_branch
      %455 = sbr.rel (0) target = $region197
    $region196: #{forward.1} parent=1 // pred_region
      %456 = dma.done [#allocation29], 640
    $region197: #{forward.1} parent=1 // pred_fallthru
      _
    // Predicated region
    $region198: #{forward.1} parent=1 // pred_check
      _
    $region199: #{forward.1} parent=1 // pred_check_branch
      %458 = sbr.rel (0) target = $region201
    $region200: #{forward.1} parent=1 // pred_region
      %459 = dma.done [#allocation32], 128
    $region201: #{forward.1} parent=1 // pred_fallthru
      _
    // Predicated region
    $region202: #{forward.1} parent=1 // pred_check
      _
    $region203: #{forward.1} parent=1 // pred_check_branch
      %461 = sbr.rel (0) target = $region205
    $region204: #{forward.1} parent=1 // pred_region
      %462 = dma.done [#allocation32], 128
    $region205: #{forward.1} parent=1 // pred_fallthru
      _
    // Predicated region
    $region206: #{forward.1} parent=1 // pred_check
      _
    $region207: #{forward.1} parent=1 // pred_check_branch
      %464 = sbr.rel (0) target = $region209
    $region208: #{forward.1} parent=1 // pred_region
      %465 = dma.done [#allocation35], 128
    $region209: #{forward.1} parent=1 // pred_fallthru
      _
    // Predicated region
    $region210: #{forward.1} parent=1 // pred_check
      _
    $region211: #{forward.1} parent=1 // pred_check_branch
      %467 = sbr.rel (0) target = $region213
    $region212: #{forward.1} parent=1 // pred_region
      %468 = dma.done [#allocation35], 384
    $region213: #{forward.1} parent=1 // pred_fallthru
      _
    // Predicated region
    $region214: #{forward.1} parent=1 // pred_check
      _
    $region215: #{forward.1} parent=1 // pred_check_branch
      %470 = sbr.rel (0) target = $region217
    $region216: #{forward.1} parent=1 // pred_region
      %471 = dma.done [#allocation38], 384
    $region217: #{forward.1} parent=1 // pred_fallthru
      _
    // Predicated region
    $region218: #{forward.1} parent=1 // pred_check
      _
    $region219: #{forward.1} parent=1 // pred_check_branch
      %473 = sbr.rel (0) target = $region221
    $region220: #{forward.1} parent=1 // pred_region
      %474 = dma.done [#allocation38], 384
    $region221: #{forward.1} parent=1 // pred_fallthru
      _
    // Predicated region
    $region222: #{forward.1} parent=1 // pred_check
      _
    $region223: #{forward.1} parent=1 // pred_check_branch
      %476 = sbr.rel (0) target = $region225
    $region224: #{forward.1} parent=1 // pred_region
      %477 = dma.done [#allocation41], 384
    $region225: #{forward.1} parent=1 // pred_fallthru
      _
    %v479 = vld [vmem:[%s1] sm:$0x3]
    %v480 = vld [vmem:[%s7] sm:$0xff]
    %v481 = vld [vmem:[%s7 + $0x8] sm:$0xff]
    %v482 = vld [vmem:[%s7 + $0x10] sm:$0xff]
    %v483 = vld [vmem:[%s7 + $0x18] sm:$0xff]
    %v484 = vld [vmem:[%s7 + $0x20] sm:$0xff]
    %v485 = vld [vmem:[%s7 + $0x28] sm:$0xff]
    %v486 = vld [vmem:[%s7 + $0x30] sm:$0xff]
    %v487 = vld [vmem:[%s7 + $0x38] sm:$0xff]
    %v488 = vld [vmem:[%s7 + $0x40] sm:$0xff]
    %v489 = vld [vmem:[%s7 + $0x48] sm:$0xff]
    %v490 = vld [vmem:[%s7 + $0x50] sm:$0xff]
    %v491 = vld [vmem:[%s7 + $0x58] sm:$0xff]
    %v492 = vld [vmem:[%s7 + $0x60] sm:$0xff]
    %v493 = vld [vmem:[%s7 + $0x68] sm:$0xff]
    %v494 = vld [vmem:[%s7 + $0x70] sm:$0xff]
    %v495 = vld [vmem:[%s7 + $0x78] sm:$0xff]
    %496 = vmatprep.subr.mxu0 0.0
    %497 = vmatpush1.msra.mxu0 %v495
    %498 = vmatprep.subr.mxu0 0.0
    %499 = vmatpush1.msra.mxu0 %v494
    %500 = vmatprep.subr.mxu0 0.0
    %501 = vmatpush1.msra.mxu0 %v493
    %502 = vmatprep.subr.mxu0 0.0
    %503 = vmatpush1.msra.mxu0 %v492
    %504 = vmatprep.subr.mxu0 0.0
    %505 = vmatpush1.msra.mxu0 %v491
    %506 = vmatprep.subr.mxu0 0.0
    %507 = vmatpush1.msra.mxu0 %v490
    %508 = vmatprep.subr.mxu0 0.0
    %509 = vmatpush1.msra.mxu0 %v489
    %510 = vmatprep.subr.mxu0 0.0
    %511 = vmatpush1.msra.mxu0 %v488
    %512 = vmatprep.subr.mxu0 0.0
    %513 = vmatpush1.msra.mxu0 %v487
    %514 = vmatprep.subr.mxu0 0.0
    %515 = vmatpush1.msra.mxu0 %v486
    %516 = vmatprep.subr.mxu0 0.0
    %517 = vmatpush1.msra.mxu0 %v485
    %518 = vmatprep.subr.mxu0 0.0
    %519 = vmatpush1.msra.mxu0 %v484
    %520 = vmatprep.subr.mxu0 0.0
    %521 = vmatpush1.msra.mxu0 %v483
    %522 = vmatprep.subr.mxu0 0.0
    %523 = vmatpush1.msra.mxu0 %v482
    %524 = vmatprep.subr.mxu0 0.0
    %525 = vmatpush1.msra.mxu0 %v481
    %526 = vmatprep.subr.mxu0 0.0
    %527 = vmatpush1.msra.mxu0 %v480
    %528 = vmatprep.subr.mxu0 0.0
    %529 = vmatpush2.msra.mxu0 0.0
    %530 = vmatprep.subr.mxu0 0.0
    %531 = vmatpush2.msra.mxu0 0.0
    %532 = vmatprep.subr.mxu0 0.0
    %533 = vmatpush2.msra.mxu0 0.0
    %534 = vmatprep.subr.mxu0 0.0
    %535 = vmatpush2.msra.mxu0 0.0
    %536 = vmatprep.subr.mxu0 0.0
    %537 = vmatpush2.msra.mxu0 0.0
    %538 = vmatprep.subr.mxu0 0.0
    %539 = vmatpush2.msra.mxu0 0.0
    %540 = vmatprep.subr.mxu0 0.0
    %541 = vmatpush2.msra.mxu0 0.0
    %542 = vmatprep.subr.mxu0 0.0
    %543 = vmatpush2.msra.mxu0 0.0
    %544 = vmatprep.subr.mxu0 0.0
    %545 = vmatpush2.msra.mxu0 0.0
    %546 = vmatprep.subr.mxu0 0.0
    %547 = vmatpush2.msra.mxu0 0.0
    %548 = vmatprep.subr.mxu0 0.0
    %549 = vmatpush2.msra.mxu0 0.0
    %550 = vmatprep.subr.mxu0 0.0
    %551 = vmatpush2.msra.mxu0 0.0
    %552 = vmatprep.subr.mxu0 0.0
    %553 = vmatpush2.msra.mxu0 0.0
    %554 = vmatprep.subr.mxu0 0.0
    %555 = vmatpush2.msra.mxu0 0.0
    %556 = vmatprep.subr.mxu0 0.0
    %557 = vmatpush2.msra.mxu0 0.0
    %558 = vmatprep.subr.mxu0 0.0
    %559 = vmatpush2.msra.mxu0 0.0
    %560 = vmatprep.mubr.f32.mxu0 0.0
    %561 = vmatmul.mubr.f32.gmra.mxu0 %v479
    %v562 = vpop.f32.mrf.mxu0
    %v563 = vadd.f32 0.0, %v562
    %v564 = vpop.f32.mrf.mxu0
    %565 = vdwg.mxu0
    %v568 = vunpack.c.l.s4 1966171168
    %v569 = vunpack.c.0.s8 %v568
    %v570 = vlaneseq
    %v571 = vshrl.u32 %v570, 7
    %v572 = vsub.s32 %v569, %v571
    %v573 = vrot.slane %v563, %v572
    %v574 = vcombine.high %v573, %v573
    %v576 = vunpack.c.l.s4 1966171168
    %v577 = vunpack.c.0.s8 %v576
    %v578 = vlaneseq
    %v579 = vshrl.u32 %v578, 7
    %v580 = vsub.s32 %v577, %v579
    %v581 = vrot.slane %v573, %v580
    %v583 = vunpack.c.l.s4 1966171168
    %v584 = vunpack.c.0.s8 %v583
    %v585 = vlaneseq
    %v586 = vshrl.u32 %v585, 7
    %v587 = vsub.s32 %v584, %v586
    %v588 = vrot.slane %v574, %v587
    %v589 = vld [vmem:[#allocation2] sm:$0xff]
    %v590 = vld [vmem:[#allocation2 + $0x8] sm:$0xff]
    %v591 = vsub.f32 1.0, %v589
    %v592 = vsub.f32 1.0, %v590
    %v593 = vlaneseq
    %v594 = vshrl.u32 %v593, 7
    %v595 = vsub.s32 0, %v594
    %v596 = vrot.slane %v581, %v595
    %v597 = vlaneseq
    %v598 = vshrl.u32 %v597, 7
    %v599 = vsub.s32 0, %v598
    %v600 = vrot.slane %v588, %v599
    %v603 = vmul.f32 %v596, %v591
    %v604 = vmul.f32 %v600, %v592
    %v605 = vld [vmem:[#allocation4] sm:$0xff]
    %v606 = vld [vmem:[#allocation4 + $0x8] sm:$0xff]
    %v607 = vpack.c.bf16 %v604, %v603
    %v608 = vld [vmem:[#allocation9] sm:$0xff]
    %v609 = vld [vmem:[#allocation9 + $0x8] sm:$0xff]
    %v610 = vld [vmem:[#allocation9 + $0x10] sm:$0xff]
    %v611 = vld [vmem:[#allocation9 + $0x18] sm:$0xff]
    %v612 = vld [vmem:[#allocation9 + $0x20] sm:$0xff]
    %v613 = vld [vmem:[#allocation9 + $0x28] sm:$0xff]
    %v614 = vld [vmem:[#allocation9 + $0x30] sm:$0xff]
    %v615 = vld [vmem:[#allocation9 + $0x38] sm:$0xff]
    %v616 = vld [vmem:[#allocation6] ss:$8 sm:$0x3]
    %v618 = vlaneseq
    %v619 = vshrl.u32 %v618, 7
    %v620 = vsub.s32 0, %v619
    %v621 = vrot.slane %v616, %v620
    %v622 = vlaneseq
    %v623 = vshrl.u32 %v622, 7
    %v624 = vsub.s32 1, %v623
    %v625 = vrot.slane %v616, %v624
    %v636 = vunpack.c.l.b16 %v608
    %v637 = vunpack.c.h.b16 %v608
    %v638 = vunpack.c.l.b16 %v609
    %v639 = vunpack.c.h.b16 %v609
    %v640 = vunpack.c.l.b16 %v610
    %v641 = vunpack.c.h.b16 %v610
    %v642 = vunpack.c.l.b16 %v611
    %v643 = vunpack.c.h.b16 %v611
    %v644 = vunpack.c.l.b16 %v612
    %v645 = vunpack.c.h.b16 %v612
    %v646 = vunpack.c.l.b16 %v613
    %v647 = vunpack.c.h.b16 %v613
    %v648 = vunpack.c.l.b16 %v614
    %v649 = vunpack.c.h.b16 %v614
    %v650 = vunpack.c.l.b16 %v615
    %v651 = vunpack.c.h.b16 %v615
    %v652 = vpack.c.b16 %v638, %v636
    %v653 = vpack.c.b16 %v639, %v637
    %v654 = vpack.c.b16 %v642, %v640
    %v655 = vpack.c.b16 %v643, %v641
    %v656 = vpack.c.b16 %v646, %v644
    %v657 = vpack.c.b16 %v647, %v645
    %v658 = vpack.c.b16 %v650, %v648
    %v659 = vpack.c.b16 %v651, %v649
    %vm668 = vcmask 523264
    %v670 = vsel %vm668, %v607, 0
    %672 = vmatprep.subr.bf16.mxu0 0
    %673 = vmatpush1.bf16.msra.mxu0 0
    %674 = vmatprep.subr.bf16.mxu0 0
    %675 = vmatpush1.bf16.msra.mxu0 0
    %676 = vmatprep.subr.bf16.mxu0 0
    %677 = vmatpush1.bf16.msra.mxu0 0
    %678 = vmatprep.subr.bf16.mxu0 0
    %679 = vmatpush1.bf16.msra.mxu0 0
    %680 = vmatprep.subr.bf16.mxu0 %v659
    %681 = vmatpush1.bf16.msra.mxu0 %v658
    %682 = vmatprep.subr.bf16.mxu0 %v657
    %683 = vmatpush1.bf16.msra.mxu0 %v656
    %684 = vmatprep.subr.bf16.mxu0 %v655
    %685 = vmatpush1.bf16.msra.mxu0 %v654
    %686 = vmatprep.subr.bf16.mxu0 %v653
    %687 = vmatpush1.bf16.msra.mxu0 %v652
    %688 = vmatprep.subr.bf16.mxu0 0
    %689 = vmatpush2.bf16.msra.mxu0 0
    %690 = vmatprep.subr.bf16.mxu0 0
    %691 = vmatpush2.bf16.msra.mxu0 0
    %692 = vmatprep.subr.bf16.mxu0 0
    %693 = vmatpush2.bf16.msra.mxu0 0
    %694 = vmatprep.subr.bf16.mxu0 0
    %695 = vmatpush2.bf16.msra.mxu0 0
    %696 = vmatprep.subr.bf16.mxu0 0
    %697 = vmatpush2.bf16.msra.mxu0 0
    %698 = vmatprep.subr.bf16.mxu0 0
    %699 = vmatpush2.bf16.msra.mxu0 0
    %700 = vmatprep.subr.bf16.mxu0 0
    %701 = vmatpush2.bf16.msra.mxu0 0
    %702 = vmatprep.subr.bf16.mxu0 0
    %703 = vmatpush2.bf16.msra.mxu0 0
    %704 = vmatprep.mubr.bf16.mxu0 0
    %705 = vmatmul.mubr.bf16.gmra.mxu0 %v670
    %v706 = vpop.f32.mrf.mxu0
    %v707 = vadd.f32 %v621, %v706
    %v708 = vpop.f32.mrf.mxu0
    %v709 = vadd.f32 %v625, %v708
    %v710 = vpop.f32.mrf.mxu0
    %v711 = vadd.f32 %v621, %v710
    %v712 = vpop.f32.mrf.mxu0
    %v713 = vadd.f32 %v625, %v712
    %714 = vdwg.mxu0
    %vm715 = vcmp.gt.f32.partialorder %v707, 0.0
    %vm716 = vcmp.gt.f32.partialorder %v709, 0.0
    %vm717 = vcmp.gt.f32.partialorder %v711, 0.0
    %vm718 = vcmp.gt.f32.partialorder %v713, 0.0
    %v719 = vmul.f32 %v707, 0.01
    %v720 = vmul.f32 %v709, 0.01
    %v721 = vmul.f32 %v711, 0.01
    %v722 = vmul.f32 %v713, 0.01
    %v723 = vsel %vm715, %v707, %v719
    %v724 = vsel %vm716, %v709, %v720
    %v725 = vsel %vm717, %v711, %v721
    %v726 = vsel %vm718, %v713, %v722
    %v727 = vpack.c.bf16 %v725, %v723
    %v728 = vpack.c.bf16 %v726, %v724
    %v729 = vld [vmem:[#allocation15] sm:$0xf]
    %v730 = vld [vmem:[#allocation15 + $0x4] sm:$0xf]
    %v731 = vld [vmem:[#allocation15 + $0x8] sm:$0xf]
    %v732 = vld [vmem:[#allocation15 + $0xc] sm:$0xf]
    %v733 = vld [vmem:[#allocation15 + $0x10] sm:$0xf]
    %v734 = vld [vmem:[#allocation15 + $0x14] sm:$0xf]
    %v735 = vld [vmem:[#allocation15 + $0x18] sm:$0xf]
    %v736 = vld [vmem:[#allocation15 + $0x1c] sm:$0xf]
    %v737 = vld [vmem:[#allocation15 + $0x20] sm:$0xf]
    %v738 = vld [vmem:[#allocation15 + $0x24] sm:$0xf]
    %v739 = vld [vmem:[#allocation15 + $0x28] sm:$0xf]
    %v740 = vld [vmem:[#allocation15 + $0x2c] sm:$0xf]
    %v741 = vld [vmem:[#allocation15 + $0x30] sm:$0xf]
    %v742 = vld [vmem:[#allocation15 + $0x34] sm:$0xf]
    %v743 = vld [vmem:[#allocation15 + $0x38] sm:$0xf]
    %v744 = vld [vmem:[#allocation15 + $0x3c] sm:$0xf]
    %v745 = vld [vmem:[#allocation15 + $0x40] sm:$0xf]
    %v746 = vld [vmem:[#allocation15 + $0x44] sm:$0xf]
    %s747 = scalar_lea.vmem [#allocation6], 4
    %v748 = vld [vmem:[%s747] ss:$8 sm:$0x3]
    %v750 = vlaneseq
    %v751 = vshrl.u32 %v750, 7
    %v752 = vsub.s32 0, %v751
    %v753 = vrot.slane %v748, %v752
    %v773 = vunpack.c.l.b16 %v729
    %v774 = vunpack.c.l.b16 %v730
    %v775 = vunpack.c.l.b16 %v731
    %v776 = vunpack.c.l.b16 %v732
    %v777 = vunpack.c.l.b16 %v733
    %v778 = vunpack.c.l.b16 %v734
    %v779 = vunpack.c.l.b16 %v735
    %v780 = vunpack.c.l.b16 %v736
    %v781 = vunpack.c.l.b16 %v737
    %v782 = vunpack.c.l.b16 %v738
    %v783 = vunpack.c.l.b16 %v739
    %v784 = vunpack.c.l.b16 %v740
    %v785 = vunpack.c.l.b16 %v741
    %v786 = vunpack.c.l.b16 %v742
    %v787 = vunpack.c.l.b16 %v743
    %v788 = vunpack.c.l.b16 %v744
    %v789 = vunpack.c.l.b16 %v745
    %v790 = vunpack.c.l.b16 %v746
    %v791 = vpack.c.b16 %v774, %v773
    %v792 = vpack.c.b16 %v776, %v775
    %v793 = vpack.c.b16 %v778, %v777
    %v794 = vpack.c.b16 %v780, %v779
    %v795 = vpack.c.b16 %v782, %v781
    %v796 = vpack.c.b16 %v784, %v783
    %v797 = vpack.c.b16 %v786, %v785
    %v798 = vpack.c.b16 %v788, %v787
    %v799 = vpack.c.b16 %v790, %v789
    %vm809 = vcmask 130048
    %v811 = vsel %vm809, %v728, 0
    %813 = vmatprep.subr.bf16.mxu0 0
    %814 = vmatpush1.bf16.msra.mxu0 %v798
    %815 = vmatprep.subr.bf16.mxu0 0
    %816 = vmatpush1.bf16.msra.mxu0 %v797
    %817 = vmatprep.subr.bf16.mxu0 0
    %818 = vmatpush1.bf16.msra.mxu0 %v796
    %819 = vmatprep.subr.bf16.mxu0 0
    %820 = vmatpush1.bf16.msra.mxu0 %v795
    %821 = vmatprep.subr.bf16.mxu0 0
    %822 = vmatpush1.bf16.msra.mxu0 %v794
    %823 = vmatprep.subr.bf16.mxu0 0
    %824 = vmatpush1.bf16.msra.mxu0 %v793
    %825 = vmatprep.subr.bf16.mxu0 0
    %826 = vmatpush1.bf16.msra.mxu0 %v792
    %827 = vmatprep.subr.bf16.mxu0 0
    %828 = vmatpush1.bf16.msra.mxu0 %v791
    %829 = vmatprep.subr.bf16.mxu0 0
    %830 = vmatpush2.bf16.msra.mxu0 0
    %831 = vmatprep.subr.bf16.mxu0 0
    %832 = vmatpush2.bf16.msra.mxu0 0
    %833 = vmatprep.subr.bf16.mxu0 0
    %834 = vmatpush2.bf16.msra.mxu0 0
    %835 = vmatprep.subr.bf16.mxu0 0
    %836 = vmatpush2.bf16.msra.mxu0 0
    %837 = vmatprep.subr.bf16.mxu0 0
    %838 = vmatpush2.bf16.msra.mxu0 0
    %839 = vmatprep.subr.bf16.mxu0 0
    %840 = vmatpush2.bf16.msra.mxu0 0
    %841 = vmatprep.subr.bf16.mxu0 0
    %842 = vmatpush2.bf16.msra.mxu0 0
    %843 = vmatprep.subr.bf16.mxu0 0
    %844 = vmatpush2.bf16.msra.mxu0 %v799
    %845 = vmatprep.mubr.bf16.mxu0 %v811
    %846 = vmatmul.mubr.bf16.gmra.mxu0 %v727
    %v847 = vpop.f32.mrf.mxu0
    %v848 = vadd.f32 %v753, %v847
    %v849 = vpop.f32.mrf.mxu0
    %v850 = vpop.f32.mrf.mxu0
    %v851 = vadd.f32 %v753, %v850
    %v852 = vpop.f32.mrf.mxu0
    %853 = vdwg.mxu0
    %v854 = vtanh.pop %v848
    %v855 = vtanh.pop %v851
    %v856 = vld [vmem:[#allocation10] sm:$0xff]
    %v857 = vld [vmem:[#allocation10 + $0x8] sm:$0xff]
    %v858 = vld [vmem:[#allocation10 + $0x10] sm:$0xff]
    %v859 = vld [vmem:[#allocation10 + $0x18] sm:$0xff]
    %v860 = vld [vmem:[#allocation10 + $0x20] sm:$0xff]
    %v861 = vld [vmem:[#allocation10 + $0x28] sm:$0xff]
    %v862 = vld [vmem:[#allocation10 + $0x30] sm:$0xff]
    %v863 = vld [vmem:[#allocation10 + $0x38] sm:$0xff]
    %s864 = scalar_lea.vmem [#allocation6], 1
    %v865 = vld [vmem:[%s864] ss:$8 sm:$0x3]
    %v867 = vlaneseq
    %v868 = vshrl.u32 %v867, 7
    %v869 = vsub.s32 0, %v868
    %v870 = vrot.slane %v865, %v869
    %v871 = vlaneseq
    %v872 = vshrl.u32 %v871, 7
    %v873 = vsub.s32 1, %v872
    %v874 = vrot.slane %v865, %v873
    %878 = vrot.lane.b32.xlu0 %v607, 64
    %v879 = vpop.permute.xlu0 %878
    %v888 = vunpack.c.l.b16 %v856
    %v889 = vunpack.c.h.b16 %v856
    %v890 = vunpack.c.l.b16 %v857
    %v891 = vunpack.c.h.b16 %v857
    %v892 = vunpack.c.l.b16 %v858
    %v893 = vunpack.c.h.b16 %v858
    %v894 = vunpack.c.l.b16 %v859
    %v895 = vunpack.c.h.b16 %v859
    %v896 = vunpack.c.l.b16 %v860
    %v897 = vunpack.c.h.b16 %v860
    %v898 = vunpack.c.l.b16 %v861
    %v899 = vunpack.c.h.b16 %v861
    %v900 = vunpack.c.l.b16 %v862
    %v901 = vunpack.c.h.b16 %v862
    %v902 = vunpack.c.l.b16 %v863
    %v903 = vunpack.c.h.b16 %v863
    %v904 = vpack.c.b16 %v890, %v888
    %v905 = vpack.c.b16 %v891, %v889
    %v906 = vpack.c.b16 %v894, %v892
    %v907 = vpack.c.b16 %v895, %v893
    %v908 = vpack.c.b16 %v898, %v896
    %v909 = vpack.c.b16 %v899, %v897
    %v910 = vpack.c.b16 %v902, %v900
    %v911 = vpack.c.b16 %v903, %v901
    %v921 = vsel %vm668, %v879, 0
    %923 = vmatprep.subr.bf16.mxu0 0
    %924 = vmatpush1.bf16.msra.mxu0 0
    %925 = vmatprep.subr.bf16.mxu0 0
    %926 = vmatpush1.bf16.msra.mxu0 0
    %927 = vmatprep.subr.bf16.mxu0 0
    %928 = vmatpush1.bf16.msra.mxu0 0
    %929 = vmatprep.subr.bf16.mxu0 0
    %930 = vmatpush1.bf16.msra.mxu0 0
    %931 = vmatprep.subr.bf16.mxu0 %v911
    %932 = vmatpush1.bf16.msra.mxu0 %v910
    %933 = vmatprep.subr.bf16.mxu0 %v909
    %934 = vmatpush1.bf16.msra.mxu0 %v908
    %935 = vmatprep.subr.bf16.mxu0 %v907
    %936 = vmatpush1.bf16.msra.mxu0 %v906
    %937 = vmatprep.subr.bf16.mxu0 %v905
    %938 = vmatpush1.bf16.msra.mxu0 %v904
    %939 = vmatprep.subr.bf16.mxu0 0
    %940 = vmatpush2.bf16.msra.mxu0 0
    %941 = vmatprep.subr.bf16.mxu0 0
    %942 = vmatpush2.bf16.msra.mxu0 0
    %943 = vmatprep.subr.bf16.mxu0 0
    %944 = vmatpush2.bf16.msra.mxu0 0
    %945 = vmatprep.subr.bf16.mxu0 0
    %946 = vmatpush2.bf16.msra.mxu0 0
    %947 = vmatprep.subr.bf16.mxu0 0
    %948 = vmatpush2.bf16.msra.mxu0 0
    %949 = vmatprep.subr.bf16.mxu0 0
    %950 = vmatpush2.bf16.msra.mxu0 0
    %951 = vmatprep.subr.bf16.mxu0 0
    %952 = vmatpush2.bf16.msra.mxu0 0
    %953 = vmatprep.subr.bf16.mxu0 0
    %954 = vmatpush2.bf16.msra.mxu0 0
    %955 = vmatprep.mubr.bf16.mxu0 0
    %956 = vmatmul.mubr.bf16.gmra.mxu0 %v921
    %v957 = vpop.f32.mrf.mxu0
    %v958 = vadd.f32 %v870, %v957
    %v959 = vpop.f32.mrf.mxu0
    %v960 = vadd.f32 %v874, %v959
    %v961 = vpop.f32.mrf.mxu0
    %v962 = vadd.f32 %v870, %v961
    %v963 = vpop.f32.mrf.mxu0
    %v964 = vadd.f32 %v874, %v963
    %965 = vdwg.mxu0
    %vm966 = vcmp.gt.f32.partialorder %v958, 0.0
    %vm967 = vcmp.gt.f32.partialorder %v960, 0.0
    %vm968 = vcmp.gt.f32.partialorder %v962, 0.0
    %vm969 = vcmp.gt.f32.partialorder %v964, 0.0
    %v970 = vmul.f32 %v958, 0.01
    %v971 = vmul.f32 %v960, 0.01
    %v972 = vmul.f32 %v962, 0.01
    %v973 = vmul.f32 %v964, 0.01
    %v974 = vsel %vm966, %v958, %v970
    %v975 = vsel %vm967, %v960, %v971
    %v976 = vsel %vm968, %v962, %v972
    %v977 = vsel %vm969, %v964, %v973
    %v978 = vpack.c.bf16 %v976, %v974
    %v979 = vpack.c.bf16 %v977, %v975
    %v980 = vld [vmem:[#allocation16] sm:$0xf]
    %v981 = vld [vmem:[#allocation16 + $0x4] sm:$0xf]
    %v982 = vld [vmem:[#allocation16 + $0x8] sm:$0xf]
    %v983 = vld [vmem:[#allocation16 + $0xc] sm:$0xf]
    %v984 = vld [vmem:[#allocation16 + $0x10] sm:$0xf]
    %v985 = vld [vmem:[#allocation16 + $0x14] sm:$0xf]
    %v986 = vld [vmem:[#allocation16 + $0x18] sm:$0xf]
    %v987 = vld [vmem:[#allocation16 + $0x1c] sm:$0xf]
    %v988 = vld [vmem:[#allocation16 + $0x20] sm:$0xf]
    %v989 = vld [vmem:[#allocation16 + $0x24] sm:$0xf]
    %v990 = vld [vmem:[#allocation16 + $0x28] sm:$0xf]
    %v991 = vld [vmem:[#allocation16 + $0x2c] sm:$0xf]
    %v992 = vld [vmem:[#allocation16 + $0x30] sm:$0xf]
    %v993 = vld [vmem:[#allocation16 + $0x34] sm:$0xf]
    %v994 = vld [vmem:[#allocation16 + $0x38] sm:$0xf]
    %v995 = vld [vmem:[#allocation16 + $0x3c] sm:$0xf]
    %v996 = vld [vmem:[#allocation16 + $0x40] sm:$0xf]
    %v997 = vld [vmem:[#allocation16 + $0x44] sm:$0xf]
    %s998 = scalar_lea.vmem [#allocation6], 5
    %v999 = vld [vmem:[%s998] ss:$8 sm:$0x3]
    %v1001 = vlaneseq
    %v1002 = vshrl.u32 %v1001, 7
    %v1003 = vsub.s32 0, %v1002
    %v1004 = vrot.slane %v999, %v1003
    %v1024 = vunpack.c.l.b16 %v980
    %v1025 = vunpack.c.l.b16 %v981
    %v1026 = vunpack.c.l.b16 %v982
    %v1027 = vunpack.c.l.b16 %v983
    %v1028 = vunpack.c.l.b16 %v984
    %v1029 = vunpack.c.l.b16 %v985
    %v1030 = vunpack.c.l.b16 %v986
    %v1031 = vunpack.c.l.b16 %v987
    %v1032 = vunpack.c.l.b16 %v988
    %v1033 = vunpack.c.l.b16 %v989
    %v1034 = vunpack.c.l.b16 %v990
    %v1035 = vunpack.c.l.b16 %v991
    %v1036 = vunpack.c.l.b16 %v992
    %v1037 = vunpack.c.l.b16 %v993
    %v1038 = vunpack.c.l.b16 %v994
    %v1039 = vunpack.c.l.b16 %v995
    %v1040 = vunpack.c.l.b16 %v996
    %v1041 = vunpack.c.l.b16 %v997
    %v1042 = vpack.c.b16 %v1025, %v1024
    %v1043 = vpack.c.b16 %v1027, %v1026
    %v1044 = vpack.c.b16 %v1029, %v1028
    %v1045 = vpack.c.b16 %v1031, %v1030
    %v1046 = vpack.c.b16 %v1033, %v1032
    %v1047 = vpack.c.b16 %v1035, %v1034
    %v1048 = vpack.c.b16 %v1037, %v1036
    %v1049 = vpack.c.b16 %v1039, %v1038
    %v1050 = vpack.c.b16 %v1041, %v1040
    %v1061 = vsel %vm809, %v979, 0
    %1063 = vmatprep.subr.bf16.mxu0 0
    %1064 = vmatpush1.bf16.msra.mxu0 %v1049
    %1065 = vmatprep.subr.bf16.mxu0 0
    %1066 = vmatpush1.bf16.msra.mxu0 %v1048
    %1067 = vmatprep.subr.bf16.mxu0 0
    %1068 = vmatpush1.bf16.msra.mxu0 %v1047
    %1069 = vmatprep.subr.bf16.mxu0 0
    %1070 = vmatpush1.bf16.msra.mxu0 %v1046
    %1071 = vmatprep.subr.bf16.mxu0 0
    %1072 = vmatpush1.bf16.msra.mxu0 %v1045
    %1073 = vmatprep.subr.bf16.mxu0 0
    %1074 = vmatpush1.bf16.msra.mxu0 %v1044
    %1075 = vmatprep.subr.bf16.mxu0 0
    %1076 = vmatpush1.bf16.msra.mxu0 %v1043
    %1077 = vmatprep.subr.bf16.mxu0 0
    %1078 = vmatpush1.bf16.msra.mxu0 %v1042
    %1079 = vmatprep.subr.bf16.mxu0 0
    %1080 = vmatpush2.bf16.msra.mxu0 0
    %1081 = vmatprep.subr.bf16.mxu0 0
    %1082 = vmatpush2.bf16.msra.mxu0 0
    %1083 = vmatprep.subr.bf16.mxu0 0
    %1084 = vmatpush2.bf16.msra.mxu0 0
    %1085 = vmatprep.subr.bf16.mxu0 0
    %1086 = vmatpush2.bf16.msra.mxu0 0
    %1087 = vmatprep.subr.bf16.mxu0 0
    %1088 = vmatpush2.bf16.msra.mxu0 0
    %1089 = vmatprep.subr.bf16.mxu0 0
    %1090 = vmatpush2.bf16.msra.mxu0 0
    %1091 = vmatprep.subr.bf16.mxu0 0
    %1092 = vmatpush2.bf16.msra.mxu0 0
    %1093 = vmatprep.subr.bf16.mxu0 0
    %1094 = vmatpush2.bf16.msra.mxu0 %v1050
    %1095 = vmatprep.mubr.bf16.mxu0 %v1061
    %1096 = vmatmul.mubr.bf16.gmra.mxu0 %v978
    %v1097 = vpop.f32.mrf.mxu0
    %v1098 = vadd.f32 %v1004, %v1097
    %v1099 = vpop.f32.mrf.mxu0
    %v1100 = vpop.f32.mrf.mxu0
    %v1101 = vadd.f32 %v1004, %v1100
    %v1102 = vpop.f32.mrf.mxu0
    %1103 = vdwg.mxu0
    %v1104 = vtanh.pop %v1098
    %v1105 = vtanh.pop %v1101
    %v1106 = vmul.f32 %v854, 1.442695
    %v1107 = vpow.pop %v1106
    %v1108 = vmul.f32 %v855, 1.442695
    %v1109 = vpow.pop %v1108
    %1112 = vrot.lane.b32.xlu0 %v1107, 64
    %v1113 = vpop.permute.xlu0 %1112
    %1114 = vrot.lane.b32.xlu0 %v1109, 64
    %v1115 = vpop.permute.xlu0 %1114
    %v1118 = vmul.f32 %v603, %v1113
    %v1119 = vmul.f32 %v604, %v1115
    %v1120 = vmul.f32 %v1104, 1.442695
    %v1121 = vpow.pop %v1120
    %v1122 = vmul.f32 %v1105, 1.442695
    %v1123 = vpow.pop %v1122
    %v1124 = vmul.f32 %v603, %v1121
    %v1125 = vmul.f32 %v604, %v1123
    %v1126 = vpack.c.bf16 %v1119, %v1118
    %v1127 = vld [vmem:[#allocation12] sm:$0xff]
    %v1128 = vld [vmem:[#allocation12 + $0x8] sm:$0xff]
    %v1129 = vld [vmem:[#allocation12 + $0x10] sm:$0xff]
    %v1130 = vld [vmem:[#allocation12 + $0x18] sm:$0xff]
    %v1131 = vld [vmem:[#allocation12 + $0x20] sm:$0xff]
    %v1132 = vld [vmem:[#allocation12 + $0x28] sm:$0xff]
    %v1133 = vld [vmem:[#allocation12 + $0x30] sm:$0xff]
    %v1134 = vld [vmem:[#allocation12 + $0x38] sm:$0xff]
    %s1135 = scalar_lea.vmem [#allocation6], 2
    %v1136 = vld [vmem:[%s1135] ss:$8 sm:$0x3]
    %v1138 = vlaneseq
    %v1139 = vshrl.u32 %v1138, 7
    %v1140 = vsub.s32 0, %v1139
    %v1141 = vrot.slane %v1136, %v1140
    %v1142 = vlaneseq
    %v1143 = vshrl.u32 %v1142, 7
    %v1144 = vsub.s32 1, %v1143
    %v1145 = vrot.slane %v1136, %v1144
    %1149 = vrot.lane.b32.xlu0 %v1126, 64
    %v1150 = vpop.permute.xlu0 %1149
    %v1159 = vunpack.c.l.b16 %v1127
    %v1160 = vunpack.c.h.b16 %v1127
    %v1161 = vunpack.c.l.b16 %v1128
    %v1162 = vunpack.c.h.b16 %v1128
    %v1163 = vunpack.c.l.b16 %v1129
    %v1164 = vunpack.c.h.b16 %v1129
    %v1165 = vunpack.c.l.b16 %v1130
    %v1166 = vunpack.c.h.b16 %v1130
    %v1167 = vunpack.c.l.b16 %v1131
    %v1168 = vunpack.c.h.b16 %v1131
    %v1169 = vunpack.c.l.b16 %v1132
    %v1170 = vunpack.c.h.b16 %v1132
    %v1171 = vunpack.c.l.b16 %v1133
    %v1172 = vunpack.c.h.b16 %v1133
    %v1173 = vunpack.c.l.b16 %v1134
    %v1174 = vunpack.c.h.b16 %v1134
    %v1175 = vpack.c.b16 %v1161, %v1159
    %v1176 = vpack.c.b16 %v1162, %v1160
    %v1177 = vpack.c.b16 %v1165, %v1163
    %v1178 = vpack.c.b16 %v1166, %v1164
    %v1179 = vpack.c.b16 %v1169, %v1167
    %v1180 = vpack.c.b16 %v1170, %v1168
    %v1181 = vpack.c.b16 %v1173, %v1171
    %v1182 = vpack.c.b16 %v1174, %v1172
    %v1192 = vsel %vm668, %v1150, 0
    %1194 = vmatprep.subr.bf16.mxu0 0
    %1195 = vmatpush1.bf16.msra.mxu0 0
    %1196 = vmatprep.subr.bf16.mxu0 0
    %1197 = vmatpush1.bf16.msra.mxu0 0
    %1198 = vmatprep.subr.bf16.mxu0 0
    %1199 = vmatpush1.bf16.msra.mxu0 0
    %1200 = vmatprep.subr.bf16.mxu0 0
    %1201 = vmatpush1.bf16.msra.mxu0 0
    %1202 = vmatprep.subr.bf16.mxu0 %v1182
    %1203 = vmatpush1.bf16.msra.mxu0 %v1181
    %1204 = vmatprep.subr.bf16.mxu0 %v1180
    %1205 = vmatpush1.bf16.msra.mxu0 %v1179
    %1206 = vmatprep.subr.bf16.mxu0 %v1178
    %1207 = vmatpush1.bf16.msra.mxu0 %v1177
    %1208 = vmatprep.subr.bf16.mxu0 %v1176
    %1209 = vmatpush1.bf16.msra.mxu0 %v1175
    %1210 = vmatprep.subr.bf16.mxu0 0
    %1211 = vmatpush2.bf16.msra.mxu0 0
    %1212 = vmatprep.subr.bf16.mxu0 0
    %1213 = vmatpush2.bf16.msra.mxu0 0
    %1214 = vmatprep.subr.bf16.mxu0 0
    %1215 = vmatpush2.bf16.msra.mxu0 0
    %1216 = vmatprep.subr.bf16.mxu0 0
    %1217 = vmatpush2.bf16.msra.mxu0 0
    %1218 = vmatprep.subr.bf16.mxu0 0
    %1219 = vmatpush2.bf16.msra.mxu0 0
    %1220 = vmatprep.subr.bf16.mxu0 0
    %1221 = vmatpush2.bf16.msra.mxu0 0
    %1222 = vmatprep.subr.bf16.mxu0 0
    %1223 = vmatpush2.bf16.msra.mxu0 0
    %1224 = vmatprep.subr.bf16.mxu0 0
    %1225 = vmatpush2.bf16.msra.mxu0 0
    %1226 = vmatprep.mubr.bf16.mxu0 0
    %1227 = vmatmul.mubr.bf16.gmra.mxu0 %v1192
    %v1228 = vpop.f32.mrf.mxu0
    %v1229 = vadd.f32 %v1141, %v1228
    %v1230 = vpop.f32.mrf.mxu0
    %v1231 = vadd.f32 %v1145, %v1230
    %v1232 = vpop.f32.mrf.mxu0
    %v1233 = vadd.f32 %v1141, %v1232
    %v1234 = vpop.f32.mrf.mxu0
    %v1235 = vadd.f32 %v1145, %v1234
    %1236 = vdwg.mxu0
    %vm1237 = vcmp.gt.f32.partialorder %v1229, 0.0
    %vm1238 = vcmp.gt.f32.partialorder %v1231, 0.0
    %vm1239 = vcmp.gt.f32.partialorder %v1233, 0.0
    %vm1240 = vcmp.gt.f32.partialorder %v1235, 0.0
    %v1241 = vmul.f32 %v1229, 0.01
    %v1242 = vmul.f32 %v1231, 0.01
    %v1243 = vmul.f32 %v1233, 0.01
    %v1244 = vmul.f32 %v1235, 0.01
    %v1245 = vsel %vm1237, %v1229, %v1241
    %v1246 = vsel %vm1238, %v1231, %v1242
    %v1247 = vsel %vm1239, %v1233, %v1243
    %v1248 = vsel %vm1240, %v1235, %v1244
    %v1249 = vpack.c.bf16 %v1247, %v1245
    %v1250 = vpack.c.bf16 %v1248, %v1246
    %v1251 = vld [vmem:[#allocation18] sm:$0xf]
    %v1252 = vld [vmem:[#allocation18 + $0x4] sm:$0xf]
    %v1253 = vld [vmem:[#allocation18 + $0x8] sm:$0xf]
    %v1254 = vld [vmem:[#allocation18 + $0xc] sm:$0xf]
    %v1255 = vld [vmem:[#allocation18 + $0x10] sm:$0xf]
    %v1256 = vld [vmem:[#allocation18 + $0x14] sm:$0xf]
    %v1257 = vld [vmem:[#allocation18 + $0x18] sm:$0xf]
    %v1258 = vld [vmem:[#allocation18 + $0x1c] sm:$0xf]
    %v1259 = vld [vmem:[#allocation18 + $0x20] sm:$0xf]
    %v1260 = vld [vmem:[#allocation18 + $0x24] sm:$0xf]
    %v1261 = vld [vmem:[#allocation18 + $0x28] sm:$0xf]
    %v1262 = vld [vmem:[#allocation18 + $0x2c] sm:$0xf]
    %v1263 = vld [vmem:[#allocation18 + $0x30] sm:$0xf]
    %v1264 = vld [vmem:[#allocation18 + $0x34] sm:$0xf]
    %v1265 = vld [vmem:[#allocation18 + $0x38] sm:$0xf]
    %v1266 = vld [vmem:[#allocation18 + $0x3c] sm:$0xf]
    %v1267 = vld [vmem:[#allocation18 + $0x40] sm:$0xf]
    %v1268 = vld [vmem:[#allocation18 + $0x44] sm:$0xf]
    %s1269 = scalar_lea.vmem [#allocation6], 6
    %v1270 = vld [vmem:[%s1269] ss:$8 sm:$0x3]
    %v1272 = vlaneseq
    %v1273 = vshrl.u32 %v1272, 7
    %v1274 = vsub.s32 0, %v1273
    %v1275 = vrot.slane %v1270, %v1274
    %v1295 = vunpack.c.l.b16 %v1251
    %v1296 = vunpack.c.l.b16 %v1252
    %v1297 = vunpack.c.l.b16 %v1253
    %v1298 = vunpack.c.l.b16 %v1254
    %v1299 = vunpack.c.l.b16 %v1255
    %v1300 = vunpack.c.l.b16 %v1256
    %v1301 = vunpack.c.l.b16 %v1257
    %v1302 = vunpack.c.l.b16 %v1258
    %v1303 = vunpack.c.l.b16 %v1259
    %v1304 = vunpack.c.l.b16 %v1260
    %v1305 = vunpack.c.l.b16 %v1261
    %v1306 = vunpack.c.l.b16 %v1262
    %v1307 = vunpack.c.l.b16 %v1263
    %v1308 = vunpack.c.l.b16 %v1264
    %v1309 = vunpack.c.l.b16 %v1265
    %v1310 = vunpack.c.l.b16 %v1266
    %v1311 = vunpack.c.l.b16 %v1267
    %v1312 = vunpack.c.l.b16 %v1268
    %v1313 = vpack.c.b16 %v1296, %v1295
    %v1314 = vpack.c.b16 %v1298, %v1297
    %v1315 = vpack.c.b16 %v1300, %v1299
    %v1316 = vpack.c.b16 %v1302, %v1301
    %v1317 = vpack.c.b16 %v1304, %v1303
    %v1318 = vpack.c.b16 %v1306, %v1305
    %v1319 = vpack.c.b16 %v1308, %v1307
    %v1320 = vpack.c.b16 %v1310, %v1309
    %v1321 = vpack.c.b16 %v1312, %v1311
    %v1332 = vsel %vm809, %v1250, 0
    %1334 = vmatprep.subr.bf16.mxu0 0
    %1335 = vmatpush1.bf16.msra.mxu0 %v1320
    %1336 = vmatprep.subr.bf16.mxu0 0
    %1337 = vmatpush1.bf16.msra.mxu0 %v1319
    %1338 = vmatprep.subr.bf16.mxu0 0
    %1339 = vmatpush1.bf16.msra.mxu0 %v1318
    %1340 = vmatprep.subr.bf16.mxu0 0
    %1341 = vmatpush1.bf16.msra.mxu0 %v1317
    %1342 = vmatprep.subr.bf16.mxu0 0
    %1343 = vmatpush1.bf16.msra.mxu0 %v1316
    %1344 = vmatprep.subr.bf16.mxu0 0
    %1345 = vmatpush1.bf16.msra.mxu0 %v1315
    %1346 = vmatprep.subr.bf16.mxu0 0
    %1347 = vmatpush1.bf16.msra.mxu0 %v1314
    %1348 = vmatprep.subr.bf16.mxu0 0
    %1349 = vmatpush1.bf16.msra.mxu0 %v1313
    %1350 = vmatprep.subr.bf16.mxu0 0
    %1351 = vmatpush2.bf16.msra.mxu0 0
    %1352 = vmatprep.subr.bf16.mxu0 0
    %1353 = vmatpush2.bf16.msra.mxu0 0
    %1354 = vmatprep.subr.bf16.mxu0 0
    %1355 = vmatpush2.bf16.msra.mxu0 0
    %1356 = vmatprep.subr.bf16.mxu0 0
    %1357 = vmatpush2.bf16.msra.mxu0 0
    %1358 = vmatprep.subr.bf16.mxu0 0
    %1359 = vmatpush2.bf16.msra.mxu0 0
    %1360 = vmatprep.subr.bf16.mxu0 0
    %1361 = vmatpush2.bf16.msra.mxu0 0
    %1362 = vmatprep.subr.bf16.mxu0 0
    %1363 = vmatpush2.bf16.msra.mxu0 0
    %1364 = vmatprep.subr.bf16.mxu0 0
    %1365 = vmatpush2.bf16.msra.mxu0 %v1321
    %1366 = vmatprep.mubr.bf16.mxu0 %v1332
    %1367 = vmatmul.mubr.bf16.gmra.mxu0 %v1249
    %v1368 = vpop.f32.mrf.mxu0
    %v1369 = vadd.f32 %v1275, %v1368
    %v1370 = vpop.f32.mrf.mxu0
    %v1371 = vpop.f32.mrf.mxu0
    %v1372 = vadd.f32 %v1275, %v1371
    %v1373 = vpop.f32.mrf.mxu0
    %1374 = vdwg.mxu0
    %v1375 = vtanh.pop %v1369
    %v1376 = vtanh.pop %v1372
    %v1377 = vpack.c.bf16 %v1125, %v1124
    %v1378 = vld [vmem:[#allocation13] sm:$0xff]
    %v1379 = vld [vmem:[#allocation13 + $0x8] sm:$0xff]
    %v1380 = vld [vmem:[#allocation13 + $0x10] sm:$0xff]
    %v1381 = vld [vmem:[#allocation13 + $0x18] sm:$0xff]
    %v1382 = vld [vmem:[#allocation13 + $0x20] sm:$0xff]
    %v1383 = vld [vmem:[#allocation13 + $0x28] sm:$0xff]
    %v1384 = vld [vmem:[#allocation13 + $0x30] sm:$0xff]
    %v1385 = vld [vmem:[#allocation13 + $0x38] sm:$0xff]
    %s1386 = scalar_lea.vmem [#allocation6], 3
    %v1387 = vld [vmem:[%s1386] ss:$8 sm:$0x3]
    %v1389 = vlaneseq
    %v1390 = vshrl.u32 %v1389, 7
    %v1391 = vsub.s32 0, %v1390
    %v1392 = vrot.slane %v1387, %v1391
    %v1393 = vlaneseq
    %v1394 = vshrl.u32 %v1393, 7
    %v1395 = vsub.s32 1, %v1394
    %v1396 = vrot.slane %v1387, %v1395
    %v1407 = vunpack.c.l.b16 %v1378
    %v1408 = vunpack.c.h.b16 %v1378
    %v1409 = vunpack.c.l.b16 %v1379
    %v1410 = vunpack.c.h.b16 %v1379
    %v1411 = vunpack.c.l.b16 %v1380
    %v1412 = vunpack.c.h.b16 %v1380
    %v1413 = vunpack.c.l.b16 %v1381
    %v1414 = vunpack.c.h.b16 %v1381
    %v1415 = vunpack.c.l.b16 %v1382
    %v1416 = vunpack.c.h.b16 %v1382
    %v1417 = vunpack.c.l.b16 %v1383
    %v1418 = vunpack.c.h.b16 %v1383
    %v1419 = vunpack.c.l.b16 %v1384
    %v1420 = vunpack.c.h.b16 %v1384
    %v1421 = vunpack.c.l.b16 %v1385
    %v1422 = vunpack.c.h.b16 %v1385
    %v1423 = vpack.c.b16 %v1409, %v1407
    %v1424 = vpack.c.b16 %v1410, %v1408
    %v1425 = vpack.c.b16 %v1413, %v1411
    %v1426 = vpack.c.b16 %v1414, %v1412
    %v1427 = vpack.c.b16 %v1417, %v1415
    %v1428 = vpack.c.b16 %v1418, %v1416
    %v1429 = vpack.c.b16 %v1421, %v1419
    %v1430 = vpack.c.b16 %v1422, %v1420
    %v1440 = vsel %vm668, %v1377, 0
    %1442 = vmatprep.subr.bf16.mxu0 0
    %1443 = vmatpush1.bf16.msra.mxu0 0
    %1444 = vmatprep.subr.bf16.mxu0 0
    %1445 = vmatpush1.bf16.msra.mxu0 0
    %1446 = vmatprep.subr.bf16.mxu0 0
    %1447 = vmatpush1.bf16.msra.mxu0 0
    %1448 = vmatprep.subr.bf16.mxu0 0
    %1449 = vmatpush1.bf16.msra.mxu0 0
    %1450 = vmatprep.subr.bf16.mxu0 %v1430
    %1451 = vmatpush1.bf16.msra.mxu0 %v1429
    %1452 = vmatprep.subr.bf16.mxu0 %v1428
    %1453 = vmatpush1.bf16.msra.mxu0 %v1427
    %1454 = vmatprep.subr.bf16.mxu0 %v1426
    %1455 = vmatpush1.bf16.msra.mxu0 %v1425
    %1456 = vmatprep.subr.bf16.mxu0 %v1424
    %1457 = vmatpush1.bf16.msra.mxu0 %v1423
    %1458 = vmatprep.subr.bf16.mxu0 0
    %1459 = vmatpush2.bf16.msra.mxu0 0
    %1460 = vmatprep.subr.bf16.mxu0 0
    %1461 = vmatpush2.bf16.msra.mxu0 0
    %1462 = vmatprep.subr.bf16.mxu0 0
    %1463 = vmatpush2.bf16.msra.mxu0 0
    %1464 = vmatprep.subr.bf16.mxu0 0
    %1465 = vmatpush2.bf16.msra.mxu0 0
    %1466 = vmatprep.subr.bf16.mxu0 0
    %1467 = vmatpush2.bf16.msra.mxu0 0
    %1468 = vmatprep.subr.bf16.mxu0 0
    %1469 = vmatpush2.bf16.msra.mxu0 0
    %1470 = vmatprep.subr.bf16.mxu0 0
    %1471 = vmatpush2.bf16.msra.mxu0 0
    %1472 = vmatprep.subr.bf16.mxu0 0
    %1473 = vmatpush2.bf16.msra.mxu0 0
    %1474 = vmatprep.mubr.bf16.mxu0 0
    %1475 = vmatmul.mubr.bf16.gmra.mxu0 %v1440
    %v1476 = vpop.f32.mrf.mxu0
    %v1477 = vadd.f32 %v1392, %v1476
    %v1478 = vpop.f32.mrf.mxu0
    %v1479 = vadd.f32 %v1396, %v1478
    %v1480 = vpop.f32.mrf.mxu0
    %v1481 = vadd.f32 %v1392, %v1480
    %v1482 = vpop.f32.mrf.mxu0
    %v1483 = vadd.f32 %v1396, %v1482
    %1484 = vdwg.mxu0
    %vm1485 = vcmp.gt.f32.partialorder %v1477, 0.0
    %vm1486 = vcmp.gt.f32.partialorder %v1479, 0.0
    %vm1487 = vcmp.gt.f32.partialorder %v1481, 0.0
    %vm1488 = vcmp.gt.f32.partialorder %v1483, 0.0
    %v1489 = vmul.f32 %v1477, 0.01
    %v1490 = vmul.f32 %v1479, 0.01
    %v1491 = vmul.f32 %v1481, 0.01
    %v1492 = vmul.f32 %v1483, 0.01
    %v1493 = vsel %vm1485, %v1477, %v1489
    %v1494 = vsel %vm1486, %v1479, %v1490
    %v1495 = vsel %vm1487, %v1481, %v1491
    %v1496 = vsel %vm1488, %v1483, %v1492
    %v1497 = vpack.c.bf16 %v1495, %v1493
    %v1498 = vpack.c.bf16 %v1496, %v1494
    %v1499 = vld [vmem:[#allocation19] sm:$0xf]
    %v1500 = vld [vmem:[#allocation19 + $0x4] sm:$0xf]
    %v1501 = vld [vmem:[#allocation19 + $0x8] sm:$0xf]
    %v1502 = vld [vmem:[#allocation19 + $0xc] sm:$0xf]
    %v1503 = vld [vmem:[#allocation19 + $0x10] sm:$0xf]
    %v1504 = vld [vmem:[#allocation19 + $0x14] sm:$0xf]
    %v1505 = vld [vmem:[#allocation19 + $0x18] sm:$0xf]
    %v1506 = vld [vmem:[#allocation19 + $0x1c] sm:$0xf]
    %v1507 = vld [vmem:[#allocation19 + $0x20] sm:$0xf]
    %v1508 = vld [vmem:[#allocation19 + $0x24] sm:$0xf]
    %v1509 = vld [vmem:[#allocation19 + $0x28] sm:$0xf]
    %v1510 = vld [vmem:[#allocation19 + $0x2c] sm:$0xf]
    %v1511 = vld [vmem:[#allocation19 + $0x30] sm:$0xf]
    %v1512 = vld [vmem:[#allocation19 + $0x34] sm:$0xf]
    %v1513 = vld [vmem:[#allocation19 + $0x38] sm:$0xf]
    %v1514 = vld [vmem:[#allocation19 + $0x3c] sm:$0xf]
    %v1515 = vld [vmem:[#allocation19 + $0x40] sm:$0xf]
    %v1516 = vld [vmem:[#allocation19 + $0x44] sm:$0xf]
    %s1517 = scalar_lea.vmem [#allocation6], 7
    %v1518 = vld [vmem:[%s1517] ss:$8 sm:$0x3]
    %v1520 = vlaneseq
    %v1521 = vshrl.u32 %v1520, 7
    %v1522 = vsub.s32 0, %v1521
    %v1523 = vrot.slane %v1518, %v1522
    %v1543 = vunpack.c.l.b16 %v1499
    %v1544 = vunpack.c.l.b16 %v1500
    %v1545 = vunpack.c.l.b16 %v1501
    %v1546 = vunpack.c.l.b16 %v1502
    %v1547 = vunpack.c.l.b16 %v1503
    %v1548 = vunpack.c.l.b16 %v1504
    %v1549 = vunpack.c.l.b16 %v1505
    %v1550 = vunpack.c.l.b16 %v1506
    %v1551 = vunpack.c.l.b16 %v1507
    %v1552 = vunpack.c.l.b16 %v1508
    %v1553 = vunpack.c.l.b16 %v1509
    %v1554 = vunpack.c.l.b16 %v1510
    %v1555 = vunpack.c.l.b16 %v1511
    %v1556 = vunpack.c.l.b16 %v1512
    %v1557 = vunpack.c.l.b16 %v1513
    %v1558 = vunpack.c.l.b16 %v1514
    %v1559 = vunpack.c.l.b16 %v1515
    %v1560 = vunpack.c.l.b16 %v1516
    %v1561 = vpack.c.b16 %v1544, %v1543
    %v1562 = vpack.c.b16 %v1546, %v1545
    %v1563 = vpack.c.b16 %v1548, %v1547
    %v1564 = vpack.c.b16 %v1550, %v1549
    %v1565 = vpack.c.b16 %v1552, %v1551
    %v1566 = vpack.c.b16 %v1554, %v1553
    %v1567 = vpack.c.b16 %v1556, %v1555
    %v1568 = vpack.c.b16 %v1558, %v1557
    %v1569 = vpack.c.b16 %v1560, %v1559
    %v1580 = vsel %vm809, %v1498, 0
    %1582 = vmatprep.subr.bf16.mxu0 0
    %1583 = vmatpush1.bf16.msra.mxu0 %v1568
    %1584 = vmatprep.subr.bf16.mxu0 0
    %1585 = vmatpush1.bf16.msra.mxu0 %v1567
    %1586 = vmatprep.subr.bf16.mxu0 0
    %1587 = vmatpush1.bf16.msra.mxu0 %v1566
    %1588 = vmatprep.subr.bf16.mxu0 0
    %1589 = vmatpush1.bf16.msra.mxu0 %v1565
    %1590 = vmatprep.subr.bf16.mxu0 0
    %1591 = vmatpush1.bf16.msra.mxu0 %v1564
    %1592 = vmatprep.subr.bf16.mxu0 0
    %1593 = vmatpush1.bf16.msra.mxu0 %v1563
    %1594 = vmatprep.subr.bf16.mxu0 0
    %1595 = vmatpush1.bf16.msra.mxu0 %v1562
    %1596 = vmatprep.subr.bf16.mxu0 0
    %1597 = vmatpush1.bf16.msra.mxu0 %v1561
    %1598 = vmatprep.subr.bf16.mxu0 0
    %1599 = vmatpush2.bf16.msra.mxu0 0
    %1600 = vmatprep.subr.bf16.mxu0 0
    %1601 = vmatpush2.bf16.msra.mxu0 0
    %1602 = vmatprep.subr.bf16.mxu0 0
    %1603 = vmatpush2.bf16.msra.mxu0 0
    %1604 = vmatprep.subr.bf16.mxu0 0
    %1605 = vmatpush2.bf16.msra.mxu0 0
    %1606 = vmatprep.subr.bf16.mxu0 0
    %1607 = vmatpush2.bf16.msra.mxu0 0
    %1608 = vmatprep.subr.bf16.mxu0 0
    %1609 = vmatpush2.bf16.msra.mxu0 0
    %1610 = vmatprep.subr.bf16.mxu0 0
    %1611 = vmatpush2.bf16.msra.mxu0 0
    %1612 = vmatprep.subr.bf16.mxu0 0
    %1613 = vmatpush2.bf16.msra.mxu0 %v1569
    %1614 = vmatprep.mubr.bf16.mxu0 %v1580
    %1615 = vmatmul.mubr.bf16.gmra.mxu0 %v1497
    %v1616 = vpop.f32.mrf.mxu0
    %v1617 = vadd.f32 %v1523, %v1616
    %v1618 = vpop.f32.mrf.mxu0
    %v1619 = vpop.f32.mrf.mxu0
    %v1620 = vadd.f32 %v1523, %v1619
    %v1621 = vpop.f32.mrf.mxu0
    %1622 = vdwg.mxu0
    %v1623 = vtanh.pop %v1617
    %v1624 = vtanh.pop %v1620
    %1627 = vrot.lane.b32.xlu0 %v1623, 64
    %v1628 = vpop.permute.xlu0 %1627
    %1629 = vrot.lane.b32.xlu0 %v1624, 64
    %v1630 = vpop.permute.xlu0 %1629
    %v1633 = vadd.f32 %v1118, %v1628
    %v1634 = vadd.f32 %v1119, %v1630
    %1637 = vrot.lane.b32.xlu0 %v605, 64
    %v1638 = vpop.permute.xlu0 %1637
    %1639 = vrot.lane.b32.xlu0 %v606, 64
    %v1640 = vpop.permute.xlu0 %1639
    %v1643 = vmul.f32 %v1633, %v1638
    %v1644 = vmul.f32 %v1634, %v1640
    %v1645 = vpack.c.bf16 %v1644, %v1643
    %v1646 = vld [vmem:[#allocation7] sm:$0xf]
    %v1647 = vld [vmem:[#allocation7 + $0x4] sm:$0xf]
    %v1648 = vld [vmem:[#allocation7 + $0x8] sm:$0xf]
    %v1649 = vld [vmem:[#allocation7 + $0xc] sm:$0xf]
    %v1650 = vld [vmem:[#allocation7 + $0x10] sm:$0xf]
    %v1651 = vld [vmem:[#allocation7 + $0x14] sm:$0xf]
    %v1652 = vld [vmem:[#allocation7 + $0x18] sm:$0xf]
    %v1653 = vld [vmem:[#allocation7 + $0x1c] sm:$0xf]
    %v1654 = vadd.f32 %v1124, %v1375
    %v1655 = vadd.f32 %v1125, %v1376
    %v1656 = vmul.f32 %v1654, 0.999995
    %v1657 = vmul.f32 %v1655, 0.999995
    %v1658 = vmax.f32 %v1656, 0.0
    %v1659 = vmax.f32 %v1657, 0.0
    %v1660 = vpack.c.bf16 %v1659, %v1658
    %v1661 = vld [vmem:[#allocation21] sm:$0xf]
    %v1662 = vld [vmem:[#allocation21 + $0x4] sm:$0xf]
    %v1663 = vld [vmem:[#allocation21 + $0x8] sm:$0xf]
    %v1664 = vld [vmem:[#allocation21 + $0xc] sm:$0xf]
    %s1665 = scalar_lea.vmem [#allocation6], 16
    %v1666 = vld [vmem:[%s1665] ss:$8 sm:$0x3]
    %v1668 = vlaneseq
    %v1669 = vshrl.u32 %v1668, 7
    %v1670 = vsub.s32 0, %v1669
    %v1671 = vrot.slane %v1666, %v1670
    %v1677 = vunpack.c.l.b16 %v1661
    %v1678 = vunpack.c.l.b16 %v1662
    %v1679 = vunpack.c.l.b16 %v1663
    %v1680 = vunpack.c.l.b16 %v1664
    %v1681 = vpack.c.b16 %v1678, %v1677
    %v1682 = vpack.c.b16 %v1680, %v1679
    %vm1685 = vcmask 261120
    %v1687 = vsel %vm1685, %v1660, 0
    %1689 = vmatprep.subr.bf16.mxu0 0
    %1690 = vmatpush1.bf16.msra.mxu0 0
    %1691 = vmatprep.subr.bf16.mxu0 0
    %1692 = vmatpush1.bf16.msra.mxu0 0
    %1693 = vmatprep.subr.bf16.mxu0 0
    %1694 = vmatpush1.bf16.msra.mxu0 0
    %1695 = vmatprep.subr.bf16.mxu0 0
    %1696 = vmatpush1.bf16.msra.mxu0 0
    %1697 = vmatprep.subr.bf16.mxu0 0
    %1698 = vmatpush1.bf16.msra.mxu0 0
    %1699 = vmatprep.subr.bf16.mxu0 0
    %1700 = vmatpush1.bf16.msra.mxu0 0
    %1701 = vmatprep.subr.bf16.mxu0 0
    %1702 = vmatpush1.bf16.msra.mxu0 %v1682
    %1703 = vmatprep.subr.bf16.mxu0 0
    %1704 = vmatpush1.bf16.msra.mxu0 %v1681
    %1705 = vmatprep.subr.bf16.mxu0 0
    %1706 = vmatpush2.bf16.msra.mxu0 0
    %1707 = vmatprep.subr.bf16.mxu0 0
    %1708 = vmatpush2.bf16.msra.mxu0 0
    %1709 = vmatprep.subr.bf16.mxu0 0
    %1710 = vmatpush2.bf16.msra.mxu0 0
    %1711 = vmatprep.subr.bf16.mxu0 0
    %1712 = vmatpush2.bf16.msra.mxu0 0
    %1713 = vmatprep.subr.bf16.mxu0 0
    %1714 = vmatpush2.bf16.msra.mxu0 0
    %1715 = vmatprep.subr.bf16.mxu0 0
    %1716 = vmatpush2.bf16.msra.mxu0 0
    %1717 = vmatprep.subr.bf16.mxu0 0
    %1718 = vmatpush2.bf16.msra.mxu0 0
    %1719 = vmatprep.subr.bf16.mxu0 0
    %1720 = vmatpush2.bf16.msra.mxu0 0
    %1721 = vmatprep.mubr.bf16.mxu0 0
    %1722 = vmatmul.mubr.bf16.gmra.mxu0 %v1687
    %v1723 = vpop.f32.mrf.mxu0
    %v1724 = vadd.f32 %v1671, %v1723
    %v1725 = vpop.f32.mrf.mxu0
    %v1726 = vpop.f32.mrf.mxu0
    %v1727 = vadd.f32 %v1671, %v1726
    %v1728 = vpop.f32.mrf.mxu0
    %1729 = vdwg.mxu0
    %vm1730 = vcmp.gt.f32.partialorder %v1724, 0.0
    %vm1731 = vcmp.gt.f32.partialorder %v1727, 0.0
    %v1732 = vmul.f32 %v1724, 0.01
    %v1733 = vmul.f32 %v1727, 0.01
    %v1734 = vsel %vm1730, %v1724, %v1732
    %v1735 = vsel %vm1731, %v1727, %v1733
    %v1736 = vpack.c.bf16 %v1735, %v1734
    %v1737 = vld [vmem:[#allocation27] sm:$0xf]
    %v1738 = vld [vmem:[#allocation27 + $0x4] sm:$0xf]
    %v1739 = vld [vmem:[#allocation27 + $0x8] sm:$0xf]
    %v1740 = vld [vmem:[#allocation27 + $0xc] sm:$0xf]
    %v1741 = vld [vmem:[#allocation27 + $0x10] sm:$0xf]
    %v1742 = vld [vmem:[#allocation27 + $0x14] sm:$0xf]
    %v1743 = vld [vmem:[#allocation27 + $0x18] sm:$0xf]
    %v1744 = vld [vmem:[#allocation27 + $0x1c] sm:$0xf]
    %v1745 = vld [vmem:[#allocation27 + $0x20] sm:$0xf]
    %v1746 = vld [vmem:[#allocation27 + $0x24] sm:$0xf]
    %s1747 = scalar_lea.vmem [#allocation6], 20
    %v1748 = vld [vmem:[%s1747] ss:$8 sm:$0x3]
    %v1750 = vlaneseq
    %v1751 = vshrl.u32 %v1750, 7
    %v1752 = vsub.s32 0, %v1751
    %v1753 = vrot.slane %v1748, %v1752
    %v1765 = vunpack.c.l.b16 %v1737
    %v1766 = vunpack.c.l.b16 %v1738
    %v1767 = vunpack.c.l.b16 %v1739
    %v1768 = vunpack.c.l.b16 %v1740
    %v1769 = vunpack.c.l.b16 %v1741
    %v1770 = vunpack.c.l.b16 %v1742
    %v1771 = vunpack.c.l.b16 %v1743
    %v1772 = vunpack.c.l.b16 %v1744
    %v1773 = vunpack.c.l.b16 %v1745
    %v1774 = vunpack.c.l.b16 %v1746
    %v1775 = vpack.c.b16 %v1766, %v1765
    %v1776 = vpack.c.b16 %v1768, %v1767
    %v1777 = vpack.c.b16 %v1770, %v1769
    %v1778 = vpack.c.b16 %v1772, %v1771
    %v1779 = vpack.c.b16 %v1774, %v1773
    %vm1785 = vcmask 654336
    %v1787 = vsel %vm1785, %v1736, 0
    %1789 = vmatprep.subr.bf16.mxu0 0
    %1790 = vmatpush1.bf16.msra.mxu0 0
    %1791 = vmatprep.subr.bf16.mxu0 0
    %1792 = vmatpush1.bf16.msra.mxu0 0
    %1793 = vmatprep.subr.bf16.mxu0 0
    %1794 = vmatpush1.bf16.msra.mxu0 0
    %1795 = vmatprep.subr.bf16.mxu0 0
    %1796 = vmatpush1.bf16.msra.mxu0 %v1779
    %1797 = vmatprep.subr.bf16.mxu0 0
    %1798 = vmatpush1.bf16.msra.mxu0 %v1778
    %1799 = vmatprep.subr.bf16.mxu0 0
    %1800 = vmatpush1.bf16.msra.mxu0 %v1777
    %1801 = vmatprep.subr.bf16.mxu0 0
    %1802 = vmatpush1.bf16.msra.mxu0 %v1776
    %1803 = vmatprep.subr.bf16.mxu0 0
    %1804 = vmatpush1.bf16.msra.mxu0 %v1775
    %1805 = vmatprep.subr.bf16.mxu0 0
    %1806 = vmatpush2.bf16.msra.mxu0 0
    %1807 = vmatprep.subr.bf16.mxu0 0
    %1808 = vmatpush2.bf16.msra.mxu0 0
    %1809 = vmatprep.subr.bf16.mxu0 0
    %1810 = vmatpush2.bf16.msra.mxu0 0
    %1811 = vmatprep.subr.bf16.mxu0 0
    %1812 = vmatpush2.bf16.msra.mxu0 0
    %1813 = vmatprep.subr.bf16.mxu0 0
    %1814 = vmatpush2.bf16.msra.mxu0 0
    %1815 = vmatprep.subr.bf16.mxu0 0
    %1816 = vmatpush2.bf16.msra.mxu0 0
    %1817 = vmatprep.subr.bf16.mxu0 0
    %1818 = vmatpush2.bf16.msra.mxu0 0
    %1819 = vmatprep.subr.bf16.mxu0 0
    %1820 = vmatpush2.bf16.msra.mxu0 0
    %1821 = vmatprep.mubr.bf16.mxu0 0
    %1822 = vmatmul.mubr.bf16.gmra.mxu0 %v1787
    %v1823 = vpop.f32.mrf.mxu0
    %v1824 = vadd.f32 %v1753, %v1823
    %v1825 = vpop.f32.mrf.mxu0
    %v1826 = vpop.f32.mrf.mxu0
    %v1827 = vadd.f32 %v1753, %v1826
    %v1828 = vpop.f32.mrf.mxu0
    %1829 = vdwg.mxu0
    %v1830 = vtanh.pop %v1824
    %v1831 = vtanh.pop %v1827
    %v1832 = vld [vmem:[#allocation22] sm:$0xf]
    %v1833 = vld [vmem:[#allocation22 + $0x4] sm:$0xf]
    %v1834 = vld [vmem:[#allocation22 + $0x8] sm:$0xf]
    %v1835 = vld [vmem:[#allocation22 + $0xc] sm:$0xf]
    %s1836 = scalar_lea.vmem [#allocation6], 17
    %v1837 = vld [vmem:[%s1836] ss:$8 sm:$0x3]
    %v1839 = vlaneseq
    %v1840 = vshrl.u32 %v1839, 7
    %v1841 = vsub.s32 0, %v1840
    %v1842 = vrot.slane %v1837, %v1841
    %1845 = vrot.lane.b32.xlu0 %v1660, 96
    %v1846 = vpop.permute.xlu0 %1845
    %v1851 = vunpack.c.l.b16 %v1832
    %v1852 = vunpack.c.l.b16 %v1833
    %v1853 = vunpack.c.l.b16 %v1834
    %v1854 = vunpack.c.l.b16 %v1835
    %v1855 = vpack.c.b16 %v1852, %v1851
    %v1856 = vpack.c.b16 %v1854, %v1853
    %v1860 = vsel %vm1685, %v1846, 0
    %1862 = vmatprep.subr.bf16.mxu0 0
    %1863 = vmatpush1.bf16.msra.mxu0 0
    %1864 = vmatprep.subr.bf16.mxu0 0
    %1865 = vmatpush1.bf16.msra.mxu0 0
    %1866 = vmatprep.subr.bf16.mxu0 0
    %1867 = vmatpush1.bf16.msra.mxu0 0
    %1868 = vmatprep.subr.bf16.mxu0 0
    %1869 = vmatpush1.bf16.msra.mxu0 0
    %1870 = vmatprep.subr.bf16.mxu0 0
    %1871 = vmatpush1.bf16.msra.mxu0 0
    %1872 = vmatprep.subr.bf16.mxu0 0
    %1873 = vmatpush1.bf16.msra.mxu0 0
    %1874 = vmatprep.subr.bf16.mxu0 0
    %1875 = vmatpush1.bf16.msra.mxu0 %v1856
    %1876 = vmatprep.subr.bf16.mxu0 0
    %1877 = vmatpush1.bf16.msra.mxu0 %v1855
    %1878 = vmatprep.subr.bf16.mxu0 0
    %1879 = vmatpush2.bf16.msra.mxu0 0
    %1880 = vmatprep.subr.bf16.mxu0 0
    %1881 = vmatpush2.bf16.msra.mxu0 0
    %1882 = vmatprep.subr.bf16.mxu0 0
    %1883 = vmatpush2.bf16.msra.mxu0 0
    %1884 = vmatprep.subr.bf16.mxu0 0
    %1885 = vmatpush2.bf16.msra.mxu0 0
    %1886 = vmatprep.subr.bf16.mxu0 0
    %1887 = vmatpush2.bf16.msra.mxu0 0
    %1888 = vmatprep.subr.bf16.mxu0 0
    %1889 = vmatpush2.bf16.msra.mxu0 0
    %1890 = vmatprep.subr.bf16.mxu0 0
    %1891 = vmatpush2.bf16.msra.mxu0 0
    %1892 = vmatprep.subr.bf16.mxu0 0
    %1893 = vmatpush2.bf16.msra.mxu0 0
    %1894 = vmatprep.mubr.bf16.mxu0 0
    %1895 = vmatmul.mubr.bf16.gmra.mxu0 %v1860
    %v1896 = vpop.f32.mrf.mxu0
    %v1897 = vadd.f32 %v1842, %v1896
    %v1898 = vpop.f32.mrf.mxu0
    %v1899 = vpop.f32.mrf.mxu0
    %v1900 = vadd.f32 %v1842, %v1899
    %v1901 = vpop.f32.mrf.mxu0
    %1902 = vdwg.mxu0
    %vm1903 = vcmp.gt.f32.partialorder %v1897, 0.0
    %vm1904 = vcmp.gt.f32.partialorder %v1900, 0.0
    %v1905 = vmul.f32 %v1897, 0.01
    %v1906 = vmul.f32 %v1900, 0.01
    %v1907 = vsel %vm1903, %v1897, %v1905
    %v1908 = vsel %vm1904, %v1900, %v1906
    %v1909 = vpack.c.bf16 %v1908, %v1907
    %v1910 = vld [vmem:[#allocation28] sm:$0xf]
    %v1911 = vld [vmem:[#allocation28 + $0x4] sm:$0xf]
    %v1912 = vld [vmem:[#allocation28 + $0x8] sm:$0xf]
    %v1913 = vld [vmem:[#allocation28 + $0xc] sm:$0xf]
    %v1914 = vld [vmem:[#allocation28 + $0x10] sm:$0xf]
    %v1915 = vld [vmem:[#allocation28 + $0x14] sm:$0xf]
    %v1916 = vld [vmem:[#allocation28 + $0x18] sm:$0xf]
    %v1917 = vld [vmem:[#allocation28 + $0x1c] sm:$0xf]
    %v1918 = vld [vmem:[#allocation28 + $0x20] sm:$0xf]
    %v1919 = vld [vmem:[#allocation28 + $0x24] sm:$0xf]
    %s1920 = scalar_lea.vmem [#allocation6], 21
    %v1921 = vld [vmem:[%s1920] ss:$8 sm:$0x3]
    %v1923 = vlaneseq
    %v1924 = vshrl.u32 %v1923, 7
    %v1925 = vsub.s32 0, %v1924
    %v1926 = vrot.slane %v1921, %v1925
    %v1938 = vunpack.c.l.b16 %v1910
    %v1939 = vunpack.c.l.b16 %v1911
    %v1940 = vunpack.c.l.b16 %v1912
    %v1941 = vunpack.c.l.b16 %v1913
    %v1942 = vunpack.c.l.b16 %v1914
    %v1943 = vunpack.c.l.b16 %v1915
    %v1944 = vunpack.c.l.b16 %v1916
    %v1945 = vunpack.c.l.b16 %v1917
    %v1946 = vunpack.c.l.b16 %v1918
    %v1947 = vunpack.c.l.b16 %v1919
    %v1948 = vpack.c.b16 %v1939, %v1938
    %v1949 = vpack.c.b16 %v1941, %v1940
    %v1950 = vpack.c.b16 %v1943, %v1942
    %v1951 = vpack.c.b16 %v1945, %v1944
    %v1952 = vpack.c.b16 %v1947, %v1946
    %v1959 = vsel %vm1785, %v1909, 0
    %1961 = vmatprep.subr.bf16.mxu0 0
    %1962 = vmatpush1.bf16.msra.mxu0 0
    %1963 = vmatprep.subr.bf16.mxu0 0
    %1964 = vmatpush1.bf16.msra.mxu0 0
    %1965 = vmatprep.subr.bf16.mxu0 0
    %1966 = vmatpush1.bf16.msra.mxu0 0
    %1967 = vmatprep.subr.bf16.mxu0 0
    %1968 = vmatpush1.bf16.msra.mxu0 %v1952
    %1969 = vmatprep.subr.bf16.mxu0 0
    %1970 = vmatpush1.bf16.msra.mxu0 %v1951
    %1971 = vmatprep.subr.bf16.mxu0 0
    %1972 = vmatpush1.bf16.msra.mxu0 %v1950
    %1973 = vmatprep.subr.bf16.mxu0 0
    %1974 = vmatpush1.bf16.msra.mxu0 %v1949
    %1975 = vmatprep.subr.bf16.mxu0 0
    %1976 = vmatpush1.bf16.msra.mxu0 %v1948
    %1977 = vmatprep.subr.bf16.mxu0 0
    %1978 = vmatpush2.bf16.msra.mxu0 0
    %1979 = vmatprep.subr.bf16.mxu0 0
    %1980 = vmatpush2.bf16.msra.mxu0 0
    %1981 = vmatprep.subr.bf16.mxu0 0
    %1982 = vmatpush2.bf16.msra.mxu0 0
    %1983 = vmatprep.subr.bf16.mxu0 0
    %1984 = vmatpush2.bf16.msra.mxu0 0
    %1985 = vmatprep.subr.bf16.mxu0 0
    %1986 = vmatpush2.bf16.msra.mxu0 0
    %1987 = vmatprep.subr.bf16.mxu0 0
    %1988 = vmatpush2.bf16.msra.mxu0 0
    %1989 = vmatprep.subr.bf16.mxu0 0
    %1990 = vmatpush2.bf16.msra.mxu0 0
    %1991 = vmatprep.subr.bf16.mxu0 0
    %1992 = vmatpush2.bf16.msra.mxu0 0
    %1993 = vmatprep.mubr.bf16.mxu0 0
    %1994 = vmatmul.mubr.bf16.gmra.mxu0 %v1959
    %v1995 = vpop.f32.mrf.mxu0
    %v1996 = vadd.f32 %v1926, %v1995
    %v1997 = vpop.f32.mrf.mxu0
    %v1998 = vpop.f32.mrf.mxu0
    %v1999 = vadd.f32 %v1926, %v1998
    %v2000 = vpop.f32.mrf.mxu0
    %2001 = vdwg.mxu0
    %v2002 = vtanh.pop %v1996
    %v2003 = vtanh.pop %v1999
    %v2004 = vmul.f32 %v1830, 1.442695
    %v2005 = vpow.pop %v2004
    %v2006 = vmul.f32 %v1831, 1.442695
    %v2007 = vpow.pop %v2006
    %2010 = vrot.lane.b32.xlu0 %v2005, 32
    %v2011 = vpop.permute.xlu0 %2010
    %2012 = vrot.lane.b32.xlu0 %v2007, 32
    %v2013 = vpop.permute.xlu0 %2012
    %v2016 = vmul.f32 %v1658, %v2011
    %v2017 = vmul.f32 %v1659, %v2013
    %v2018 = vmul.f32 %v2002, 1.442695
    %v2019 = vpow.pop %v2018
    %v2020 = vmul.f32 %v2003, 1.442695
    %v2021 = vpow.pop %v2020
    %v2022 = vmul.f32 %v1658, %v2019
    %v2023 = vmul.f32 %v1659, %v2021
    %v2024 = vpack.c.bf16 %v2017, %v2016
    %v2025 = vld [vmem:[#allocation24] sm:$0xf]
    %v2026 = vld [vmem:[#allocation24 + $0x4] sm:$0xf]
    %v2027 = vld [vmem:[#allocation24 + $0x8] sm:$0xf]
    %v2028 = vld [vmem:[#allocation24 + $0xc] sm:$0xf]
    %s2029 = scalar_lea.vmem [#allocation6], 18
    %v2030 = vld [vmem:[%s2029] ss:$8 sm:$0x3]
    %v2032 = vlaneseq
    %v2033 = vshrl.u32 %v2032, 7
    %v2034 = vsub.s32 0, %v2033
    %v2035 = vrot.slane %v2030, %v2034
    %2038 = vrot.lane.b32.xlu0 %v2024, 96
    %v2039 = vpop.permute.xlu0 %2038
    %v2044 = vunpack.c.l.b16 %v2025
    %v2045 = vunpack.c.l.b16 %v2026
    %v2046 = vunpack.c.l.b16 %v2027
    %v2047 = vunpack.c.l.b16 %v2028
    %v2048 = vpack.c.b16 %v2045, %v2044
    %v2049 = vpack.c.b16 %v2047, %v2046
    %v2053 = vsel %vm1685, %v2039, 0
    %2055 = vmatprep.subr.bf16.mxu0 0
    %2056 = vmatpush1.bf16.msra.mxu0 0
    %2057 = vmatprep.subr.bf16.mxu0 0
    %2058 = vmatpush1.bf16.msra.mxu0 0
    %2059 = vmatprep.subr.bf16.mxu0 0
    %2060 = vmatpush1.bf16.msra.mxu0 0
    %2061 = vmatprep.subr.bf16.mxu0 0
    %2062 = vmatpush1.bf16.msra.mxu0 0
    %2063 = vmatprep.subr.bf16.mxu0 0
    %2064 = vmatpush1.bf16.msra.mxu0 0
    %2065 = vmatprep.subr.bf16.mxu0 0
    %2066 = vmatpush1.bf16.msra.mxu0 0
    %2067 = vmatprep.subr.bf16.mxu0 0
    %2068 = vmatpush1.bf16.msra.mxu0 %v2049
    %2069 = vmatprep.subr.bf16.mxu0 0
    %2070 = vmatpush1.bf16.msra.mxu0 %v2048
    %2071 = vmatprep.subr.bf16.mxu0 0
    %2072 = vmatpush2.bf16.msra.mxu0 0
    %2073 = vmatprep.subr.bf16.mxu0 0
    %2074 = vmatpush2.bf16.msra.mxu0 0
    %2075 = vmatprep.subr.bf16.mxu0 0
    %2076 = vmatpush2.bf16.msra.mxu0 0
    %2077 = vmatprep.subr.bf16.mxu0 0
    %2078 = vmatpush2.bf16.msra.mxu0 0
    %2079 = vmatprep.subr.bf16.mxu0 0
    %2080 = vmatpush2.bf16.msra.mxu0 0
    %2081 = vmatprep.subr.bf16.mxu0 0
    %2082 = vmatpush2.bf16.msra.mxu0 0
    %2083 = vmatprep.subr.bf16.mxu0 0
    %2084 = vmatpush2.bf16.msra.mxu0 0
    %2085 = vmatprep.subr.bf16.mxu0 0
    %2086 = vmatpush2.bf16.msra.mxu0 0
    %2087 = vmatprep.mubr.bf16.mxu0 0
    %2088 = vmatmul.mubr.bf16.gmra.mxu0 %v2053
    %v2089 = vpop.f32.mrf.mxu0
    %v2090 = vadd.f32 %v2035, %v2089
    %v2091 = vpop.f32.mrf.mxu0
    %v2092 = vpop.f32.mrf.mxu0
    %v2093 = vadd.f32 %v2035, %v2092
    %v2094 = vpop.f32.mrf.mxu0
    %2095 = vdwg.mxu0
    %vm2096 = vcmp.gt.f32.partialorder %v2090, 0.0
    %vm2097 = vcmp.gt.f32.partialorder %v2093, 0.0
    %v2098 = vmul.f32 %v2090, 0.01
    %v2099 = vmul.f32 %v2093, 0.01
    %v2100 = vsel %vm2096, %v2090, %v2098
    %v2101 = vsel %vm2097, %v2093, %v2099
    %v2102 = vpack.c.bf16 %v2101, %v2100
    %v2103 = vld [vmem:[#allocation30] sm:$0xf]
    %v2104 = vld [vmem:[#allocation30 + $0x4] sm:$0xf]
    %v2105 = vld [vmem:[#allocation30 + $0x8] sm:$0xf]
    %v2106 = vld [vmem:[#allocation30 + $0xc] sm:$0xf]
    %v2107 = vld [vmem:[#allocation30 + $0x10] sm:$0xf]
    %v2108 = vld [vmem:[#allocation30 + $0x14] sm:$0xf]
    %v2109 = vld [vmem:[#allocation30 + $0x18] sm:$0xf]
    %v2110 = vld [vmem:[#allocation30 + $0x1c] sm:$0xf]
    %v2111 = vld [vmem:[#allocation30 + $0x20] sm:$0xf]
    %v2112 = vld [vmem:[#allocation30 + $0x24] sm:$0xf]
    %s2113 = scalar_lea.vmem [#allocation6], 22
    %v2114 = vld [vmem:[%s2113] ss:$8 sm:$0x3]
    %v2116 = vlaneseq
    %v2117 = vshrl.u32 %v2116, 7
    %v2118 = vsub.s32 0, %v2117
    %v2119 = vrot.slane %v2114, %v2118
    %v2131 = vunpack.c.l.b16 %v2103
    %v2132 = vunpack.c.l.b16 %v2104
    %v2133 = vunpack.c.l.b16 %v2105
    %v2134 = vunpack.c.l.b16 %v2106
    %v2135 = vunpack.c.l.b16 %v2107
    %v2136 = vunpack.c.l.b16 %v2108
    %v2137 = vunpack.c.l.b16 %v2109
    %v2138 = vunpack.c.l.b16 %v2110
    %v2139 = vunpack.c.l.b16 %v2111
    %v2140 = vunpack.c.l.b16 %v2112
    %v2141 = vpack.c.b16 %v2132, %v2131
    %v2142 = vpack.c.b16 %v2134, %v2133
    %v2143 = vpack.c.b16 %v2136, %v2135
    %v2144 = vpack.c.b16 %v2138, %v2137
    %v2145 = vpack.c.b16 %v2140, %v2139
    %v2152 = vsel %vm1785, %v2102, 0
    %2154 = vmatprep.subr.bf16.mxu0 0
    %2155 = vmatpush1.bf16.msra.mxu0 0
    %2156 = vmatprep.subr.bf16.mxu0 0
    %2157 = vmatpush1.bf16.msra.mxu0 0
    %2158 = vmatprep.subr.bf16.mxu0 0
    %2159 = vmatpush1.bf16.msra.mxu0 0
    %2160 = vmatprep.subr.bf16.mxu0 0
    %2161 = vmatpush1.bf16.msra.mxu0 %v2145
    %2162 = vmatprep.subr.bf16.mxu0 0
    %2163 = vmatpush1.bf16.msra.mxu0 %v2144
    %2164 = vmatprep.subr.bf16.mxu0 0
    %2165 = vmatpush1.bf16.msra.mxu0 %v2143
    %2166 = vmatprep.subr.bf16.mxu0 0
    %2167 = vmatpush1.bf16.msra.mxu0 %v2142
    %2168 = vmatprep.subr.bf16.mxu0 0
    %2169 = vmatpush1.bf16.msra.mxu0 %v2141
    %2170 = vmatprep.subr.bf16.mxu0 0
    %2171 = vmatpush2.bf16.msra.mxu0 0
    %2172 = vmatprep.subr.bf16.mxu0 0
    %2173 = vmatpush2.bf16.msra.mxu0 0
    %2174 = vmatprep.subr.bf16.mxu0 0
    %2175 = vmatpush2.bf16.msra.mxu0 0
    %2176 = vmatprep.subr.bf16.mxu0 0
    %2177 = vmatpush2.bf16.msra.mxu0 0
    %2178 = vmatprep.subr.bf16.mxu0 0
    %2179 = vmatpush2.bf16.msra.mxu0 0
    %2180 = vmatprep.subr.bf16.mxu0 0
    %2181 = vmatpush2.bf16.msra.mxu0 0
    %2182 = vmatprep.subr.bf16.mxu0 0
    %2183 = vmatpush2.bf16.msra.mxu0 0
    %2184 = vmatprep.subr.bf16.mxu0 0
    %2185 = vmatpush2.bf16.msra.mxu0 0
    %2186 = vmatprep.mubr.bf16.mxu0 0
    %2187 = vmatmul.mubr.bf16.gmra.mxu0 %v2152
    %v2188 = vpop.f32.mrf.mxu0
    %v2189 = vadd.f32 %v2119, %v2188
    %v2190 = vpop.f32.mrf.mxu0
    %v2191 = vpop.f32.mrf.mxu0
    %v2192 = vadd.f32 %v2119, %v2191
    %v2193 = vpop.f32.mrf.mxu0
    %2194 = vdwg.mxu0
    %v2195 = vtanh.pop %v2189
    %v2196 = vtanh.pop %v2192
    %v2197 = vpack.c.bf16 %v2023, %v2022
    %v2198 = vld [vmem:[#allocation25] sm:$0xf]
    %v2199 = vld [vmem:[#allocation25 + $0x4] sm:$0xf]
    %v2200 = vld [vmem:[#allocation25 + $0x8] sm:$0xf]
    %v2201 = vld [vmem:[#allocation25 + $0xc] sm:$0xf]
    %s2202 = scalar_lea.vmem [#allocation6], 19
    %v2203 = vld [vmem:[%s2202] ss:$8 sm:$0x3]
    %v2205 = vlaneseq
    %v2206 = vshrl.u32 %v2205, 7
    %v2207 = vsub.s32 0, %v2206
    %v2208 = vrot.slane %v2203, %v2207
    %v2214 = vunpack.c.l.b16 %v2198
    %v2215 = vunpack.c.l.b16 %v2199
    %v2216 = vunpack.c.l.b16 %v2200
    %v2217 = vunpack.c.l.b16 %v2201
    %v2218 = vpack.c.b16 %v2215, %v2214
    %v2219 = vpack.c.b16 %v2217, %v2216
    %v2223 = vsel %vm1685, %v2197, 0
    %2225 = vmatprep.subr.bf16.mxu0 0
    %2226 = vmatpush1.bf16.msra.mxu0 0
    %2227 = vmatprep.subr.bf16.mxu0 0
    %2228 = vmatpush1.bf16.msra.mxu0 0
    %2229 = vmatprep.subr.bf16.mxu0 0
    %2230 = vmatpush1.bf16.msra.mxu0 0
    %2231 = vmatprep.subr.bf16.mxu0 0
    %2232 = vmatpush1.bf16.msra.mxu0 0
    %2233 = vmatprep.subr.bf16.mxu0 0
    %2234 = vmatpush1.bf16.msra.mxu0 0
    %2235 = vmatprep.subr.bf16.mxu0 0
    %2236 = vmatpush1.bf16.msra.mxu0 0
    %2237 = vmatprep.subr.bf16.mxu0 0
    %2238 = vmatpush1.bf16.msra.mxu0 %v2219
    %2239 = vmatprep.subr.bf16.mxu0 0
    %2240 = vmatpush1.bf16.msra.mxu0 %v2218
    %2241 = vmatprep.subr.bf16.mxu0 0
    %2242 = vmatpush2.bf16.msra.mxu0 0
    %2243 = vmatprep.subr.bf16.mxu0 0
    %2244 = vmatpush2.bf16.msra.mxu0 0
    %2245 = vmatprep.subr.bf16.mxu0 0
    %2246 = vmatpush2.bf16.msra.mxu0 0
    %2247 = vmatprep.subr.bf16.mxu0 0
    %2248 = vmatpush2.bf16.msra.mxu0 0
    %2249 = vmatprep.subr.bf16.mxu0 0
    %2250 = vmatpush2.bf16.msra.mxu0 0
    %2251 = vmatprep.subr.bf16.mxu0 0
    %2252 = vmatpush2.bf16.msra.mxu0 0
    %2253 = vmatprep.subr.bf16.mxu0 0
    %2254 = vmatpush2.bf16.msra.mxu0 0
    %2255 = vmatprep.subr.bf16.mxu0 0
    %2256 = vmatpush2.bf16.msra.mxu0 0
    %2257 = vmatprep.mubr.bf16.mxu0 0
    %2258 = vmatmul.mubr.bf16.gmra.mxu0 %v2223
    %v2259 = vpop.f32.mrf.mxu0
    %v2260 = vadd.f32 %v2208, %v2259
    %v2261 = vpop.f32.mrf.mxu0
    %v2262 = vpop.f32.mrf.mxu0
    %v2263 = vadd.f32 %v2208, %v2262
    %v2264 = vpop.f32.mrf.mxu0
    %2265 = vdwg.mxu0
    %vm2266 = vcmp.gt.f32.partialorder %v2260, 0.0
    %vm2267 = vcmp.gt.f32.partialorder %v2263, 0.0
    %v2268 = vmul.f32 %v2260, 0.01
    %v2269 = vmul.f32 %v2263, 0.01
    %v2270 = vsel %vm2266, %v2260, %v2268
    %v2271 = vsel %vm2267, %v2263, %v2269
    %v2272 = vpack.c.bf16 %v2271, %v2270
    %v2273 = vld [vmem:[%s43] sm:$0xf]
    %v2274 = vld [vmem:[%s43 + $0x4] sm:$0xf]
    %v2275 = vld [vmem:[%s43 + $0x8] sm:$0xf]
    %v2276 = vld [vmem:[%s43 + $0xc] sm:$0xf]
    %v2277 = vld [vmem:[%s43 + $0x10] sm:$0xf]
    %v2278 = vld [vmem:[%s43 + $0x14] sm:$0xf]
    %v2279 = vld [vmem:[%s43 + $0x18] sm:$0xf]
    %v2280 = vld [vmem:[%s43 + $0x1c] sm:$0xf]
    %v2281 = vld [vmem:[%s43 + $0x20] sm:$0xf]
    %v2282 = vld [vmem:[%s43 + $0x24] sm:$0xf]
    %s2283 = scalar_lea.vmem [#allocation6], 23
    %v2284 = vld [vmem:[%s2283] ss:$8 sm:$0x3]
    %v2286 = vlaneseq
    %v2287 = vshrl.u32 %v2286, 7
    %v2288 = vsub.s32 0, %v2287
    %v2289 = vrot.slane %v2284, %v2288
    %v2301 = vunpack.c.l.b16 %v2273
    %v2302 = vunpack.c.l.b16 %v2274
    %v2303 = vunpack.c.l.b16 %v2275
    %v2304 = vunpack.c.l.b16 %v2276
    %v2305 = vunpack.c.l.b16 %v2277
    %v2306 = vunpack.c.l.b16 %v2278
    %v2307 = vunpack.c.l.b16 %v2279
    %v2308 = vunpack.c.l.b16 %v2280
    %v2309 = vunpack.c.l.b16 %v2281
    %v2310 = vunpack.c.l.b16 %v2282
    %v2311 = vpack.c.b16 %v2302, %v2301
    %v2312 = vpack.c.b16 %v2304, %v2303
    %v2313 = vpack.c.b16 %v2306, %v2305
    %v2314 = vpack.c.b16 %v2308, %v2307
    %v2315 = vpack.c.b16 %v2310, %v2309
    %v2322 = vsel %vm1785, %v2272, 0
    %2324 = vmatprep.subr.bf16.mxu0 0
    %2325 = vmatpush1.bf16.msra.mxu0 0
    %2326 = vmatprep.subr.bf16.mxu0 0
    %2327 = vmatpush1.bf16.msra.mxu0 0
    %2328 = vmatprep.subr.bf16.mxu0 0
    %2329 = vmatpush1.bf16.msra.mxu0 0
    %2330 = vmatprep.subr.bf16.mxu0 0
    %2331 = vmatpush1.bf16.msra.mxu0 %v2315
    %2332 = vmatprep.subr.bf16.mxu0 0
    %2333 = vmatpush1.bf16.msra.mxu0 %v2314
    %2334 = vmatprep.subr.bf16.mxu0 0
    %2335 = vmatpush1.bf16.msra.mxu0 %v2313
    %2336 = vmatprep.subr.bf16.mxu0 0
    %2337 = vmatpush1.bf16.msra.mxu0 %v2312
    %2338 = vmatprep.subr.bf16.mxu0 0
    %2339 = vmatpush1.bf16.msra.mxu0 %v2311
    %2340 = vmatprep.subr.bf16.mxu0 0
    %2341 = vmatpush2.bf16.msra.mxu0 0
    %2342 = vmatprep.subr.bf16.mxu0 0
    %2343 = vmatpush2.bf16.msra.mxu0 0
    %2344 = vmatprep.subr.bf16.mxu0 0
    %2345 = vmatpush2.bf16.msra.mxu0 0
    %2346 = vmatprep.subr.bf16.mxu0 0
    %2347 = vmatpush2.bf16.msra.mxu0 0
    %2348 = vmatprep.subr.bf16.mxu0 0
    %2349 = vmatpush2.bf16.msra.mxu0 0
    %2350 = vmatprep.subr.bf16.mxu0 0
    %2351 = vmatpush2.bf16.msra.mxu0 0
    %2352 = vmatprep.subr.bf16.mxu0 0
    %2353 = vmatpush2.bf16.msra.mxu0 0
    %2354 = vmatprep.subr.bf16.mxu0 0
    %2355 = vmatpush2.bf16.msra.mxu0 0
    %2356 = vmatprep.mubr.bf16.mxu0 0
    %2357 = vmatmul.mubr.bf16.gmra.mxu0 %v2322
    %v2358 = vpop.f32.mrf.mxu0
    %v2359 = vadd.f32 %v2289, %v2358
    %v2360 = vpop.f32.mrf.mxu0
    %v2361 = vpop.f32.mrf.mxu0
    %v2362 = vadd.f32 %v2289, %v2361
    %v2363 = vpop.f32.mrf.mxu0
    %2364 = vdwg.mxu0
    %v2365 = vtanh.pop %v2359
    %v2366 = vtanh.pop %v2362
    %2369 = vrot.lane.b32.xlu0 %v2365, 32
    %v2370 = vpop.permute.xlu0 %2369
    %2371 = vrot.lane.b32.xlu0 %v2366, 32
    %v2372 = vpop.permute.xlu0 %2371
    %v2375 = vadd.f32 %v2016, %v2370
    %v2376 = vadd.f32 %v2017, %v2372
    %2377 = vrot.lane.b32.xlu0 %v605, 96
    %v2378 = vpop.permute.xlu0 %2377
    %2379 = vrot.lane.b32.xlu0 %v606, 96
    %v2380 = vpop.permute.xlu0 %2379
    %v2383 = vmul.f32 %v2375, %v2378
    %v2384 = vmul.f32 %v2376, %v2380
    %v2385 = vpack.c.bf16 %v2384, %v2383
    %v2386 = vld [vmem:[#allocation7 + $0x20] sm:$0xf]
    %v2387 = vld [vmem:[#allocation7 + $0x24] sm:$0xf]
    %v2388 = vld [vmem:[#allocation7 + $0x28] sm:$0xf]
    %v2389 = vld [vmem:[#allocation7 + $0x2c] sm:$0xf]
    %2391 = vrot.lane.b32.xlu0 %v2385, 96
    %v2392 = vpop.permute.xlu0 %2391
    %v2397 = vunpack.c.l.b16 %v2386
    %v2398 = vunpack.c.l.b16 %v2387
    %v2399 = vunpack.c.l.b16 %v2388
    %v2400 = vunpack.c.l.b16 %v2389
    %v2401 = vpack.c.b16 %v2398, %v2397
    %v2402 = vpack.c.b16 %v2400, %v2399
    %v2406 = vsel %vm1685, %v2392, 0
    %2408 = vmatprep.subr.bf16.mxu0 0
    %2409 = vmatpush1.bf16.msra.mxu0 0
    %2410 = vmatprep.subr.bf16.mxu0 0
    %2411 = vmatpush1.bf16.msra.mxu0 0
    %2412 = vmatprep.subr.bf16.mxu0 0
    %2413 = vmatpush1.bf16.msra.mxu0 0
    %2414 = vmatprep.subr.bf16.mxu0 0
    %2415 = vmatpush1.bf16.msra.mxu0 0
    %2416 = vmatprep.subr.bf16.mxu0 0
    %2417 = vmatpush1.bf16.msra.mxu0 0
    %2418 = vmatprep.subr.bf16.mxu0 0
    %2419 = vmatpush1.bf16.msra.mxu0 0
    %2420 = vmatprep.subr.bf16.mxu0 0
    %2421 = vmatpush1.bf16.msra.mxu0 %v2402
    %2422 = vmatprep.subr.bf16.mxu0 0
    %2423 = vmatpush1.bf16.msra.mxu0 %v2401
    %2424 = vmatprep.subr.bf16.mxu0 0
    %2425 = vmatpush2.bf16.msra.mxu0 0
    %2426 = vmatprep.subr.bf16.mxu0 0
    %2427 = vmatpush2.bf16.msra.mxu0 0
    %2428 = vmatprep.subr.bf16.mxu0 0
    %2429 = vmatpush2.bf16.msra.mxu0 0
    %2430 = vmatprep.subr.bf16.mxu0 0
    %2431 = vmatpush2.bf16.msra.mxu0 0
    %2432 = vmatprep.subr.bf16.mxu0 0
    %2433 = vmatpush2.bf16.msra.mxu0 0
    %2434 = vmatprep.subr.bf16.mxu0 0
    %2435 = vmatpush2.bf16.msra.mxu0 0
    %2436 = vmatprep.subr.bf16.mxu0 0
    %2437 = vmatpush2.bf16.msra.mxu0 0
    %2438 = vmatprep.subr.bf16.mxu0 0
    %2439 = vmatpush2.bf16.msra.mxu0 0
    %2440 = vmatprep.mubr.bf16.mxu0 0
    %2441 = vmatmul.mubr.bf16.gmra.mxu0 %v2406
    %v2442 = vpop.f32.mrf.mxu0
    %v2443 = vadd.f32 0.0, %v2442
    %v2444 = vpop.f32.mrf.mxu0
    %v2445 = vpop.f32.mrf.mxu0
    %v2446 = vadd.f32 0.0, %v2445
    %v2447 = vpop.f32.mrf.mxu0
    %2448 = vdwg.mxu0
    %2450 = vrot.lane.b32.xlu0 %v1645, 64
    %v2451 = vpop.permute.xlu0 %2450
    %v2460 = vunpack.c.l.b16 %v1646
    %v2461 = vunpack.c.l.b16 %v1647
    %v2462 = vunpack.c.l.b16 %v1648
    %v2463 = vunpack.c.l.b16 %v1649
    %v2464 = vunpack.c.l.b16 %v1650
    %v2465 = vunpack.c.l.b16 %v1651
    %v2466 = vunpack.c.l.b16 %v1652
    %v2467 = vunpack.c.l.b16 %v1653
    %v2468 = vpack.c.b16 %v2461, %v2460
    %v2469 = vpack.c.b16 %v2463, %v2462
    %v2470 = vpack.c.b16 %v2465, %v2464
    %v2471 = vpack.c.b16 %v2467, %v2466
    %v2477 = vsel %vm668, %v2451, 0
    %2479 = vmatprep.subr.bf16.mxu0 0
    %2480 = vmatpush1.bf16.msra.mxu0 0
    %2481 = vmatprep.subr.bf16.mxu0 0
    %2482 = vmatpush1.bf16.msra.mxu0 0
    %2483 = vmatprep.subr.bf16.mxu0 0
    %2484 = vmatpush1.bf16.msra.mxu0 0
    %2485 = vmatprep.subr.bf16.mxu0 0
    %2486 = vmatpush1.bf16.msra.mxu0 0
    %2487 = vmatprep.subr.bf16.mxu0 0
    %2488 = vmatpush1.bf16.msra.mxu0 %v2471
    %2489 = vmatprep.subr.bf16.mxu0 0
    %2490 = vmatpush1.bf16.msra.mxu0 %v2470
    %2491 = vmatprep.subr.bf16.mxu0 0
    %2492 = vmatpush1.bf16.msra.mxu0 %v2469
    %2493 = vmatprep.subr.bf16.mxu0 0
    %2494 = vmatpush1.bf16.msra.mxu0 %v2468
    %2495 = vmatprep.subr.bf16.mxu0 0
    %2496 = vmatpush2.bf16.msra.mxu0 0
    %2497 = vmatprep.subr.bf16.mxu0 0
    %2498 = vmatpush2.bf16.msra.mxu0 0
    %2499 = vmatprep.subr.bf16.mxu0 0
    %2500 = vmatpush2.bf16.msra.mxu0 0
    %2501 = vmatprep.subr.bf16.mxu0 0
    %2502 = vmatpush2.bf16.msra.mxu0 0
    %2503 = vmatprep.subr.bf16.mxu0 0
    %2504 = vmatpush2.bf16.msra.mxu0 0
    %2505 = vmatprep.subr.bf16.mxu0 0
    %2506 = vmatpush2.bf16.msra.mxu0 0
    %2507 = vmatprep.subr.bf16.mxu0 0
    %2508 = vmatpush2.bf16.msra.mxu0 0
    %2509 = vmatprep.subr.bf16.mxu0 0
    %2510 = vmatpush2.bf16.msra.mxu0 0
    %2511 = vmatprep.mubr.bf16.mxu0 0
    %2512 = vmatmul.mubr.bf16.gmra.mxu0 %v2477
    %v2513 = vpop.f32.mrf.mxu0
    %v2514 = vadd.f32 %v2443, %v2513
    %v2515 = vpop.f32.mrf.mxu0
    %v2516 = vpop.f32.mrf.mxu0
    %v2517 = vadd.f32 %v2446, %v2516
    %v2518 = vpop.f32.mrf.mxu0
    %2519 = vdwg.mxu0
    %v2520 = vadd.f32 %v2022, %v2195
    %v2521 = vadd.f32 %v2023, %v2196
    %v2522 = vmul.f32 %v2520, 0.999995
    %v2523 = vmul.f32 %v2521, 0.999995
    %v2524 = vmax.f32 %v2522, 0.0
    %v2525 = vmax.f32 %v2523, 0.0
    %v2526 = vpack.c.bf16 %v2525, %v2524
    %v2527 = vld [vmem:[#allocation31] sm:$0xf]
    %v2528 = vld [vmem:[#allocation31 + $0x4] sm:$0xf]
    %s2529 = scalar_lea.vmem [#allocation6], 32
    %v2530 = vld [vmem:[%s2529] ss:$8 sm:$0x3]
    %v2532 = vlaneseq
    %v2533 = vshrl.u32 %v2532, 7
    %v2534 = vsub.s32 0, %v2533
    %v2535 = vrot.slane %v2530, %v2534
    %v2539 = vunpack.c.l.b16 %v2527
    %v2540 = vunpack.c.l.b16 %v2528
    %v2541 = vpack.c.b16 %v2540, %v2539
    %v2544 = vsel %vm809, %v2526, 0
    %2546 = vmatprep.subr.bf16.mxu0 0
    %2547 = vmatpush1.bf16.msra.mxu0 0
    %2548 = vmatprep.subr.bf16.mxu0 0
    %2549 = vmatpush1.bf16.msra.mxu0 0
    %2550 = vmatprep.subr.bf16.mxu0 0
    %2551 = vmatpush1.bf16.msra.mxu0 0
    %2552 = vmatprep.subr.bf16.mxu0 0
    %2553 = vmatpush1.bf16.msra.mxu0 0
    %2554 = vmatprep.subr.bf16.mxu0 0
    %2555 = vmatpush1.bf16.msra.mxu0 0
    %2556 = vmatprep.subr.bf16.mxu0 0
    %2557 = vmatpush1.bf16.msra.mxu0 0
    %2558 = vmatprep.subr.bf16.mxu0 0
    %2559 = vmatpush1.bf16.msra.mxu0 0
    %2560 = vmatprep.subr.bf16.mxu0 0
    %2561 = vmatpush1.bf16.msra.mxu0 %v2541
    %2562 = vmatprep.subr.bf16.mxu0 0
    %2563 = vmatpush2.bf16.msra.mxu0 0
    %2564 = vmatprep.subr.bf16.mxu0 0
    %2565 = vmatpush2.bf16.msra.mxu0 0
    %2566 = vmatprep.subr.bf16.mxu0 0
    %2567 = vmatpush2.bf16.msra.mxu0 0
    %2568 = vmatprep.subr.bf16.mxu0 0
    %2569 = vmatpush2.bf16.msra.mxu0 0
    %2570 = vmatprep.subr.bf16.mxu0 0
    %2571 = vmatpush2.bf16.msra.mxu0 0
    %2572 = vmatprep.subr.bf16.mxu0 0
    %2573 = vmatpush2.bf16.msra.mxu0 0
    %2574 = vmatprep.subr.bf16.mxu0 0
    %2575 = vmatpush2.bf16.msra.mxu0 0
    %2576 = vmatprep.subr.bf16.mxu0 0
    %2577 = vmatpush2.bf16.msra.mxu0 0
    %2578 = vmatprep.mubr.bf16.mxu0 0
    %2579 = vmatmul.mubr.bf16.gmra.mxu0 %v2544
    %v2580 = vpop.f32.mrf.mxu0
    %v2581 = vadd.f32 %v2535, %v2580
    %v2582 = vpop.f32.mrf.mxu0
    %v2583 = vpop.f32.mrf.mxu0
    %v2584 = vadd.f32 %v2535, %v2583
    %v2585 = vpop.f32.mrf.mxu0
    %2586 = vdwg.mxu0
    %vm2587 = vcmp.gt.f32.partialorder %v2581, 0.0
    %vm2588 = vcmp.gt.f32.partialorder %v2584, 0.0
    %v2589 = vmul.f32 %v2581, 0.01
    %v2590 = vmul.f32 %v2584, 0.01
    %v2591 = vsel %vm2587, %v2581, %v2589
    %v2592 = vsel %vm2588, %v2584, %v2590
    %v2593 = vpack.c.bf16 %v2592, %v2591
    %v2594 = vld [vmem:[#allocation36] sm:$0xf]
    %v2595 = vld [vmem:[#allocation36 + $0x4] sm:$0xf]
    %v2596 = vld [vmem:[#allocation36 + $0x8] sm:$0xf]
    %v2597 = vld [vmem:[#allocation36 + $0xc] sm:$0xf]
    %v2598 = vld [vmem:[#allocation36 + $0x10] sm:$0xf]
    %v2599 = vld [vmem:[#allocation36 + $0x14] sm:$0xf]
    %s2600 = scalar_lea.vmem [#allocation6], 36
    %v2601 = vld [vmem:[%s2600] ss:$8 sm:$0x3]
    %v2603 = vlaneseq
    %v2604 = vshrl.u32 %v2603, 7
    %v2605 = vsub.s32 0, %v2604
    %v2606 = vrot.slane %v2601, %v2605
    %v2614 = vunpack.c.l.b16 %v2594
    %v2615 = vunpack.c.l.b16 %v2595
    %v2616 = vunpack.c.l.b16 %v2596
    %v2617 = vunpack.c.l.b16 %v2597
    %v2618 = vunpack.c.l.b16 %v2598
    %v2619 = vunpack.c.l.b16 %v2599
    %v2620 = vpack.c.b16 %v2615, %v2614
    %v2621 = vpack.c.b16 %v2617, %v2616
    %v2622 = vpack.c.b16 %v2619, %v2618
    %vm2626 = vcmask 392192
    %v2628 = vsel %vm2626, %v2593, 0
    %2630 = vmatprep.subr.bf16.mxu0 0
    %2631 = vmatpush1.bf16.msra.mxu0 0
    %2632 = vmatprep.subr.bf16.mxu0 0
    %2633 = vmatpush1.bf16.msra.mxu0 0
    %2634 = vmatprep.subr.bf16.mxu0 0
    %2635 = vmatpush1.bf16.msra.mxu0 0
    %2636 = vmatprep.subr.bf16.mxu0 0
    %2637 = vmatpush1.bf16.msra.mxu0 0
    %2638 = vmatprep.subr.bf16.mxu0 0
    %2639 = vmatpush1.bf16.msra.mxu0 0
    %2640 = vmatprep.subr.bf16.mxu0 0
    %2641 = vmatpush1.bf16.msra.mxu0 %v2622
    %2642 = vmatprep.subr.bf16.mxu0 0
    %2643 = vmatpush1.bf16.msra.mxu0 %v2621
    %2644 = vmatprep.subr.bf16.mxu0 0
    %2645 = vmatpush1.bf16.msra.mxu0 %v2620
    %2646 = vmatprep.subr.bf16.mxu0 0
    %2647 = vmatpush2.bf16.msra.mxu0 0
    %2648 = vmatprep.subr.bf16.mxu0 0
    %2649 = vmatpush2.bf16.msra.mxu0 0
    %2650 = vmatprep.subr.bf16.mxu0 0
    %2651 = vmatpush2.bf16.msra.mxu0 0
    %2652 = vmatprep.subr.bf16.mxu0 0
    %2653 = vmatpush2.bf16.msra.mxu0 0
    %2654 = vmatprep.subr.bf16.mxu0 0
    %2655 = vmatpush2.bf16.msra.mxu0 0
    %2656 = vmatprep.subr.bf16.mxu0 0
    %2657 = vmatpush2.bf16.msra.mxu0 0
    %2658 = vmatprep.subr.bf16.mxu0 0
    %2659 = vmatpush2.bf16.msra.mxu0 0
    %2660 = vmatprep.subr.bf16.mxu0 0
    %2661 = vmatpush2.bf16.msra.mxu0 0
    %2662 = vmatprep.mubr.bf16.mxu0 0
    %2663 = vmatmul.mubr.bf16.gmra.mxu0 %v2628
    %v2664 = vpop.f32.mrf.mxu0
    %v2665 = vadd.f32 %v2606, %v2664
    %v2666 = vpop.f32.mrf.mxu0
    %v2667 = vpop.f32.mrf.mxu0
    %v2668 = vadd.f32 %v2606, %v2667
    %v2669 = vpop.f32.mrf.mxu0
    %2670 = vdwg.mxu0
    %v2671 = vtanh.pop %v2665
    %v2672 = vtanh.pop %v2668
    %v2673 = vld [vmem:[#allocation33] sm:$0xf]
    %v2674 = vld [vmem:[#allocation33 + $0x4] sm:$0xf]
    %s2675 = scalar_lea.vmem [#allocation6], 33
    %v2676 = vld [vmem:[%s2675] ss:$8 sm:$0x3]
    %v2678 = vlaneseq
    %v2679 = vshrl.u32 %v2678, 7
    %v2680 = vsub.s32 0, %v2679
    %v2681 = vrot.slane %v2676, %v2680
    %2684 = vrot.lane.b32.xlu0 %v2526, 112
    %v2685 = vpop.permute.xlu0 %2684
    %v2688 = vunpack.c.l.b16 %v2673
    %v2689 = vunpack.c.l.b16 %v2674
    %v2690 = vpack.c.b16 %v2689, %v2688
    %v2693 = vsel %vm809, %v2685, 0
    %2695 = vmatprep.subr.bf16.mxu0 0
    %2696 = vmatpush1.bf16.msra.mxu0 0
    %2697 = vmatprep.subr.bf16.mxu0 0
    %2698 = vmatpush1.bf16.msra.mxu0 0
    %2699 = vmatprep.subr.bf16.mxu0 0
    %2700 = vmatpush1.bf16.msra.mxu0 0
    %2701 = vmatprep.subr.bf16.mxu0 0
    %2702 = vmatpush1.bf16.msra.mxu0 0
    %2703 = vmatprep.subr.bf16.mxu0 0
    %2704 = vmatpush1.bf16.msra.mxu0 0
    %2705 = vmatprep.subr.bf16.mxu0 0
    %2706 = vmatpush1.bf16.msra.mxu0 0
    %2707 = vmatprep.subr.bf16.mxu0 0
    %2708 = vmatpush1.bf16.msra.mxu0 0
    %2709 = vmatprep.subr.bf16.mxu0 0
    %2710 = vmatpush1.bf16.msra.mxu0 %v2690
    %2711 = vmatprep.subr.bf16.mxu0 0
    %2712 = vmatpush2.bf16.msra.mxu0 0
    %2713 = vmatprep.subr.bf16.mxu0 0
    %2714 = vmatpush2.bf16.msra.mxu0 0
    %2715 = vmatprep.subr.bf16.mxu0 0
    %2716 = vmatpush2.bf16.msra.mxu0 0
    %2717 = vmatprep.subr.bf16.mxu0 0
    %2718 = vmatpush2.bf16.msra.mxu0 0
    %2719 = vmatprep.subr.bf16.mxu0 0
    %2720 = vmatpush2.bf16.msra.mxu0 0
    %2721 = vmatprep.subr.bf16.mxu0 0
    %2722 = vmatpush2.bf16.msra.mxu0 0
    %2723 = vmatprep.subr.bf16.mxu0 0
    %2724 = vmatpush2.bf16.msra.mxu0 0
    %2725 = vmatprep.subr.bf16.mxu0 0
    %2726 = vmatpush2.bf16.msra.mxu0 0
    %2727 = vmatprep.mubr.bf16.mxu0 0
    %2728 = vmatmul.mubr.bf16.gmra.mxu0 %v2693
    %v2729 = vpop.f32.mrf.mxu0
    %v2730 = vadd.f32 %v2681, %v2729
    %v2731 = vpop.f32.mrf.mxu0
    %v2732 = vpop.f32.mrf.mxu0
    %v2733 = vadd.f32 %v2681, %v2732
    %v2734 = vpop.f32.mrf.mxu0
    %2735 = vdwg.mxu0
    %vm2736 = vcmp.gt.f32.partialorder %v2730, 0.0
    %vm2737 = vcmp.gt.f32.partialorder %v2733, 0.0
    %v2738 = vmul.f32 %v2730, 0.01
    %v2739 = vmul.f32 %v2733, 0.01
    %v2740 = vsel %vm2736, %v2730, %v2738
    %v2741 = vsel %vm2737, %v2733, %v2739
    %v2742 = vpack.c.bf16 %v2741, %v2740
    %v2743 = vld [vmem:[#allocation37] sm:$0xf]
    %v2744 = vld [vmem:[#allocation37 + $0x4] sm:$0xf]
    %v2745 = vld [vmem:[#allocation37 + $0x8] sm:$0xf]
    %v2746 = vld [vmem:[#allocation37 + $0xc] sm:$0xf]
    %v2747 = vld [vmem:[#allocation37 + $0x10] sm:$0xf]
    %v2748 = vld [vmem:[#allocation37 + $0x14] sm:$0xf]
    %s2749 = scalar_lea.vmem [#allocation6], 37
    %v2750 = vld [vmem:[%s2749] ss:$8 sm:$0x3]
    %v2752 = vlaneseq
    %v2753 = vshrl.u32 %v2752, 7
    %v2754 = vsub.s32 0, %v2753
    %v2755 = vrot.slane %v2750, %v2754
    %v2763 = vunpack.c.l.b16 %v2743
    %v2764 = vunpack.c.l.b16 %v2744
    %v2765 = vunpack.c.l.b16 %v2745
    %v2766 = vunpack.c.l.b16 %v2746
    %v2767 = vunpack.c.l.b16 %v2747
    %v2768 = vunpack.c.l.b16 %v2748
    %v2769 = vpack.c.b16 %v2764, %v2763
    %v2770 = vpack.c.b16 %v2766, %v2765
    %v2771 = vpack.c.b16 %v2768, %v2767
    %v2776 = vsel %vm2626, %v2742, 0
    %2778 = vmatprep.subr.bf16.mxu0 0
    %2779 = vmatpush1.bf16.msra.mxu0 0
    %2780 = vmatprep.subr.bf16.mxu0 0
    %2781 = vmatpush1.bf16.msra.mxu0 0
    %2782 = vmatprep.subr.bf16.mxu0 0
    %2783 = vmatpush1.bf16.msra.mxu0 0
    %2784 = vmatprep.subr.bf16.mxu0 0
    %2785 = vmatpush1.bf16.msra.mxu0 0
    %2786 = vmatprep.subr.bf16.mxu0 0
    %2787 = vmatpush1.bf16.msra.mxu0 0
    %2788 = vmatprep.subr.bf16.mxu0 0
    %2789 = vmatpush1.bf16.msra.mxu0 %v2771
    %2790 = vmatprep.subr.bf16.mxu0 0
    %2791 = vmatpush1.bf16.msra.mxu0 %v2770
    %2792 = vmatprep.subr.bf16.mxu0 0
    %2793 = vmatpush1.bf16.msra.mxu0 %v2769
    %2794 = vmatprep.subr.bf16.mxu0 0
    %2795 = vmatpush2.bf16.msra.mxu0 0
    %2796 = vmatprep.subr.bf16.mxu0 0
    %2797 = vmatpush2.bf16.msra.mxu0 0
    %2798 = vmatprep.subr.bf16.mxu0 0
    %2799 = vmatpush2.bf16.msra.mxu0 0
    %2800 = vmatprep.subr.bf16.mxu0 0
    %2801 = vmatpush2.bf16.msra.mxu0 0
    %2802 = vmatprep.subr.bf16.mxu0 0
    %2803 = vmatpush2.bf16.msra.mxu0 0
    %2804 = vmatprep.subr.bf16.mxu0 0
    %2805 = vmatpush2.bf16.msra.mxu0 0
    %2806 = vmatprep.subr.bf16.mxu0 0
    %2807 = vmatpush2.bf16.msra.mxu0 0
    %2808 = vmatprep.subr.bf16.mxu0 0
    %2809 = vmatpush2.bf16.msra.mxu0 0
    %2810 = vmatprep.mubr.bf16.mxu0 0
    %2811 = vmatmul.mubr.bf16.gmra.mxu0 %v2776
    %v2812 = vpop.f32.mrf.mxu0
    %v2813 = vadd.f32 %v2755, %v2812
    %v2814 = vpop.f32.mrf.mxu0
    %v2815 = vpop.f32.mrf.mxu0
    %v2816 = vadd.f32 %v2755, %v2815
    %v2817 = vpop.f32.mrf.mxu0
    %2818 = vdwg.mxu0
    %v2819 = vtanh.pop %v2813
    %v2820 = vtanh.pop %v2816
    %v2821 = vmul.f32 %v2671, 1.442695
    %v2822 = vpow.pop %v2821
    %v2823 = vmul.f32 %v2672, 1.442695
    %v2824 = vpow.pop %v2823
    %2827 = vrot.lane.b32.xlu0 %v2822, 16
    %v2828 = vpop.permute.xlu0 %2827
    %2829 = vrot.lane.b32.xlu0 %v2824, 16
    %v2830 = vpop.permute.xlu0 %2829
    %v2833 = vmul.f32 %v2524, %v2828
    %v2834 = vmul.f32 %v2525, %v2830
    %v2835 = vmul.f32 %v2819, 1.442695
    %v2836 = vpow.pop %v2835
    %v2837 = vmul.f32 %v2820, 1.442695
    %v2838 = vpow.pop %v2837
    %v2839 = vmul.f32 %v2524, %v2836
    %v2840 = vmul.f32 %v2525, %v2838
    %v2841 = vpack.c.bf16 %v2834, %v2833
    %v2842 = vld [vmem:[#allocation34] sm:$0xf]
    %v2843 = vld [vmem:[#allocation34 + $0x4] sm:$0xf]
    %s2844 = scalar_lea.vmem [#allocation6], 34
    %v2845 = vld [vmem:[%s2844] ss:$8 sm:$0x3]
    %v2847 = vlaneseq
    %v2848 = vshrl.u32 %v2847, 7
    %v2849 = vsub.s32 0, %v2848
    %v2850 = vrot.slane %v2845, %v2849
    %2853 = vrot.lane.b32.xlu0 %v2841, 112
    %v2854 = vpop.permute.xlu0 %2853
    %v2857 = vunpack.c.l.b16 %v2842
    %v2858 = vunpack.c.l.b16 %v2843
    %v2859 = vpack.c.b16 %v2858, %v2857
    %v2862 = vsel %vm809, %v2854, 0
    %2864 = vmatprep.subr.bf16.mxu0 0
    %2865 = vmatpush1.bf16.msra.mxu0 0
    %2866 = vmatprep.subr.bf16.mxu0 0
    %2867 = vmatpush1.bf16.msra.mxu0 0
    %2868 = vmatprep.subr.bf16.mxu0 0
    %2869 = vmatpush1.bf16.msra.mxu0 0
    %2870 = vmatprep.subr.bf16.mxu0 0
    %2871 = vmatpush1.bf16.msra.mxu0 0
    %2872 = vmatprep.subr.bf16.mxu0 0
    %2873 = vmatpush1.bf16.msra.mxu0 0
    %2874 = vmatprep.subr.bf16.mxu0 0
    %2875 = vmatpush1.bf16.msra.mxu0 0
    %2876 = vmatprep.subr.bf16.mxu0 0
    %2877 = vmatpush1.bf16.msra.mxu0 0
    %2878 = vmatprep.subr.bf16.mxu0 0
    %2879 = vmatpush1.bf16.msra.mxu0 %v2859
    %2880 = vmatprep.subr.bf16.mxu0 0
    %2881 = vmatpush2.bf16.msra.mxu0 0
    %2882 = vmatprep.subr.bf16.mxu0 0
    %2883 = vmatpush2.bf16.msra.mxu0 0
    %2884 = vmatprep.subr.bf16.mxu0 0
    %2885 = vmatpush2.bf16.msra.mxu0 0
    %2886 = vmatprep.subr.bf16.mxu0 0
    %2887 = vmatpush2.bf16.msra.mxu0 0
    %2888 = vmatprep.subr.bf16.mxu0 0
    %2889 = vmatpush2.bf16.msra.mxu0 0
    %2890 = vmatprep.subr.bf16.mxu0 0
    %2891 = vmatpush2.bf16.msra.mxu0 0
    %2892 = vmatprep.subr.bf16.mxu0 0
    %2893 = vmatpush2.bf16.msra.mxu0 0
    %2894 = vmatprep.subr.bf16.mxu0 0
    %2895 = vmatpush2.bf16.msra.mxu0 0
    %2896 = vmatprep.mubr.bf16.mxu0 0
    %2897 = vmatmul.mubr.bf16.gmra.mxu0 %v2862
    %v2898 = vpop.f32.mrf.mxu0
    %v2899 = vadd.f32 %v2850, %v2898
    %v2900 = vpop.f32.mrf.mxu0
    %v2901 = vpop.f32.mrf.mxu0
    %v2902 = vadd.f32 %v2850, %v2901
    %v2903 = vpop.f32.mrf.mxu0
    %2904 = vdwg.mxu0
    %vm2905 = vcmp.gt.f32.partialorder %v2899, 0.0
    %vm2906 = vcmp.gt.f32.partialorder %v2902, 0.0
    %v2907 = vmul.f32 %v2899, 0.01
    %v2908 = vmul.f32 %v2902, 0.01
    %v2909 = vsel %vm2905, %v2899, %v2907
    %v2910 = vsel %vm2906, %v2902, %v2908
    %v2911 = vpack.c.bf16 %v2910, %v2909
    %v2912 = vld [vmem:[#allocation39] sm:$0xf]
    %v2913 = vld [vmem:[#allocation39 + $0x4] sm:$0xf]
    %v2914 = vld [vmem:[#allocation39 + $0x8] sm:$0xf]
    %v2915 = vld [vmem:[#allocation39 + $0xc] sm:$0xf]
    %v2916 = vld [vmem:[#allocation39 + $0x10] sm:$0xf]
    %v2917 = vld [vmem:[#allocation39 + $0x14] sm:$0xf]
    %s2918 = scalar_lea.vmem [#allocation6], 38
    %v2919 = vld [vmem:[%s2918] ss:$8 sm:$0x3]
    %v2921 = vlaneseq
    %v2922 = vshrl.u32 %v2921, 7
    %v2923 = vsub.s32 0, %v2922
    %v2924 = vrot.slane %v2919, %v2923
    %v2932 = vunpack.c.l.b16 %v2912
    %v2933 = vunpack.c.l.b16 %v2913
    %v2934 = vunpack.c.l.b16 %v2914
    %v2935 = vunpack.c.l.b16 %v2915
    %v2936 = vunpack.c.l.b16 %v2916
    %v2937 = vunpack.c.l.b16 %v2917
    %v2938 = vpack.c.b16 %v2933, %v2932
    %v2939 = vpack.c.b16 %v2935, %v2934
    %v2940 = vpack.c.b16 %v2937, %v2936
    %v2945 = vsel %vm2626, %v2911, 0
    %2947 = vmatprep.subr.bf16.mxu0 0
    %2948 = vmatpush1.bf16.msra.mxu0 0
    %2949 = vmatprep.subr.bf16.mxu0 0
    %2950 = vmatpush1.bf16.msra.mxu0 0
    %2951 = vmatprep.subr.bf16.mxu0 0
    %2952 = vmatpush1.bf16.msra.mxu0 0
    %2953 = vmatprep.subr.bf16.mxu0 0
    %2954 = vmatpush1.bf16.msra.mxu0 0
    %2955 = vmatprep.subr.bf16.mxu0 0
    %2956 = vmatpush1.bf16.msra.mxu0 0
    %2957 = vmatprep.subr.bf16.mxu0 0
    %2958 = vmatpush1.bf16.msra.mxu0 %v2940
    %2959 = vmatprep.subr.bf16.mxu0 0
    %2960 = vmatpush1.bf16.msra.mxu0 %v2939
    %2961 = vmatprep.subr.bf16.mxu0 0
    %2962 = vmatpush1.bf16.msra.mxu0 %v2938
    %2963 = vmatprep.subr.bf16.mxu0 0
    %2964 = vmatpush2.bf16.msra.mxu0 0
    %2965 = vmatprep.subr.bf16.mxu0 0
    %2966 = vmatpush2.bf16.msra.mxu0 0
    %2967 = vmatprep.subr.bf16.mxu0 0
    %2968 = vmatpush2.bf16.msra.mxu0 0
    %2969 = vmatprep.subr.bf16.mxu0 0
    %2970 = vmatpush2.bf16.msra.mxu0 0
    %2971 = vmatprep.subr.bf16.mxu0 0
    %2972 = vmatpush2.bf16.msra.mxu0 0
    %2973 = vmatprep.subr.bf16.mxu0 0
    %2974 = vmatpush2.bf16.msra.mxu0 0
    %2975 = vmatprep.subr.bf16.mxu0 0
    %2976 = vmatpush2.bf16.msra.mxu0 0
    %2977 = vmatprep.subr.bf16.mxu0 0
    %2978 = vmatpush2.bf16.msra.mxu0 0
    %2979 = vmatprep.mubr.bf16.mxu0 0
    %2980 = vmatmul.mubr.bf16.gmra.mxu0 %v2945
    %v2981 = vpop.f32.mrf.mxu0
    %v2982 = vadd.f32 %v2924, %v2981
    %v2983 = vpop.f32.mrf.mxu0
    %v2984 = vpop.f32.mrf.mxu0
    %v2985 = vadd.f32 %v2924, %v2984
    %v2986 = vpop.f32.mrf.mxu0
    %2987 = vdwg.mxu0
    %v2988 = vtanh.pop %v2982
    %v2989 = vtanh.pop %v2985
    %v2990 = vpack.c.bf16 %v2840, %v2839
    %v2991 = vld [vmem:[%s51] sm:$0xf]
    %v2992 = vld [vmem:[%s51 + $0x4] sm:$0xf]
    %s2993 = scalar_lea.vmem [#allocation6], 35
    %v2994 = vld [vmem:[%s2993] ss:$8 sm:$0x3]
    %v2996 = vlaneseq
    %v2997 = vshrl.u32 %v2996, 7
    %v2998 = vsub.s32 0, %v2997
    %v2999 = vrot.slane %v2994, %v2998
    %v3003 = vunpack.c.l.b16 %v2991
    %v3004 = vunpack.c.l.b16 %v2992
    %v3005 = vpack.c.b16 %v3004, %v3003
    %v3008 = vsel %vm809, %v2990, 0
    %3010 = vmatprep.subr.bf16.mxu0 0
    %3011 = vmatpush1.bf16.msra.mxu0 0
    %3012 = vmatprep.subr.bf16.mxu0 0
    %3013 = vmatpush1.bf16.msra.mxu0 0
    %3014 = vmatprep.subr.bf16.mxu0 0
    %3015 = vmatpush1.bf16.msra.mxu0 0
    %3016 = vmatprep.subr.bf16.mxu0 0
    %3017 = vmatpush1.bf16.msra.mxu0 0
    %3018 = vmatprep.subr.bf16.mxu0 0
    %3019 = vmatpush1.bf16.msra.mxu0 0
    %3020 = vmatprep.subr.bf16.mxu0 0
    %3021 = vmatpush1.bf16.msra.mxu0 0
    %3022 = vmatprep.subr.bf16.mxu0 0
    %3023 = vmatpush1.bf16.msra.mxu0 0
    %3024 = vmatprep.subr.bf16.mxu0 0
    %3025 = vmatpush1.bf16.msra.mxu0 %v3005
    %3026 = vmatprep.subr.bf16.mxu0 0
    %3027 = vmatpush2.bf16.msra.mxu0 0
    %3028 = vmatprep.subr.bf16.mxu0 0
    %3029 = vmatpush2.bf16.msra.mxu0 0
    %3030 = vmatprep.subr.bf16.mxu0 0
    %3031 = vmatpush2.bf16.msra.mxu0 0
    %3032 = vmatprep.subr.bf16.mxu0 0
    %3033 = vmatpush2.bf16.msra.mxu0 0
    %3034 = vmatprep.subr.bf16.mxu0 0
    %3035 = vmatpush2.bf16.msra.mxu0 0
    %3036 = vmatprep.subr.bf16.mxu0 0
    %3037 = vmatpush2.bf16.msra.mxu0 0
    %3038 = vmatprep.subr.bf16.mxu0 0
    %3039 = vmatpush2.bf16.msra.mxu0 0
    %3040 = vmatprep.subr.bf16.mxu0 0
    %3041 = vmatpush2.bf16.msra.mxu0 0
    %3042 = vmatprep.mubr.bf16.mxu0 0
    %3043 = vmatmul.mubr.bf16.gmra.mxu0 %v3008
    %v3044 = vpop.f32.mrf.mxu0
    %v3045 = vadd.f32 %v2999, %v3044
    %v3046 = vpop.f32.mrf.mxu0
    %v3047 = vpop.f32.mrf.mxu0
    %v3048 = vadd.f32 %v2999, %v3047
    %v3049 = vpop.f32.mrf.mxu0
    %3050 = vdwg.mxu0
    %vm3051 = vcmp.gt.f32.partialorder %v3045, 0.0
    %vm3052 = vcmp.gt.f32.partialorder %v3048, 0.0
    %v3053 = vmul.f32 %v3045, 0.01
    %v3054 = vmul.f32 %v3048, 0.01
    %v3055 = vsel %vm3051, %v3045, %v3053
    %v3056 = vsel %vm3052, %v3048, %v3054
    %v3057 = vpack.c.bf16 %v3056, %v3055
    %v3058 = vld [vmem:[#allocation40] sm:$0xf]
    %v3059 = vld [vmem:[#allocation40 + $0x4] sm:$0xf]
    %v3060 = vld [vmem:[#allocation40 + $0x8] sm:$0xf]
    %v3061 = vld [vmem:[#allocation40 + $0xc] sm:$0xf]
    %v3062 = vld [vmem:[#allocation40 + $0x10] sm:$0xf]
    %v3063 = vld [vmem:[#allocation40 + $0x14] sm:$0xf]
    %s3064 = scalar_lea.vmem [#allocation6], 39
    %v3065 = vld [vmem:[%s3064] ss:$8 sm:$0x3]
    %v3067 = vlaneseq
    %v3068 = vshrl.u32 %v3067, 7
    %v3069 = vsub.s32 0, %v3068
    %v3070 = vrot.slane %v3065, %v3069
    %v3078 = vunpack.c.l.b16 %v3058
    %v3079 = vunpack.c.l.b16 %v3059
    %v3080 = vunpack.c.l.b16 %v3060
    %v3081 = vunpack.c.l.b16 %v3061
    %v3082 = vunpack.c.l.b16 %v3062
    %v3083 = vunpack.c.l.b16 %v3063
    %v3084 = vpack.c.b16 %v3079, %v3078
    %v3085 = vpack.c.b16 %v3081, %v3080
    %v3086 = vpack.c.b16 %v3083, %v3082
    %v3091 = vsel %vm2626, %v3057, 0
    %3093 = vmatprep.subr.bf16.mxu0 0
    %3094 = vmatpush1.bf16.msra.mxu0 0
    %3095 = vmatprep.subr.bf16.mxu0 0
    %3096 = vmatpush1.bf16.msra.mxu0 0
    %3097 = vmatprep.subr.bf16.mxu0 0
    %3098 = vmatpush1.bf16.msra.mxu0 0
    %3099 = vmatprep.subr.bf16.mxu0 0
    %3100 = vmatpush1.bf16.msra.mxu0 0
    %3101 = vmatprep.subr.bf16.mxu0 0
    %3102 = vmatpush1.bf16.msra.mxu0 0
    %3103 = vmatprep.subr.bf16.mxu0 0
    %3104 = vmatpush1.bf16.msra.mxu0 %v3086
    %3105 = vmatprep.subr.bf16.mxu0 0
    %3106 = vmatpush1.bf16.msra.mxu0 %v3085
    %3107 = vmatprep.subr.bf16.mxu0 0
    %3108 = vmatpush1.bf16.msra.mxu0 %v3084
    %3109 = vmatprep.subr.bf16.mxu0 0
    %3110 = vmatpush2.bf16.msra.mxu0 0
    %3111 = vmatprep.subr.bf16.mxu0 0
    %3112 = vmatpush2.bf16.msra.mxu0 0
    %3113 = vmatprep.subr.bf16.mxu0 0
    %3114 = vmatpush2.bf16.msra.mxu0 0
    %3115 = vmatprep.subr.bf16.mxu0 0
    %3116 = vmatpush2.bf16.msra.mxu0 0
    %3117 = vmatprep.subr.bf16.mxu0 0
    %3118 = vmatpush2.bf16.msra.mxu0 0
    %3119 = vmatprep.subr.bf16.mxu0 0
    %3120 = vmatpush2.bf16.msra.mxu0 0
    %3121 = vmatprep.subr.bf16.mxu0 0
    %3122 = vmatpush2.bf16.msra.mxu0 0
    %3123 = vmatprep.subr.bf16.mxu0 0
    %3124 = vmatpush2.bf16.msra.mxu0 0
    %3125 = vmatprep.mubr.bf16.mxu0 0
    %3126 = vmatmul.mubr.bf16.gmra.mxu0 %v3091
    %v3127 = vpop.f32.mrf.mxu0
    %v3128 = vadd.f32 %v3070, %v3127
    %v3129 = vpop.f32.mrf.mxu0
    %v3130 = vpop.f32.mrf.mxu0
    %v3131 = vadd.f32 %v3070, %v3130
    %v3132 = vpop.f32.mrf.mxu0
    %3133 = vdwg.mxu0
    %v3134 = vtanh.pop %v3128
    %v3135 = vtanh.pop %v3131
    %3138 = vrot.lane.b32.xlu0 %v3134, 16
    %v3139 = vpop.permute.xlu0 %3138
    %3140 = vrot.lane.b32.xlu0 %v3135, 16
    %v3141 = vpop.permute.xlu0 %3140
    %v3144 = vadd.f32 %v2833, %v3139
    %v3145 = vadd.f32 %v2834, %v3141
    %3146 = vrot.lane.b32.xlu0 %v605, 48
    %v3147 = vpop.permute.xlu0 %3146
    %3148 = vrot.lane.b32.xlu0 %v606, 48
    %v3149 = vpop.permute.xlu0 %3148
    %v3152 = vmul.f32 %v3144, %v3147
    %v3153 = vmul.f32 %v3145, %v3149
    %v3154 = vpack.c.bf16 %v3153, %v3152
    %v3155 = vld [vmem:[#allocation7 + $0x30] sm:$0xf]
    %v3156 = vld [vmem:[#allocation7 + $0x34] sm:$0xf]
    %3158 = vrot.lane.b32.xlu0 %v3154, 112
    %v3159 = vpop.permute.xlu0 %3158
    %v3162 = vunpack.c.l.b16 %v3155
    %v3163 = vunpack.c.l.b16 %v3156
    %v3164 = vpack.c.b16 %v3163, %v3162
    %v3167 = vsel %vm809, %v3159, 0
    %3169 = vmatprep.subr.bf16.mxu0 0
    %3170 = vmatpush1.bf16.msra.mxu0 0
    %3171 = vmatprep.subr.bf16.mxu0 0
    %3172 = vmatpush1.bf16.msra.mxu0 0
    %3173 = vmatprep.subr.bf16.mxu0 0
    %3174 = vmatpush1.bf16.msra.mxu0 0
    %3175 = vmatprep.subr.bf16.mxu0 0
    %3176 = vmatpush1.bf16.msra.mxu0 0
    %3177 = vmatprep.subr.bf16.mxu0 0
    %3178 = vmatpush1.bf16.msra.mxu0 0
    %3179 = vmatprep.subr.bf16.mxu0 0
    %3180 = vmatpush1.bf16.msra.mxu0 0
    %3181 = vmatprep.subr.bf16.mxu0 0
    %3182 = vmatpush1.bf16.msra.mxu0 0
    %3183 = vmatprep.subr.bf16.mxu0 0
    %3184 = vmatpush1.bf16.msra.mxu0 %v3164
    %3185 = vmatprep.subr.bf16.mxu0 0
    %3186 = vmatpush2.bf16.msra.mxu0 0
    %3187 = vmatprep.subr.bf16.mxu0 0
    %3188 = vmatpush2.bf16.msra.mxu0 0
    %3189 = vmatprep.subr.bf16.mxu0 0
    %3190 = vmatpush2.bf16.msra.mxu0 0
    %3191 = vmatprep.subr.bf16.mxu0 0
    %3192 = vmatpush2.bf16.msra.mxu0 0
    %3193 = vmatprep.subr.bf16.mxu0 0
    %3194 = vmatpush2.bf16.msra.mxu0 0
    %3195 = vmatprep.subr.bf16.mxu0 0
    %3196 = vmatpush2.bf16.msra.mxu0 0
    %3197 = vmatprep.subr.bf16.mxu0 0
    %3198 = vmatpush2.bf16.msra.mxu0 0
    %3199 = vmatprep.subr.bf16.mxu0 0
    %3200 = vmatpush2.bf16.msra.mxu0 0
    %3201 = vmatprep.mubr.bf16.mxu0 0
    %3202 = vmatmul.mubr.bf16.gmra.mxu0 %v3167
    %v3203 = vpop.f32.mrf.mxu0
    %v3204 = vadd.f32 0.0, %v3203
    %v3205 = vpop.f32.mrf.mxu0
    %v3206 = vpop.f32.mrf.mxu0
    %v3207 = vadd.f32 0.0, %v3206
    %v3208 = vpop.f32.mrf.mxu0
    %3209 = vdwg.mxu0
    %v3210 = vadd.f32 %v2514, %v3204
    %v3211 = vadd.f32 %v2517, %v3207
    %v3212 = vadd.f32 %v2839, %v2988
    %v3213 = vadd.f32 %v2840, %v2989
    %v3214 = vmul.f32 %v3212, 0.999995
    %v3215 = vmul.f32 %v3213, 0.999995
    %v3216 = vmax.f32 %v3214, 0.0
    %v3217 = vmax.f32 %v3215, 0.0
    %3218 = vrot.lane.b32.xlu0 %v605, 16
    %v3219 = vpop.permute.xlu0 %3218
    %3220 = vrot.lane.b32.xlu0 %v606, 16
    %v3221 = vpop.permute.xlu0 %3220
    %v3224 = vmul.f32 %v3216, %v3219
    %v3225 = vmul.f32 %v3217, %v3221
    %v3226 = vpack.c.bf16 %v3225, %v3224
    %v3227 = vld [vmem:[#allocation7 + $0x38] sm:$0xf]
    %v3228 = vld [vmem:[#allocation7 + $0x3c] sm:$0xf]
    %v3231 = vunpack.c.l.b16 %v3227
    %v3232 = vunpack.c.l.b16 %v3228
    %v3233 = vpack.c.b16 %v3232, %v3231
    %v3236 = vsel %vm809, %v3226, 0
    %3238 = vmatprep.subr.bf16.mxu0 0
    %3239 = vmatpush1.bf16.msra.mxu0 0
    %3240 = vmatprep.subr.bf16.mxu0 0
    %3241 = vmatpush1.bf16.msra.mxu0 0
    %3242 = vmatprep.subr.bf16.mxu0 0
    %3243 = vmatpush1.bf16.msra.mxu0 0
    %3244 = vmatprep.subr.bf16.mxu0 0
    %3245 = vmatpush1.bf16.msra.mxu0 0
    %3246 = vmatprep.subr.bf16.mxu0 0
    %3247 = vmatpush1.bf16.msra.mxu0 0
    %3248 = vmatprep.subr.bf16.mxu0 0
    %3249 = vmatpush1.bf16.msra.mxu0 0
    %3250 = vmatprep.subr.bf16.mxu0 0
    %3251 = vmatpush1.bf16.msra.mxu0 0
    %3252 = vmatprep.subr.bf16.mxu0 0
    %3253 = vmatpush1.bf16.msra.mxu0 %v3233
    %3254 = vmatprep.subr.bf16.mxu0 0
    %3255 = vmatpush2.bf16.msra.mxu0 0
    %3256 = vmatprep.subr.bf16.mxu0 0
    %3257 = vmatpush2.bf16.msra.mxu0 0
    %3258 = vmatprep.subr.bf16.mxu0 0
    %3259 = vmatpush2.bf16.msra.mxu0 0
    %3260 = vmatprep.subr.bf16.mxu0 0
    %3261 = vmatpush2.bf16.msra.mxu0 0
    %3262 = vmatprep.subr.bf16.mxu0 0
    %3263 = vmatpush2.bf16.msra.mxu0 0
    %3264 = vmatprep.subr.bf16.mxu0 0
    %3265 = vmatpush2.bf16.msra.mxu0 0
    %3266 = vmatprep.subr.bf16.mxu0 0
    %3267 = vmatpush2.bf16.msra.mxu0 0
    %3268 = vmatprep.subr.bf16.mxu0 0
    %3269 = vmatpush2.bf16.msra.mxu0 0
    %3270 = vmatprep.mubr.bf16.mxu0 0
    %3271 = vmatmul.mubr.bf16.gmra.mxu0 %v3236
    %v3272 = vpop.f32.mrf.mxu0
    %v3273 = vadd.f32 0.0, %v3272
    %v3274 = vpop.f32.mrf.mxu0
    %v3275 = vpop.f32.mrf.mxu0
    %v3276 = vadd.f32 0.0, %v3275
    %v3277 = vpop.f32.mrf.mxu0
    %3278 = vdwg.mxu0
    %v3279 = vadd.f32 %v3210, %v3273
    %v3280 = vadd.f32 %v3211, %v3276
    %v3281 = vrot.slane %v3279, 4
    %v3282 = vadd.f32 %v3279, %v3281
    %v3283 = vrot.slane %v3282, 2
    %v3284 = vadd.f32 %v3282, %v3283
    %v3285 = vrot.slane %v3284, 1
    %v3286 = vadd.f32 %v3284, %v3285
    %v3287 = vrot.slane %v3280, 4
    %v3288 = vadd.f32 %v3280, %v3287
    %v3289 = vrot.slane %v3288, 2
    %v3290 = vadd.f32 %v3288, %v3289
    %v3291 = vrot.slane %v3290, 1
    %v3292 = vadd.f32 %v3290, %v3291
    %vm3293 = vcmask 1040384
    %v3294 = vsel %vm3293, %v3286, %v3292
    %3295 = vst [vmem:[%s61] sm:$0x3] %v3294
    // Predicated region
    $region226: #{forward.1} parent=1 // pred_check
      _
    $region227: #{forward.1} parent=1 // pred_check_branch
      %3297 = sbr.rel (0) target = $region229
    $region228: #{forward.1} parent=1 // pred_region
      _
    $region229: #{forward.1} parent=1 // pred_fallthru
      _
    // Predicated region
    $region230: #{forward.1} parent=1 // pred_check
      _
    $region231: #{forward.1} parent=1 // pred_check_branch
      %3299 = sbr.rel (0) target = $region233
    $region232: #{forward.1} parent=1 // pred_region
      _
    $region233: #{forward.1} parent=1 // pred_fallthru
      _
    %3300 = vsyncpa [#allocation3], 1
    %3301 = vsyncpa [#allocation5], 1
    %3302 = vsyncpa [#allocation8], 1
    %3303 = vsyncpa [#allocation11], 1
    %3304 = vsyncpa [#allocation14], 1
    %3305 = vsyncpa [#allocation17], 1
    %3306 = vsyncpa [#allocation20], 1
    %3307 = vsyncpa [#allocation23], 1
    %3308 = vsyncpa [#allocation26], 1
    %3309 = vsyncpa [#allocation29], 1
    %3310 = vsyncpa [#allocation32], 1
    %3311 = vsyncpa [#allocation35], 1
    %3312 = vsyncpa [#allocation38], 1
    %3313 = vsyncpa [#allocation41], 1

</llo_original>
